<compile_context>
chip_gen: v5e
topology: v5e:2x2
jax: 0.10.0
libtpu: 0.0.40
codegen_flags: <defaults>
</compile_context>

<pallas_src>
import math
import functools

import jax
import jax.numpy as jnp
from jax.experimental import pallas as pl
from jax.experimental.pallas import tpu as pltpu


def _layer_norm(x, gamma, beta, eps=1e-5):
    # x: (R, H); gamma/beta: (1, H); biased variance (matches torch.nn.LayerNorm)
    mu = jnp.mean(x, axis=-1, keepdims=True)
    xc = x - mu
    var = jnp.mean(xc * xc, axis=-1, keepdims=True)
    return xc * jax.lax.rsqrt(var + eps) * gamma + beta


def decoder_layer_kernel(n_heads,
                         x_ref, bias_ref,
                         wq_ref, bq_ref, wk_ref, bk_ref, wv_ref, bv_ref,
                         wo_ref, bo_ref,
                         ln_att_g_ref, ln_att_b_ref,
                         w1_ref, b1_ref, w2_ref, b2_ref,
                         ln_ff_g_ref, ln_ff_b_ref,
                         out_ref, attn_ref, ctx_ref):
    TB, S, H = x_ref.shape
    nh = n_heads
    d = H // nh

    x = x_ref[...].reshape(TB * S, H)          # (TB*S, H) f32
    xb = x.astype(jnp.bfloat16)

    # --- Q/K/V projections for the whole batch block (one MXU pass each).
    # Weights are pre-transposed; Wq/bq already carry 1/sqrt(head_dim).
    # Cast to bf16 immediately so every later relayout moves half the bytes.
    q = (jnp.dot(xb, wq_ref[...], preferred_element_type=jnp.float32)
         + bq_ref[...]).astype(jnp.bfloat16)
    k = (jnp.dot(xb, wk_ref[...], preferred_element_type=jnp.float32)
         + bk_ref[...]).astype(jnp.bfloat16)
    v = (jnp.dot(xb, wv_ref[...], preferred_element_type=jnp.float32)
         + bv_ref[...]).astype(jnp.bfloat16)

    # --- attention, per sequence in the batch block (TB is small and static;
    # heads are batched inside a single leading-batch-dim einsum per stage).
    for b in range(TB):
        rows = slice(b * S, (b + 1) * S)
        qh = q[rows, :].reshape(S, nh, d).transpose(1, 0, 2)   # (nh, S, d) bf16
        kh = k[rows, :].reshape(S, nh, d).transpose(1, 0, 2)
        vh = v[rows, :].reshape(S, nh, d).transpose(1, 0, 2)

        e = jnp.einsum("hqd,hkd->hqk", qh, kh,
                       preferred_element_type=jnp.float32)      # (nh, S, S) f32
        e = e + bias_ref[b, 0][None, :, :]

        # softmax over keys (f32); EUP reciprocal for the normalisation
        m = jnp.max(e, axis=-1, keepdims=True)
        p = jnp.exp(e - m)
        a = p * pl.reciprocal(jnp.sum(p, axis=-1, keepdims=True), approx=True)

        attn_ref[b] = a.astype(attn_ref.dtype)

        o = jnp.einsum("hqk,hkd->hqd", a.astype(jnp.bfloat16), vh,
                       preferred_element_type=jnp.float32)      # (nh, S, d)
        # relayout back to (S, H) in bf16 and stash in the context scratch
        ctx_ref[b * S:(b + 1) * S, :] = (
            o.astype(jnp.bfloat16).transpose(1, 0, 2).reshape(S, H))

    # --- output projection + residual + LayerNorm (norm_maskedatt), whole block
    att = jnp.dot(ctx_ref[...], wo_ref[...],
                  preferred_element_type=jnp.float32) + bo_ref[...]
    t = _layer_norm(x + att, ln_att_g_ref[...], ln_att_b_ref[...])

    # --- position-wise feed-forward (bf16 matmuls, f32 accumulate)
    hdn = jnp.maximum(
        jnp.dot(t.astype(jnp.bfloat16), w1_ref[...],
                preferred_element_type=jnp.float32) + b1_ref[...], 0.0)
    ff = jnp.dot(hdn.astype(jnp.bfloat16), w2_ref[...],
                 preferred_element_type=jnp.float32) + b2_ref[...]

    # --- residual + LayerNorm (norm_ff)
    out_ref[...] = _layer_norm(t + ff, ln_ff_g_ref[...],
                               ln_ff_b_ref[...]).reshape(TB, S, H)


def decoder_layer(trg, trg_mask, params, n_heads, attn_dtype=jnp.float32):
    B, S, H = trg.shape
    pf_dim = params["w1"].shape[0]
    scale = math.sqrt(H // n_heads)

    # Pre-transpose weights once (kernel does x @ W), fold the 1/sqrt(head_dim)
    # attention scale into Wq/bq, and cast matmul weights to bf16 once here.
    def t_bf16(w):
        return jnp.asarray(w).T.astype(jnp.bfloat16)

    weights = [
        (jnp.asarray(params["wq"]).T / scale).astype(jnp.bfloat16),  # wq_t (H, H)
        (params["bq"] / scale).astype(jnp.float32),                  # bq   (1, H)
        t_bf16(params["wk"]), params["bk"].astype(jnp.float32),
        t_bf16(params["wv"]), params["bv"].astype(jnp.float32),
        t_bf16(params["wo"]), params["bo"].astype(jnp.float32),
        params["ln_att_g"].astype(jnp.float32), params["ln_att_b"].astype(jnp.float32),
        t_bf16(params["w1"]), params["b1"].astype(jnp.float32),      # (H, pf), (1, pf)
        t_bf16(params["w2"]), params["b2"].astype(jnp.float32),      # (pf, H), (1, H)
        params["ln_ff_g"].astype(jnp.float32), params["ln_ff_b"].astype(jnp.float32),
    ]

    # Additive mask bias computed once, outside the kernel. Kept per-batch to
    # preserve the module's general (possibly padding) mask semantics; for a
    # purely causal mask it could be a single (S, S) array or in-kernel iota.
    mask_bias = jnp.where(trg_mask == 0, jnp.float32(-1e10), jnp.float32(0.0))

    # Batch-block several sequences per grid step so the dense matmuls feed
    # TB*S rows into the MXU (matters at small S); TB must divide B.
    TB = max(1, min(B, 8, max(1, 256 // S)))
    while B % TB:
        TB -= 1

    # Generation-aware VMEM budget (128 MiB on v5e/v6e, 64 MiB per TC on v7x);
    # leave ~15% headroom for compiler-internal scratch.
    try:
        vmem_cap = int(pltpu.get_tpu_info().vmem_capacity_bytes)
    except Exception:  # info query unavailable -> assume 128 MiB
        vmem_cap = 128 * 1024 * 1024
    usable = int(vmem_cap * 0.85)

    attn_isz = jnp.dtype(attn_dtype).itemsize
    act_bytes = 2 * (2 * TB * S * H * 4 + TB * S * S * 4
                     + TB * n_heads * S * S * attn_isz)        # double-buffered blocks
    w_bytes_each = sum(int(w.size) * w.dtype.itemsize for w in weights)
    tmp_bytes = (8 * TB * S * H * 4 + 4 * n_heads * S * S * 4
                 + 2 * TB * S * pf_dim * 4 + TB * S * H * 2)   # q/k/v, scores, FFN, ctx

    x_spec = pl.BlockSpec((TB, S, H), lambda b: (b, 0, 0))
    mask_spec = pl.BlockSpec((TB, 1, S, S), lambda b: (b, 0, 0, 0))
    out_specs = [pl.BlockSpec((TB, S, H), lambda b: (b, 0, 0)),
                 pl.BlockSpec((TB, n_heads, S, S), lambda b: (b, 0, 0, 0))]

    def run(single_buffer_weights):
        w_specs = []
        for w in weights:
            nd = w.ndim
            idx = lambda b, _nd=nd: (0,) * _nd
            if single_buffer_weights:
                # grid-invariant -> one buffer is enough; halves weight VMEM
                w_specs.append(pl.BlockSpec(w.shape, idx,
                                            pipeline_mode=pl.Buffered(1)))
            else:
                w_specs.append(pl.BlockSpec(w.shape, idx))

        w_factor = 1 if single_buffer_weights else 2
        vmem_limit = int(min(usable,
                             max(act_bytes + w_factor * w_bytes_each + tmp_bytes,
                                 32 * 1024 * 1024)))

        return pl.pallas_call(
            functools.partial(decoder_layer_kernel, n_heads),
            out_shape=(jax.ShapeDtypeStruct((B, S, H), jnp.float32),
                       jax.ShapeDtypeStruct((B, n_heads, S, S), attn_dtype)),
            grid=(B // TB,),
            in_specs=[x_spec, mask_spec] + w_specs,
            out_specs=out_specs,
            scratch_shapes=[pltpu.VMEM((TB * S, H), jnp.bfloat16)],  # attn context
            compiler_params=pltpu.CompilerParams(
                dimension_semantics=("parallel",),
                vmem_limit_bytes=vmem_limit),
        )(trg, mask_bias, *weights)

    try:
        return run(single_buffer_weights=True)
    except Exception:
        # Fallback for lowerings without BlockSpec pipeline_mode support.
        return run(single_buffer_weights=False)


def reference_decoder_layer(trg, trg_mask, params, n_heads):
    """Plain-JAX f32 reference matching the PyTorch forward (dropout = identity)."""
    B, S, H = trg.shape
    d = H // n_heads

    def lin(x, w, b):
        return x @ w.T + b[0]

    q = lin(trg, params["wq"], params["bq"]).reshape(B, S, n_heads, d).transpose(0, 2, 1, 3)
    k = lin(trg, params["wk"], params["bk"]).reshape(B, S, n_heads, d).transpose(0, 2, 1, 3)
    v = lin(trg, params["wv"], params["bv"]).reshape(B, S, n_heads, d).transpose(0, 2, 1, 3)
    e = jnp.einsum("bhqd,bhkd->bhqk", q, k) / math.sqrt(d)
    e = jnp.where(trg_mask == 0, -1e10, e)
    a = jax.nn.softmax(e, axis=-1)
    x = jnp.einsum("bhqk,bhkd->bhqd", a, v).transpose(0, 2, 1, 3).reshape(B, S, H)
    x = lin(x, params["wo"], params["bo"])

    def ln(x, g, b, eps=1e-5):
        mu = x.mean(-1, keepdims=True)
        var = ((x - mu) ** 2).mean(-1, keepdims=True)
        return (x - mu) / jnp.sqrt(var + eps) * g[0] + b[0]

    t = ln(trg + x, params["ln_att_g"], params["ln_att_b"])
    ff = lin(jnp.maximum(lin(t, params["w1"], params["b1"]), 0.0),
             params["w2"], params["b2"])
    out = ln(t + ff, params["ln_ff_g"], params["ln_ff_b"])
    return out, a


def make_params(key, hid_dim, n_heads, pf_dim):
    ks = jax.random.split(key, 12)
    s = 0.05
    return {
        "wq": jax.random.normal(ks[0], (hid_dim, hid_dim), jnp.float32) * s,
        "bq": jax.random.normal(ks[1], (1, hid_dim), jnp.float32) * s,
        "wk": jax.random.normal(ks[2], (hid_dim, hid_dim), jnp.float32) * s,
        "bk": jax.random.normal(ks[3], (1, hid_dim), jnp.float32) * s,
        "wv": jax.random.normal(ks[4], (hid_dim, hid_dim), jnp.float32) * s,
        "bv": jax.random.normal(ks[5], (1, hid_dim), jnp.float32) * s,
        "wo": jax.random.normal(ks[6], (hid_dim, hid_dim), jnp.float32) * s,
        "bo": jax.random.normal(ks[7], (1, hid_dim), jnp.float32) * s,
        "ln_att_g": jnp.ones((1, hid_dim), jnp.float32),
        "ln_att_b": jnp.zeros((1, hid_dim), jnp.float32),
        "w1": jax.random.normal(ks[8], (pf_dim, hid_dim), jnp.float32) * s,
        "b1": jax.random.normal(ks[9], (1, pf_dim), jnp.float32) * s,
        "w2": jax.random.normal(ks[10], (hid_dim, pf_dim), jnp.float32) * s,
        "b2": jax.random.normal(ks[11], (1, hid_dim), jnp.float32) * s,
        "ln_ff_g": jnp.ones((1, hid_dim), jnp.float32),
        "ln_ff_b": jnp.zeros((1, hid_dim), jnp.float32),
    }


if __name__ == "__main__":
    B, S, H, n_heads, pf_dim = 2, 8, 32, 4, 64

    key = jax.random.PRNGKey(0)
    k_x, k_p = jax.random.split(key)

    trg = jax.random.normal(k_x, (B, S, H), jnp.float32)
    # causal target mask, shape (B, 1, S, S), 1 = attend, 0 = masked
    trg_mask = jnp.tril(jnp.ones((S, S), jnp.int32))[None, None].repeat(B, axis=0)

    params = make_params(k_p, H, n_heads, pf_dim)

    out, attn = decoder_layer(trg, trg_mask, params, n_heads)
    out, attn = jax.block_until_ready((out, attn))

    ref_out, ref_attn = reference_decoder_layer(trg, trg_mask, params, n_heads)
    # bf16 MXU matmuls (f32 accumulation) + approx softmax reciprocal
    # => relaxed tolerances vs. the f32 reference
    assert jnp.allclose(out, ref_out, atol=5e-2, rtol=5e-2), "output mismatch"
    assert jnp.allclose(attn, ref_attn, atol=2e-2, rtol=2e-2), "attention mismatch"

    print("KERNEL_OK")
</pallas_src>

<mosaic_0001>
module attributes {stable_mosaic.version = 11 : i64} {
  func.func @decoder_layer_kernel(%arg0: i32, %arg1: memref<2x8x32xf32, #tpu.memory_space<vmem>>, %arg2: memref<2x1x8x8xf32, #tpu.memory_space<vmem>>, %arg3: memref<32x32xbf16, #tpu.memory_space<vmem>>, %arg4: memref<1x32xf32, #tpu.memory_space<vmem>>, %arg5: memref<32x32xbf16, #tpu.memory_space<vmem>>, %arg6: memref<1x32xf32, #tpu.memory_space<vmem>>, %arg7: memref<32x32xbf16, #tpu.memory_space<vmem>>, %arg8: memref<1x32xf32, #tpu.memory_space<vmem>>, %arg9: memref<32x32xbf16, #tpu.memory_space<vmem>>, %arg10: memref<1x32xf32, #tpu.memory_space<vmem>>, %arg11: memref<1x32xf32, #tpu.memory_space<vmem>>, %arg12: memref<1x32xf32, #tpu.memory_space<vmem>>, %arg13: memref<32x64xbf16, #tpu.memory_space<vmem>>, %arg14: memref<1x64xf32, #tpu.memory_space<vmem>>, %arg15: memref<64x32xbf16, #tpu.memory_space<vmem>>, %arg16: memref<1x32xf32, #tpu.memory_space<vmem>>, %arg17: memref<1x32xf32, #tpu.memory_space<vmem>>, %arg18: memref<1x32xf32, #tpu.memory_space<vmem>>, %arg19: memref<2x8x32xf32, #tpu.memory_space<vmem>>, %arg20: memref<2x4x8x8xf32, #tpu.memory_space<vmem>>, %arg21: memref<16x32xbf16, #tpu.memory_space<vmem>>) attributes {dimension_semantics = [#tpu.dimension_semantics<parallel>], iteration_bounds = array<i64: 1>, scalar_prefetch = 0 : i64, scratch_operands = 1 : i64, tpu.core_type = #tpu.core_type<tc>, window_params = [{transform_indices = @transform_0, window_bounds = array<i64: 2, 8, 32>}, {transform_indices = @transform_1, window_bounds = array<i64: 2, 1, 8, 8>}, {pipeline_mode = #tpu.pipeline_mode<synchronous>, transform_indices = @transform_2, window_bounds = array<i64: 32, 32>}, {pipeline_mode = #tpu.pipeline_mode<synchronous>, transform_indices = @transform_3, window_bounds = array<i64: 1, 32>}, {pipeline_mode = #tpu.pipeline_mode<synchronous>, transform_indices = @transform_4, window_bounds = array<i64: 32, 32>}, {pipeline_mode = #tpu.pipeline_mode<synchronous>, transform_indices = @transform_5, window_bounds = array<i64: 1, 32>}, {pipeline_mode = #tpu.pipeline_mode<synchronous>, transform_indices = @transform_6, window_bounds = array<i64: 32, 32>}, {pipeline_mode = #tpu.pipeline_mode<synchronous>, transform_indices = @transform_7, window_bounds = array<i64: 1, 32>}, {pipeline_mode = #tpu.pipeline_mode<synchronous>, transform_indices = @transform_8, window_bounds = array<i64: 32, 32>}, {pipeline_mode = #tpu.pipeline_mode<synchronous>, transform_indices = @transform_9, window_bounds = array<i64: 1, 32>}, {pipeline_mode = #tpu.pipeline_mode<synchronous>, transform_indices = @transform_10, window_bounds = array<i64: 1, 32>}, {pipeline_mode = #tpu.pipeline_mode<synchronous>, transform_indices = @transform_11, window_bounds = array<i64: 1, 32>}, {pipeline_mode = #tpu.pipeline_mode<synchronous>, transform_indices = @transform_12, window_bounds = array<i64: 32, 64>}, {pipeline_mode = #tpu.pipeline_mode<synchronous>, transform_indices = @transform_13, window_bounds = array<i64: 1, 64>}, {pipeline_mode = #tpu.pipeline_mode<synchronous>, transform_indices = @transform_14, window_bounds = array<i64: 64, 32>}, {pipeline_mode = #tpu.pipeline_mode<synchronous>, transform_indices = @transform_15, window_bounds = array<i64: 1, 32>}, {pipeline_mode = #tpu.pipeline_mode<synchronous>, transform_indices = @transform_16, window_bounds = array<i64: 1, 32>}, {pipeline_mode = #tpu.pipeline_mode<synchronous>, transform_indices = @transform_17, window_bounds = array<i64: 1, 32>}, {transform_indices = @transform_18, window_bounds = array<i64: 2, 8, 32>}, {transform_indices = @transform_19, window_bounds = array<i64: 2, 4, 8, 8>}]} {
    %c0 = arith.constant 0 : index
    %c0_0 = arith.constant 0 : index
    %c0_1 = arith.constant 0 : index
    %0 = vector.load %arg1[%c0, %c0_0, %c0_1] : memref<2x8x32xf32, #tpu.memory_space<vmem>>, vector<2x8x32xf32>
    %1 = vector.shape_cast %0 : vector<2x8x32xf32> to vector<16x32xf32>
    %2 = arith.truncf %1 : vector<16x32xf32> to vector<16x32xbf16>
    %c0_2 = arith.constant 0 : index
    %c0_3 = arith.constant 0 : index
    %3 = vector.load %arg3[%c0_2, %c0_3] : memref<32x32xbf16, #tpu.memory_space<vmem>>, vector<32x32xbf16>
    %cst = arith.constant dense<0.000000e+00> : vector<16x32xf32>
    %4 = tpu.matmul %2, %3, %cst {dimension_numbers = #tpu.dot_dimension_numbers<[1], [0], [0], [1], [0, 0, 1, 1], [], []>} : vector<16x32xbf16>, vector<32x32xbf16>, vector<16x32xf32> -> vector<16x32xf32>
    %c0_4 = arith.constant 0 : index
    %c0_5 = arith.constant 0 : index
    %5 = vector.load %arg4[%c0_4, %c0_5] : memref<1x32xf32, #tpu.memory_space<vmem>>, vector<1x32xf32>
    %6 = vector.broadcast %5 : vector<1x32xf32> to vector<16x32xf32>
    %7 = arith.addf %4, %6 : vector<16x32xf32>
    %8 = arith.truncf %7 : vector<16x32xf32> to vector<16x32xbf16>
    %c0_6 = arith.constant 0 : index
    %c0_7 = arith.constant 0 : index
    %9 = vector.load %arg5[%c0_6, %c0_7] : memref<32x32xbf16, #tpu.memory_space<vmem>>, vector<32x32xbf16>
    %cst_8 = arith.constant dense<0.000000e+00> : vector<16x32xf32>
    %10 = tpu.matmul %2, %9, %cst_8 {dimension_numbers = #tpu.dot_dimension_numbers<[1], [0], [0], [1], [0, 0, 1, 1], [], []>} : vector<16x32xbf16>, vector<32x32xbf16>, vector<16x32xf32> -> vector<16x32xf32>
    %c0_9 = arith.constant 0 : index
    %c0_10 = arith.constant 0 : index
    %11 = vector.load %arg6[%c0_9, %c0_10] : memref<1x32xf32, #tpu.memory_space<vmem>>, vector<1x32xf32>
    %12 = vector.broadcast %11 : vector<1x32xf32> to vector<16x32xf32>
    %13 = arith.addf %10, %12 : vector<16x32xf32>
    %14 = arith.truncf %13 : vector<16x32xf32> to vector<16x32xbf16>
    %c0_11 = arith.constant 0 : index
    %c0_12 = arith.constant 0 : index
    %15 = vector.load %arg7[%c0_11, %c0_12] : memref<32x32xbf16, #tpu.memory_space<vmem>>, vector<32x32xbf16>
    %cst_13 = arith.constant dense<0.000000e+00> : vector<16x32xf32>
    %16 = tpu.matmul %2, %15, %cst_13 {dimension_numbers = #tpu.dot_dimension_numbers<[1], [0], [0], [1], [0, 0, 1, 1], [], []>} : vector<16x32xbf16>, vector<32x32xbf16>, vector<16x32xf32> -> vector<16x32xf32>
    %c0_14 = arith.constant 0 : index
    %c0_15 = arith.constant 0 : index
    %17 = vector.load %arg8[%c0_14, %c0_15] : memref<1x32xf32, #tpu.memory_space<vmem>>, vector<1x32xf32>
    %18 = vector.broadcast %17 : vector<1x32xf32> to vector<16x32xf32>
    %19 = arith.addf %16, %18 : vector<16x32xf32>
    %20 = arith.truncf %19 : vector<16x32xf32> to vector<16x32xbf16>
    %21 = vector.extract_strided_slice %8 {offsets = [0, 0], sizes = [8, 32], strides = [1, 1]} : vector<16x32xbf16> to vector<8x32xbf16>
    %22 = vector.shape_cast %21 : vector<8x32xbf16> to vector<8x4x8xbf16>
    %23 = tpu.transpose %22, [1, 0, 2] : vector<8x4x8xbf16> -> vector<4x8x8xbf16>
    %24 = vector.extract_strided_slice %14 {offsets = [0, 0], sizes = [8, 32], strides = [1, 1]} : vector<16x32xbf16> to vector<8x32xbf16>
    %25 = vector.shape_cast %24 : vector<8x32xbf16> to vector<8x4x8xbf16>
    %26 = tpu.transpose %25, [1, 0, 2] : vector<8x4x8xbf16> -> vector<4x8x8xbf16>
    %27 = vector.extract_strided_slice %20 {offsets = [0, 0], sizes = [8, 32], strides = [1, 1]} : vector<16x32xbf16> to vector<8x32xbf16>
    %28 = vector.shape_cast %27 : vector<8x32xbf16> to vector<8x4x8xbf16>
    %29 = tpu.transpose %28, [1, 0, 2] : vector<8x4x8xbf16> -> vector<4x8x8xbf16>
    "tpu.trace_start"() <{level = 10 : i32, message = "hqd,hkd->hqk"}> : () -> ()
    %cst_16 = arith.constant dense<0.000000e+00> : vector<4x8x8xf32>
    %30 = tpu.matmul %23, %26, %cst_16 {dimension_numbers = #tpu.dot_dimension_numbers<[2], [2], [1], [1], [0, 0, 0, 1, 1, 1], [0], [0]>} : vector<4x8x8xbf16>, vector<4x8x8xbf16>, vector<4x8x8xf32> -> vector<4x8x8xf32>
    "tpu.trace_stop"() : () -> ()
    %c0_17 = arith.constant 0 : index
    %c0_18 = arith.constant 0 : index
    %c0_19 = arith.constant 0 : index
    %c0_20 = arith.constant 0 : index
    %31 = vector.load %arg2[%c0_17, %c0_18, %c0_19, %c0_20] : memref<2x1x8x8xf32, #tpu.memory_space<vmem>>, vector<1x1x8x8xf32>
    %32 = vector.shape_cast %31 : vector<1x1x8x8xf32> to vector<8x8xf32>
    %33 = vector.shape_cast %32 : vector<8x8xf32> to vector<1x8x8xf32>
    %34 = vector.broadcast %33 : vector<1x8x8xf32> to vector<4x8x8xf32>
    %35 = arith.addf %30, %34 : vector<4x8x8xf32>
    %cst_21 = arith.constant dense<0xFF800000> : vector<4x8xf32>
    %36 = vector.multi_reduction <maximumf>, %35, %cst_21 [2] : vector<4x8x8xf32> to vector<4x8xf32>
    %37 = vector.shape_cast %36 : vector<4x8xf32> to vector<4x8x1xf32>
    %38 = vector.broadcast %37 : vector<4x8x1xf32> to vector<4x8x8xf32>
    %39 = arith.subf %35, %38 : vector<4x8x8xf32>
    %40 = math.exp %39 : vector<4x8x8xf32>
    %cst_22 = arith.constant dense<0.000000e+00> : vector<4x8xf32>
    %41 = vector.multi_reduction <add>, %40, %cst_22 [2] : vector<4x8x8xf32> to vector<4x8xf32>
    %42 = vector.shape_cast %41 : vector<4x8xf32> to vector<4x8x1xf32>
    %43 = tpu.reciprocal %42 {approx = true} : vector<4x8x1xf32> -> vector<4x8x1xf32>
    %44 = vector.broadcast %43 : vector<4x8x1xf32> to vector<4x8x8xf32>
    %45 = arith.mulf %40, %44 : vector<4x8x8xf32>
    %c0_23 = arith.constant 0 : index
    %c0_24 = arith.constant 0 : index
    %c0_25 = arith.constant 0 : index
    %c0_26 = arith.constant 0 : index
    %46 = vector.load %arg20[%c0_23, %c0_24, %c0_25, %c0_26] : memref<2x4x8x8xf32, #tpu.memory_space<vmem>>, vector<1x4x8x8xf32>
    %47 = vector.shape_cast %46 : vector<1x4x8x8xf32> to vector<4x8x8xf32>
    %48 = vector.shape_cast %45 : vector<4x8x8xf32> to vector<1x4x8x8xf32>
    tpu.vector_store %arg20[%c0_23, %c0_24, %c0_25, %c0_26], %48 {strides = array<i32>} : memref<2x4x8x8xf32, #tpu.memory_space<vmem>>, vector<1x4x8x8xf32>,
    %49 = arith.truncf %45 : vector<4x8x8xf32> to vector<4x8x8xbf16>
    "tpu.trace_start"() <{level = 10 : i32, message = "hqk,hkd->hqd"}> : () -> ()
    %cst_27 = arith.constant dense<0.000000e+00> : vector<4x8x8xf32>
    %50 = tpu.matmul %49, %29, %cst_27 {dimension_numbers = #tpu.dot_dimension_numbers<[2], [1], [1], [2], [0, 0, 0, 1, 1, 2], [0], [0]>} : vector<4x8x8xbf16>, vector<4x8x8xbf16>, vector<4x8x8xf32> -> vector<4x8x8xf32>
    "tpu.trace_stop"() : () -> ()
    %51 = arith.truncf %50 : vector<4x8x8xf32> to vector<4x8x8xbf16>
    %52 = tpu.transpose %51, [1, 0, 2] : vector<4x8x8xbf16> -> vector<8x4x8xbf16>
    %53 = vector.shape_cast %52 : vector<8x4x8xbf16> to vector<8x32xbf16>
    %c0_28 = arith.constant 0 : index
    %c0_29 = arith.constant 0 : index
    %54 = vector.load %arg21[%c0_28, %c0_29] : memref<16x32xbf16, #tpu.memory_space<vmem>>, vector<8x32xbf16>
    tpu.vector_store %arg21[%c0_28, %c0_29], %53 {strides = array<i32>} : memref<16x32xbf16, #tpu.memory_space<vmem>>, vector<8x32xbf16>,
    %55 = vector.extract_strided_slice %8 {offsets = [8, 0], sizes = [8, 32], strides = [1, 1]} : vector<16x32xbf16> to vector<8x32xbf16>
    %56 = vector.shape_cast %55 : vector<8x32xbf16> to vector<8x4x8xbf16>
    %57 = tpu.transpose %56, [1, 0, 2] : vector<8x4x8xbf16> -> vector<4x8x8xbf16>
    %58 = vector.extract_strided_slice %14 {offsets = [8, 0], sizes = [8, 32], strides = [1, 1]} : vector<16x32xbf16> to vector<8x32xbf16>
    %59 = vector.shape_cast %58 : vector<8x32xbf16> to vector<8x4x8xbf16>
    %60 = tpu.transpose %59, [1, 0, 2] : vector<8x4x8xbf16> -> vector<4x8x8xbf16>
    %61 = vector.extract_strided_slice %20 {offsets = [8, 0], sizes = [8, 32], strides = [1, 1]} : vector<16x32xbf16> to vector<8x32xbf16>
    %62 = vector.shape_cast %61 : vector<8x32xbf16> to vector<8x4x8xbf16>
    %63 = tpu.transpose %62, [1, 0, 2] : vector<8x4x8xbf16> -> vector<4x8x8xbf16>
    "tpu.trace_start"() <{level = 10 : i32, message = "hqd,hkd->hqk"}> : () -> ()
    %cst_30 = arith.constant dense<0.000000e+00> : vector<4x8x8xf32>
    %64 = tpu.matmul %57, %60, %cst_30 {dimension_numbers = #tpu.dot_dimension_numbers<[2], [2], [1], [1], [0, 0, 0, 1, 1, 1], [0], [0]>} : vector<4x8x8xbf16>, vector<4x8x8xbf16>, vector<4x8x8xf32> -> vector<4x8x8xf32>
    "tpu.trace_stop"() : () -> ()
    %c1 = arith.constant 1 : index
    %c0_31 = arith.constant 0 : index
    %c0_32 = arith.constant 0 : index
    %c0_33 = arith.constant 0 : index
    %65 = vector.load %arg2[%c1, %c0_31, %c0_32, %c0_33] : memref<2x1x8x8xf32, #tpu.memory_space<vmem>>, vector<1x1x8x8xf32>
    %66 = vector.shape_cast %65 : vector<1x1x8x8xf32> to vector<8x8xf32>
    %67 = vector.shape_cast %66 : vector<8x8xf32> to vector<1x8x8xf32>
    %68 = vector.broadcast %67 : vector<1x8x8xf32> to vector<4x8x8xf32>
    %69 = arith.addf %64, %68 : vector<4x8x8xf32>
    %cst_34 = arith.constant dense<0xFF800000> : vector<4x8xf32>
    %70 = vector.multi_reduction <maximumf>, %69, %cst_34 [2] : vector<4x8x8xf32> to vector<4x8xf32>
    %71 = vector.shape_cast %70 : vector<4x8xf32> to vector<4x8x1xf32>
    %72 = vector.broadcast %71 : vector<4x8x1xf32> to vector<4x8x8xf32>
    %73 = arith.subf %69, %72 : vector<4x8x8xf32>
    %74 = math.exp %73 : vector<4x8x8xf32>
    %cst_35 = arith.constant dense<0.000000e+00> : vector<4x8xf32>
    %75 = vector.multi_reduction <add>, %74, %cst_35 [2] : vector<4x8x8xf32> to vector<4x8xf32>
    %76 = vector.shape_cast %75 : vector<4x8xf32> to vector<4x8x1xf32>
    %77 = tpu.reciprocal %76 {approx = true} : vector<4x8x1xf32> -> vector<4x8x1xf32>
    %78 = vector.broadcast %77 : vector<4x8x1xf32> to vector<4x8x8xf32>
    %79 = arith.mulf %74, %78 : vector<4x8x8xf32>
    %c1_36 = arith.constant 1 : index
    %c0_37 = arith.constant 0 : index
    %c0_38 = arith.constant 0 : index
    %c0_39 = arith.constant 0 : index
    %80 = vector.load %arg20[%c1_36, %c0_37, %c0_38, %c0_39] : memref<2x4x8x8xf32, #tpu.memory_space<vmem>>, vector<1x4x8x8xf32>
    %81 = vector.shape_cast %80 : vector<1x4x8x8xf32> to vector<4x8x8xf32>
    %82 = vector.shape_cast %79 : vector<4x8x8xf32> to vector<1x4x8x8xf32>
    tpu.vector_store %arg20[%c1_36, %c0_37, %c0_38, %c0_39], %82 {strides = array<i32>} : memref<2x4x8x8xf32, #tpu.memory_space<vmem>>, vector<1x4x8x8xf32>,
    %83 = arith.truncf %79 : vector<4x8x8xf32> to vector<4x8x8xbf16>
    "tpu.trace_start"() <{level = 10 : i32, message = "hqk,hkd->hqd"}> : () -> ()
    %cst_40 = arith.constant dense<0.000000e+00> : vector<4x8x8xf32>
    %84 = tpu.matmul %83, %63, %cst_40 {dimension_numbers = #tpu.dot_dimension_numbers<[2], [1], [1], [2], [0, 0, 0, 1, 1, 2], [0], [0]>} : vector<4x8x8xbf16>, vector<4x8x8xbf16>, vector<4x8x8xf32> -> vector<4x8x8xf32>
    "tpu.trace_stop"() : () -> ()
    %85 = arith.truncf %84 : vector<4x8x8xf32> to vector<4x8x8xbf16>
    %86 = tpu.transpose %85, [1, 0, 2] : vector<4x8x8xbf16> -> vector<8x4x8xbf16>
    %87 = vector.shape_cast %86 : vector<8x4x8xbf16> to vector<8x32xbf16>
    %c8 = arith.constant 8 : index
    %c0_41 = arith.constant 0 : index
    %88 = vector.load %arg21[%c8, %c0_41] : memref<16x32xbf16, #tpu.memory_space<vmem>>, vector<8x32xbf16>
    tpu.vector_store %arg21[%c8, %c0_41], %87 {strides = array<i32>} : memref<16x32xbf16, #tpu.memory_space<vmem>>, vector<8x32xbf16>,
    %c0_42 = arith.constant 0 : index
    %c0_43 = arith.constant 0 : index
    %89 = vector.load %arg21[%c0_42, %c0_43] : memref<16x32xbf16, #tpu.memory_space<vmem>>, vector<16x32xbf16>
    %c0_44 = arith.constant 0 : index
    %c0_45 = arith.constant 0 : index
    %90 = vector.load %arg9[%c0_44, %c0_45] : memref<32x32xbf16, #tpu.memory_space<vmem>>, vector<32x32xbf16>
    %cst_46 = arith.constant dense<0.000000e+00> : vector<16x32xf32>
    %91 = tpu.matmul %89, %90, %cst_46 {dimension_numbers = #tpu.dot_dimension_numbers<[1], [0], [0], [1], [0, 0, 1, 1], [], []>} : vector<16x32xbf16>, vector<32x32xbf16>, vector<16x32xf32> -> vector<16x32xf32>
    %c0_47 = arith.constant 0 : index
    %c0_48 = arith.constant 0 : index
    %92 = vector.load %arg10[%c0_47, %c0_48] : memref<1x32xf32, #tpu.memory_space<vmem>>, vector<1x32xf32>
    %93 = vector.broadcast %92 : vector<1x32xf32> to vector<16x32xf32>
    %94 = arith.addf %91, %93 : vector<16x32xf32>
    %95 = arith.addf %1, %94 : vector<16x32xf32>
    %c0_49 = arith.constant 0 : index
    %c0_50 = arith.constant 0 : index
    %96 = vector.load %arg11[%c0_49, %c0_50] : memref<1x32xf32, #tpu.memory_space<vmem>>, vector<1x32xf32>
    %c0_51 = arith.constant 0 : index
    %c0_52 = arith.constant 0 : index
    %97 = vector.load %arg12[%c0_51, %c0_52] : memref<1x32xf32, #tpu.memory_space<vmem>>, vector<1x32xf32>
    %cst_53 = arith.constant dense<0.000000e+00> : vector<16xf32>
    %98 = vector.multi_reduction <add>, %95, %cst_53 [1] : vector<16x32xf32> to vector<16xf32>
    %99 = vector.shape_cast %98 : vector<16xf32> to vector<16x1xf32>
    %cst_54 = arith.constant 3.200000e+01 : f32
    %100 = vector.broadcast %cst_54 : f32 to vector<16x1xf32>
    %101 = arith.divf %99, %100 : vector<16x1xf32>
    %102 = vector.broadcast %101 : vector<16x1xf32> to vector<16x32xf32>
    %103 = arith.subf %95, %102 : vector<16x32xf32>
    %104 = arith.mulf %103, %103 : vector<16x32xf32>
    %cst_55 = arith.constant dense<0.000000e+00> : vector<16xf32>
    %105 = vector.multi_reduction <add>, %104, %cst_55 [1] : vector<16x32xf32> to vector<16xf32>
    %106 = vector.shape_cast %105 : vector<16xf32> to vector<16x1xf32>
    %cst_56 = arith.constant 3.200000e+01 : f32
    %107 = vector.broadcast %cst_56 : f32 to vector<16x1xf32>
    %108 = arith.divf %106, %107 : vector<16x1xf32>
    %cst_57 = arith.constant 9.99999974E-6 : f32
    %109 = vector.broadcast %cst_57 : f32 to vector<16x1xf32>
    %110 = arith.addf %108, %109 : vector<16x1xf32>
    %111 = math.rsqrt %110 : vector<16x1xf32>
    %112 = vector.broadcast %111 : vector<16x1xf32> to vector<16x32xf32>
    %113 = arith.mulf %103, %112 : vector<16x32xf32>
    %114 = vector.broadcast %96 : vector<1x32xf32> to vector<16x32xf32>
    %115 = arith.mulf %113, %114 : vector<16x32xf32>
    %116 = vector.broadcast %97 : vector<1x32xf32> to vector<16x32xf32>
    %117 = arith.addf %115, %116 : vector<16x32xf32>
    %118 = arith.truncf %117 : vector<16x32xf32> to vector<16x32xbf16>
    %c0_58 = arith.constant 0 : index
    %c0_59 = arith.constant 0 : index
    %119 = vector.load %arg13[%c0_58, %c0_59] : memref<32x64xbf16, #tpu.memory_space<vmem>>, vector<32x64xbf16>
    %cst_60 = arith.constant dense<0.000000e+00> : vector<16x64xf32>
    %120 = tpu.matmul %118, %119, %cst_60 {dimension_numbers = #tpu.dot_dimension_numbers<[1], [0], [0], [1], [0, 0, 1, 1], [], []>} : vector<16x32xbf16>, vector<32x64xbf16>, vector<16x64xf32> -> vector<16x64xf32>
    %c0_61 = arith.constant 0 : index
    %c0_62 = arith.constant 0 : index
    %121 = vector.load %arg14[%c0_61, %c0_62] : memref<1x64xf32, #tpu.memory_space<vmem>>, vector<1x64xf32>
    %122 = vector.broadcast %121 : vector<1x64xf32> to vector<16x64xf32>
    %123 = arith.addf %120, %122 : vector<16x64xf32>
    %cst_63 = arith.constant 0.000000e+00 : f32
    %124 = vector.broadcast %cst_63 : f32 to vector<16x64xf32>
    %125 = arith.maximumf %123, %124 : vector<16x64xf32>
    %126 = arith.truncf %125 : vector<16x64xf32> to vector<16x64xbf16>
    %c0_64 = arith.constant 0 : index
    %c0_65 = arith.constant 0 : index
    %127 = vector.load %arg15[%c0_64, %c0_65] : memref<64x32xbf16, #tpu.memory_space<vmem>>, vector<64x32xbf16>
    %cst_66 = arith.constant dense<0.000000e+00> : vector<16x32xf32>
    %128 = tpu.matmul %126, %127, %cst_66 {dimension_numbers = #tpu.dot_dimension_numbers<[1], [0], [0], [1], [0, 0, 1, 1], [], []>} : vector<16x64xbf16>, vector<64x32xbf16>, vector<16x32xf32> -> vector<16x32xf32>
    %c0_67 = arith.constant 0 : index
    %c0_68 = arith.constant 0 : index
    %129 = vector.load %arg16[%c0_67, %c0_68] : memref<1x32xf32, #tpu.memory_space<vmem>>, vector<1x32xf32>
    %130 = vector.broadcast %129 : vector<1x32xf32> to vector<16x32xf32>
    %131 = arith.addf %128, %130 : vector<16x32xf32>
    %132 = arith.addf %117, %131 : vector<16x32xf32>
    %c0_69 = arith.constant 0 : index
    %c0_70 = arith.constant 0 : index
    %133 = vector.load %arg17[%c0_69, %c0_70] : memref<1x32xf32, #tpu.memory_space<vmem>>, vector<1x32xf32>
    %c0_71 = arith.constant 0 : index
    %c0_72 = arith.constant 0 : index
    %134 = vector.load %arg18[%c0_71, %c0_72] : memref<1x32xf32, #tpu.memory_space<vmem>>, vector<1x32xf32>
    %cst_73 = arith.constant dense<0.000000e+00> : vector<16xf32>
    %135 = vector.multi_reduction <add>, %132, %cst_73 [1] : vector<16x32xf32> to vector<16xf32>
    %136 = vector.shape_cast %135 : vector<16xf32> to vector<16x1xf32>
    %cst_74 = arith.constant 3.200000e+01 : f32
    %137 = vector.broadcast %cst_74 : f32 to vector<16x1xf32>
    %138 = arith.divf %136, %137 : vector<16x1xf32>
    %139 = vector.broadcast %138 : vector<16x1xf32> to vector<16x32xf32>
    %140 = arith.subf %132, %139 : vector<16x32xf32>
    %141 = arith.mulf %140, %140 : vector<16x32xf32>
    %cst_75 = arith.constant dense<0.000000e+00> : vector<16xf32>
    %142 = vector.multi_reduction <add>, %141, %cst_75 [1] : vector<16x32xf32> to vector<16xf32>
    %143 = vector.shape_cast %142 : vector<16xf32> to vector<16x1xf32>
    %cst_76 = arith.constant 3.200000e+01 : f32
    %144 = vector.broadcast %cst_76 : f32 to vector<16x1xf32>
    %145 = arith.divf %143, %144 : vector<16x1xf32>
    %cst_77 = arith.constant 9.99999974E-6 : f32
    %146 = vector.broadcast %cst_77 : f32 to vector<16x1xf32>
    %147 = arith.addf %145, %146 : vector<16x1xf32>
    %148 = math.rsqrt %147 : vector<16x1xf32>
    %149 = vector.broadcast %148 : vector<16x1xf32> to vector<16x32xf32>
    %150 = arith.mulf %140, %149 : vector<16x32xf32>
    %151 = vector.broadcast %133 : vector<1x32xf32> to vector<16x32xf32>
    %152 = arith.mulf %150, %151 : vector<16x32xf32>
    %153 = vector.broadcast %134 : vector<1x32xf32> to vector<16x32xf32>
    %154 = arith.addf %152, %153 : vector<16x32xf32>
    %155 = vector.shape_cast %154 : vector<16x32xf32> to vector<2x8x32xf32>
    %c0_78 = arith.constant 0 : index
    %c0_79 = arith.constant 0 : index
    %c0_80 = arith.constant 0 : index
    %156 = vector.load %arg19[%c0_78, %c0_79, %c0_80] : memref<2x8x32xf32, #tpu.memory_space<vmem>>, vector<2x8x32xf32>
    tpu.vector_store %arg19[%c0_78, %c0_79, %c0_80], %155 {strides = array<i32>} : memref<2x8x32xf32, #tpu.memory_space<vmem>>, vector<2x8x32xf32>,
    return
  }
  func.func @transform_0(%arg0: i32) -> (i32, i32, i32) {
    %c0_i32 = arith.constant 0 : i32
    %c0_i32_0 = arith.constant 0 : i32
    %c0_i32_1 = arith.constant 0 : i32
    return %arg0, %c0_i32, %c0_i32_0 : i32, i32, i32
  }
  func.func @transform_1(%arg0: i32) -> (i32, i32, i32, i32) {
    %c0_i32 = arith.constant 0 : i32
    %c0_i32_0 = arith.constant 0 : i32
    %c0_i32_1 = arith.constant 0 : i32
    %c0_i32_2 = arith.constant 0 : i32
    return %arg0, %c0_i32, %c0_i32_0, %c0_i32_1 : i32, i32, i32, i32
  }
  func.func @transform_2(%arg0: i32) -> (i32, i32) {
    %c0_i32 = arith.constant 0 : i32
    %c0_i32_0 = arith.constant 0 : i32
    %c0_i32_1 = arith.constant 0 : i32
    return %c0_i32, %c0_i32_0 : i32, i32
  }
  func.func @transform_3(%arg0: i32) -> (i32, i32) {
    %c0_i32 = arith.constant 0 : i32
    %c0_i32_0 = arith.constant 0 : i32
    %c0_i32_1 = arith.constant 0 : i32
    return %c0_i32, %c0_i32_0 : i32, i32
  }
  func.func @transform_4(%arg0: i32) -> (i32, i32) {
    %c0_i32 = arith.constant 0 : i32
    %c0_i32_0 = arith.constant 0 : i32
    %c0_i32_1 = arith.constant 0 : i32
    return %c0_i32, %c0_i32_0 : i32, i32
  }
  func.func @transform_5(%arg0: i32) -> (i32, i32) {
    %c0_i32 = arith.constant 0 : i32
    %c0_i32_0 = arith.constant 0 : i32
    %c0_i32_1 = arith.constant 0 : i32
    return %c0_i32, %c0_i32_0 : i32, i32
  }
  func.func @transform_6(%arg0: i32) -> (i32, i32) {
    %c0_i32 = arith.constant 0 : i32
    %c0_i32_0 = arith.constant 0 : i32
    %c0_i32_1 = arith.constant 0 : i32
    return %c0_i32, %c0_i32_0 : i32, i32
  }
  func.func @transform_7(%arg0: i32) -> (i32, i32) {
    %c0_i32 = arith.constant 0 : i32
    %c0_i32_0 = arith.constant 0 : i32
    %c0_i32_1 = arith.constant 0 : i32
    return %c0_i32, %c0_i32_0 : i32, i32
  }
  func.func @transform_8(%arg0: i32) -> (i32, i32) {
    %c0_i32 = arith.constant 0 : i32
    %c0_i32_0 = arith.constant 0 : i32
    %c0_i32_1 = arith.constant 0 : i32
    return %c0_i32, %c0_i32_0 : i32, i32
  }
  func.func @transform_9(%arg0: i32) -> (i32, i32) {
    %c0_i32 = arith.constant 0 : i32
    %c0_i32_0 = arith.constant 0 : i32
    %c0_i32_1 = arith.constant 0 : i32
    return %c0_i32, %c0_i32_0 : i32, i32
  }
  func.func @transform_10(%arg0: i32) -> (i32, i32) {
    %c0_i32 = arith.constant 0 : i32
    %c0_i32_0 = arith.constant 0 : i32
    %c0_i32_1 = arith.constant 0 : i32
    return %c0_i32, %c0_i32_0 : i32, i32
  }
  func.func @transform_11(%arg0: i32) -> (i32, i32) {
    %c0_i32 = arith.constant 0 : i32
    %c0_i32_0 = arith.constant 0 : i32
    %c0_i32_1 = arith.constant 0 : i32
    return %c0_i32, %c0_i32_0 : i32, i32
  }
  func.func @transform_12(%arg0: i32) -> (i32, i32) {
    %c0_i32 = arith.constant 0 : i32
    %c0_i32_0 = arith.constant 0 : i32
    %c0_i32_1 = arith.constant 0 : i32
    return %c0_i32, %c0_i32_0 : i32, i32
  }
  func.func @transform_13(%arg0: i32) -> (i32, i32) {
    %c0_i32 = arith.constant 0 : i32
    %c0_i32_0 = arith.constant 0 : i32
    %c0_i32_1 = arith.constant 0 : i32
    return %c0_i32, %c0_i32_0 : i32, i32
  }
  func.func @transform_14(%arg0: i32) -> (i32, i32) {
    %c0_i32 = arith.constant 0 : i32
    %c0_i32_0 = arith.constant 0 : i32
    %c0_i32_1 = arith.constant 0 : i32
    return %c0_i32, %c0_i32_0 : i32, i32
  }
  func.func @transform_15(%arg0: i32) -> (i32, i32) {
    %c0_i32 = arith.constant 0 : i32
    %c0_i32_0 = arith.constant 0 : i32
    %c0_i32_1 = arith.constant 0 : i32
    return %c0_i32, %c0_i32_0 : i32, i32
  }
  func.func @transform_16(%arg0: i32) -> (i32, i32) {
    %c0_i32 = arith.constant 0 : i32
    %c0_i32_0 = arith.constant 0 : i32
    %c0_i32_1 = arith.constant 0 : i32
    return %c0_i32, %c0_i32_0 : i32, i32
  }
  func.func @transform_17(%arg0: i32) -> (i32, i32) {
    %c0_i32 = arith.constant 0 : i32
    %c0_i32_0 = arith.constant 0 : i32
    %c0_i32_1 = arith.constant 0 : i32
    return %c0_i32, %c0_i32_0 : i32, i32
  }
  func.func @transform_18(%arg0: i32) -> (i32, i32, i32) {
    %c0_i32 = arith.constant 0 : i32
    %c0_i32_0 = arith.constant 0 : i32
    %c0_i32_1 = arith.constant 0 : i32
    return %arg0, %c0_i32, %c0_i32_0 : i32, i32, i32
  }
  func.func @transform_19(%arg0: i32) -> (i32, i32, i32, i32) {
    %c0_i32 = arith.constant 0 : i32
    %c0_i32_0 = arith.constant 0 : i32
    %c0_i32_1 = arith.constant 0 : i32
    %c0_i32_2 = arith.constant 0 : i32
    return %arg0, %c0_i32, %c0_i32_0, %c0_i32_1 : i32, i32, i32, i32
  }
}

module attributes {stable_mosaic.version = 11 : i64} {
  func.func @decoder_layer_kernel(%arg0: i32, %arg1: memref<2x8x32xf32, #tpu.memory_space<vmem>>, %arg2: memref<2x1x8x8xf32, #tpu.memory_space<vmem>>, %arg3: memref<32x32xbf16, #tpu.memory_space<vmem>>, %arg4: memref<1x32xf32, #tpu.memory_space<vmem>>, %arg5: memref<32x32xbf16, #tpu.memory_space<vmem>>, %arg6: memref<1x32xf32, #tpu.memory_space<vmem>>, %arg7: memref<32x32xbf16, #tpu.memory_space<vmem>>, %arg8: memref<1x32xf32, #tpu.memory_space<vmem>>, %arg9: memref<32x32xbf16, #tpu.memory_space<vmem>>, %arg10: memref<1x32xf32, #tpu.memory_space<vmem>>, %arg11: memref<1x32xf32, #tpu.memory_space<vmem>>, %arg12: memref<1x32xf32, #tpu.memory_space<vmem>>, %arg13: memref<32x64xbf16, #tpu.memory_space<vmem>>, %arg14: memref<1x64xf32, #tpu.memory_space<vmem>>, %arg15: memref<64x32xbf16, #tpu.memory_space<vmem>>, %arg16: memref<1x32xf32, #tpu.memory_space<vmem>>, %arg17: memref<1x32xf32, #tpu.memory_space<vmem>>, %arg18: memref<1x32xf32, #tpu.memory_space<vmem>>, %arg19: memref<2x8x32xf32, #tpu.memory_space<vmem>>, %arg20: memref<2x4x8x8xf32, #tpu.memory_space<vmem>>, %arg21: memref<16x32xbf16, #tpu.memory_space<vmem>>) attributes {dimension_semantics = [#tpu.dimension_semantics<parallel>], iteration_bounds = array<i64: 1>, scalar_prefetch = 0 : i64, scratch_operands = 1 : i64, tpu.core_type = #tpu.core_type<tc>, window_params = [{transform_indices = @transform_0, window_bounds = array<i64: 2, 8, 32>}, {transform_indices = @transform_1, window_bounds = array<i64: 2, 1, 8, 8>}, {pipeline_mode = #tpu.pipeline_mode<synchronous>, transform_indices = @transform_2, window_bounds = array<i64: 32, 32>}, {pipeline_mode = #tpu.pipeline_mode<synchronous>, transform_indices = @transform_3, window_bounds = array<i64: 1, 32>}, {pipeline_mode = #tpu.pipeline_mode<synchronous>, transform_indices = @transform_4, window_bounds = array<i64: 32, 32>}, {pipeline_mode = #tpu.pipeline_mode<synchronous>, transform_indices = @transform_5, window_bounds = array<i64: 1, 32>}, {pipeline_mode = #tpu.pipeline_mode<synchronous>, transform_indices = @transform_6, window_bounds = array<i64: 32, 32>}, {pipeline_mode = #tpu.pipeline_mode<synchronous>, transform_indices = @transform_7, window_bounds = array<i64: 1, 32>}, {pipeline_mode = #tpu.pipeline_mode<synchronous>, transform_indices = @transform_8, window_bounds = array<i64: 32, 32>}, {pipeline_mode = #tpu.pipeline_mode<synchronous>, transform_indices = @transform_9, window_bounds = array<i64: 1, 32>}, {pipeline_mode = #tpu.pipeline_mode<synchronous>, transform_indices = @transform_10, window_bounds = array<i64: 1, 32>}, {pipeline_mode = #tpu.pipeline_mode<synchronous>, transform_indices = @transform_11, window_bounds = array<i64: 1, 32>}, {pipeline_mode = #tpu.pipeline_mode<synchronous>, transform_indices = @transform_12, window_bounds = array<i64: 32, 64>}, {pipeline_mode = #tpu.pipeline_mode<synchronous>, transform_indices = @transform_13, window_bounds = array<i64: 1, 64>}, {pipeline_mode = #tpu.pipeline_mode<synchronous>, transform_indices = @transform_14, window_bounds = array<i64: 64, 32>}, {pipeline_mode = #tpu.pipeline_mode<synchronous>, transform_indices = @transform_15, window_bounds = array<i64: 1, 32>}, {pipeline_mode = #tpu.pipeline_mode<synchronous>, transform_indices = @transform_16, window_bounds = array<i64: 1, 32>}, {pipeline_mode = #tpu.pipeline_mode<synchronous>, transform_indices = @transform_17, window_bounds = array<i64: 1, 32>}, {transform_indices = @transform_18, window_bounds = array<i64: 2, 8, 32>}, {transform_indices = @transform_19, window_bounds = array<i64: 2, 4, 8, 8>}]} {
    %c0 = arith.constant 0 : index
    %c0_0 = arith.constant 0 : index
    %c0_1 = arith.constant 0 : index
    %0 = vector.load %arg1[%c0, %c0_0, %c0_1] : memref<2x8x32xf32, #tpu.memory_space<vmem>>, vector<2x8x32xf32>
    %1 = vector.shape_cast %0 : vector<2x8x32xf32> to vector<16x32xf32>
    %2 = arith.truncf %1 : vector<16x32xf32> to vector<16x32xbf16>
    %c0_2 = arith.constant 0 : index
    %c0_3 = arith.constant 0 : index
    %3 = vector.load %arg3[%c0_2, %c0_3] : memref<32x32xbf16, #tpu.memory_space<vmem>>, vector<32x32xbf16>
    %cst = arith.constant dense<0.000000e+00> : vector<16x32xf32>
    %4 = tpu.matmul %2, %3, %cst {dimension_numbers = #tpu.dot_dimension_numbers<[1], [0], [0], [1], [0, 0, 1, 1], [], []>} : vector<16x32xbf16>, vector<32x32xbf16>, vector<16x32xf32> -> vector<16x32xf32>
    %c0_4 = arith.constant 0 : index
    %c0_5 = arith.constant 0 : index
    %5 = vector.load %arg4[%c0_4, %c0_5] : memref<1x32xf32, #tpu.memory_space<vmem>>, vector<1x32xf32>
    %6 = vector.broadcast %5 : vector<1x32xf32> to vector<16x32xf32>
    %7 = arith.addf %4, %6 : vector<16x32xf32>
    %8 = arith.truncf %7 : vector<16x32xf32> to vector<16x32xbf16>
    %c0_6 = arith.constant 0 : index
    %c0_7 = arith.constant 0 : index
    %9 = vector.load %arg5[%c0_6, %c0_7] : memref<32x32xbf16, #tpu.memory_space<vmem>>, vector<32x32xbf16>
    %cst_8 = arith.constant dense<0.000000e+00> : vector<16x32xf32>
    %10 = tpu.matmul %2, %9, %cst_8 {dimension_numbers = #tpu.dot_dimension_numbers<[1], [0], [0], [1], [0, 0, 1, 1], [], []>} : vector<16x32xbf16>, vector<32x32xbf16>, vector<16x32xf32> -> vector<16x32xf32>
    %c0_9 = arith.constant 0 : index
    %c0_10 = arith.constant 0 : index
    %11 = vector.load %arg6[%c0_9, %c0_10] : memref<1x32xf32, #tpu.memory_space<vmem>>, vector<1x32xf32>
    %12 = vector.broadcast %11 : vector<1x32xf32> to vector<16x32xf32>
    %13 = arith.addf %10, %12 : vector<16x32xf32>
    %14 = arith.truncf %13 : vector<16x32xf32> to vector<16x32xbf16>
    %c0_11 = arith.constant 0 : index
    %c0_12 = arith.constant 0 : index
    %15 = vector.load %arg7[%c0_11, %c0_12] : memref<32x32xbf16, #tpu.memory_space<vmem>>, vector<32x32xbf16>
    %cst_13 = arith.constant dense<0.000000e+00> : vector<16x32xf32>
    %16 = tpu.matmul %2, %15, %cst_13 {dimension_numbers = #tpu.dot_dimension_numbers<[1], [0], [0], [1], [0, 0, 1, 1], [], []>} : vector<16x32xbf16>, vector<32x32xbf16>, vector<16x32xf32> -> vector<16x32xf32>
    %c0_14 = arith.constant 0 : index
    %c0_15 = arith.constant 0 : index
    %17 = vector.load %arg8[%c0_14, %c0_15] : memref<1x32xf32, #tpu.memory_space<vmem>>, vector<1x32xf32>
    %18 = vector.broadcast %17 : vector<1x32xf32> to vector<16x32xf32>
    %19 = arith.addf %16, %18 : vector<16x32xf32>
    %20 = arith.truncf %19 : vector<16x32xf32> to vector<16x32xbf16>
    %21 = vector.extract_strided_slice %8 {offsets = [0, 0], sizes = [8, 32], strides = [1, 1]} : vector<16x32xbf16> to vector<8x32xbf16>
    %22 = vector.shape_cast %21 : vector<8x32xbf16> to vector<8x4x8xbf16>
    %23 = tpu.transpose %22, [1, 0, 2] : vector<8x4x8xbf16> -> vector<4x8x8xbf16>
    %24 = vector.extract_strided_slice %14 {offsets = [0, 0], sizes = [8, 32], strides = [1, 1]} : vector<16x32xbf16> to vector<8x32xbf16>
    %25 = vector.shape_cast %24 : vector<8x32xbf16> to vector<8x4x8xbf16>
    %26 = tpu.transpose %25, [1, 0, 2] : vector<8x4x8xbf16> -> vector<4x8x8xbf16>
    %27 = vector.extract_strided_slice %20 {offsets = [0, 0], sizes = [8, 32], strides = [1, 1]} : vector<16x32xbf16> to vector<8x32xbf16>
    %28 = vector.shape_cast %27 : vector<8x32xbf16> to vector<8x4x8xbf16>
    %29 = tpu.transpose %28, [1, 0, 2] : vector<8x4x8xbf16> -> vector<4x8x8xbf16>
    "tpu.trace_start"() <{level = 10 : i32, message = "hqd,hkd->hqk"}> : () -> ()
    %cst_16 = arith.constant dense<0.000000e+00> : vector<4x8x8xf32>
    %30 = tpu.matmul %23, %26, %cst_16 {dimension_numbers = #tpu.dot_dimension_numbers<[2], [2], [1], [1], [0, 0, 0, 1, 1, 1], [0], [0]>} : vector<4x8x8xbf16>, vector<4x8x8xbf16>, vector<4x8x8xf32> -> vector<4x8x8xf32>
    "tpu.trace_stop"() : () -> ()
    %c0_17 = arith.constant 0 : index
    %c0_18 = arith.constant 0 : index
    %c0_19 = arith.constant 0 : index
    %c0_20 = arith.constant 0 : index
    %31 = vector.load %arg2[%c0_17, %c0_18, %c0_19, %c0_20] : memref<2x1x8x8xf32, #tpu.memory_space<vmem>>, vector<1x1x8x8xf32>
    %32 = vector.shape_cast %31 : vector<1x1x8x8xf32> to vector<8x8xf32>
    %33 = vector.shape_cast %32 : vector<8x8xf32> to vector<1x8x8xf32>
    %34 = vector.broadcast %33 : vector<1x8x8xf32> to vector<4x8x8xf32>
    %35 = arith.addf %30, %34 : vector<4x8x8xf32>
    %cst_21 = arith.constant dense<0xFF800000> : vector<4x8xf32>
    %36 = vector.multi_reduction <maximumf>, %35, %cst_21 [2] : vector<4x8x8xf32> to vector<4x8xf32>
    %37 = vector.shape_cast %36 : vector<4x8xf32> to vector<4x8x1xf32>
    %38 = vector.broadcast %37 : vector<4x8x1xf32> to vector<4x8x8xf32>
    %39 = arith.subf %35, %38 : vector<4x8x8xf32>
    %40 = math.exp %39 : vector<4x8x8xf32>
    %cst_22 = arith.constant dense<0.000000e+00> : vector<4x8xf32>
    %41 = vector.multi_reduction <add>, %40, %cst_22 [2] : vector<4x8x8xf32> to vector<4x8xf32>
    %42 = vector.shape_cast %41 : vector<4x8xf32> to vector<4x8x1xf32>
    %43 = tpu.reciprocal %42 {approx = true} : vector<4x8x1xf32> -> vector<4x8x1xf32>
    %44 = vector.broadcast %43 : vector<4x8x1xf32> to vector<4x8x8xf32>
    %45 = arith.mulf %40, %44 : vector<4x8x8xf32>
    %c0_23 = arith.constant 0 : index
    %c0_24 = arith.constant 0 : index
    %c0_25 = arith.constant 0 : index
    %c0_26 = arith.constant 0 : index
    %46 = vector.load %arg20[%c0_23, %c0_24, %c0_25, %c0_26] : memref<2x4x8x8xf32, #tpu.memory_space<vmem>>, vector<1x4x8x8xf32>
    %47 = vector.shape_cast %46 : vector<1x4x8x8xf32> to vector<4x8x8xf32>
    %48 = vector.shape_cast %45 : vector<4x8x8xf32> to vector<1x4x8x8xf32>
    tpu.vector_store %arg20[%c0_23, %c0_24, %c0_25, %c0_26], %48 {strides = array<i32>} : memref<2x4x8x8xf32, #tpu.memory_space<vmem>>, vector<1x4x8x8xf32>,
    %49 = arith.truncf %45 : vector<4x8x8xf32> to vector<4x8x8xbf16>
    "tpu.trace_start"() <{level = 10 : i32, message = "hqk,hkd->hqd"}> : () -> ()
    %cst_27 = arith.constant dense<0.000000e+00> : vector<4x8x8xf32>
    %50 = tpu.matmul %49, %29, %cst_27 {dimension_numbers = #tpu.dot_dimension_numbers<[2], [1], [1], [2], [0, 0, 0, 1, 1, 2], [0], [0]>} : vector<4x8x8xbf16>, vector<4x8x8xbf16>, vector<4x8x8xf32> -> vector<4x8x8xf32>
    "tpu.trace_stop"() : () -> ()
    %51 = arith.truncf %50 : vector<4x8x8xf32> to vector<4x8x8xbf16>
    %52 = tpu.transpose %51, [1, 0, 2] : vector<4x8x8xbf16> -> vector<8x4x8xbf16>
    %53 = vector.shape_cast %52 : vector<8x4x8xbf16> to vector<8x32xbf16>
    %c0_28 = arith.constant 0 : index
    %c0_29 = arith.constant 0 : index
    %54 = vector.load %arg21[%c0_28, %c0_29] : memref<16x32xbf16, #tpu.memory_space<vmem>>, vector<8x32xbf16>
    tpu.vector_store %arg21[%c0_28, %c0_29], %53 {strides = array<i32>} : memref<16x32xbf16, #tpu.memory_space<vmem>>, vector<8x32xbf16>,
    %55 = vector.extract_strided_slice %8 {offsets = [8, 0], sizes = [8, 32], strides = [1, 1]} : vector<16x32xbf16> to vector<8x32xbf16>
    %56 = vector.shape_cast %55 : vector<8x32xbf16> to vector<8x4x8xbf16>
    %57 = tpu.transpose %56, [1, 0, 2] : vector<8x4x8xbf16> -> vector<4x8x8xbf16>
    %58 = vector.extract_strided_slice %14 {offsets = [8, 0], sizes = [8, 32], strides = [1, 1]} : vector<16x32xbf16> to vector<8x32xbf16>
    %59 = vector.shape_cast %58 : vector<8x32xbf16> to vector<8x4x8xbf16>
    %60 = tpu.transpose %59, [1, 0, 2] : vector<8x4x8xbf16> -> vector<4x8x8xbf16>
    %61 = vector.extract_strided_slice %20 {offsets = [8, 0], sizes = [8, 32], strides = [1, 1]} : vector<16x32xbf16> to vector<8x32xbf16>
    %62 = vector.shape_cast %61 : vector<8x32xbf16> to vector<8x4x8xbf16>
    %63 = tpu.transpose %62, [1, 0, 2] : vector<8x4x8xbf16> -> vector<4x8x8xbf16>
    "tpu.trace_start"() <{level = 10 : i32, message = "hqd,hkd->hqk"}> : () -> ()
    %cst_30 = arith.constant dense<0.000000e+00> : vector<4x8x8xf32>
    %64 = tpu.matmul %57, %60, %cst_30 {dimension_numbers = #tpu.dot_dimension_numbers<[2], [2], [1], [1], [0, 0, 0, 1, 1, 1], [0], [0]>} : vector<4x8x8xbf16>, vector<4x8x8xbf16>, vector<4x8x8xf32> -> vector<4x8x8xf32>
    "tpu.trace_stop"() : () -> ()
    %c1 = arith.constant 1 : index
    %c0_31 = arith.constant 0 : index
    %c0_32 = arith.constant 0 : index
    %c0_33 = arith.constant 0 : index
    %65 = vector.load %arg2[%c1, %c0_31, %c0_32, %c0_33] : memref<2x1x8x8xf32, #tpu.memory_space<vmem>>, vector<1x1x8x8xf32>
    %66 = vector.shape_cast %65 : vector<1x1x8x8xf32> to vector<8x8xf32>
    %67 = vector.shape_cast %66 : vector<8x8xf32> to vector<1x8x8xf32>
    %68 = vector.broadcast %67 : vector<1x8x8xf32> to vector<4x8x8xf32>
    %69 = arith.addf %64, %68 : vector<4x8x8xf32>
    %cst_34 = arith.constant dense<0xFF800000> : vector<4x8xf32>
    %70 = vector.multi_reduction <maximumf>, %69, %cst_34 [2] : vector<4x8x8xf32> to vector<4x8xf32>
    %71 = vector.shape_cast %70 : vector<4x8xf32> to vector<4x8x1xf32>
    %72 = vector.broadcast %71 : vector<4x8x1xf32> to vector<4x8x8xf32>
    %73 = arith.subf %69, %72 : vector<4x8x8xf32>
    %74 = math.exp %73 : vector<4x8x8xf32>
    %cst_35 = arith.constant dense<0.000000e+00> : vector<4x8xf32>
    %75 = vector.multi_reduction <add>, %74, %cst_35 [2] : vector<4x8x8xf32> to vector<4x8xf32>
    %76 = vector.shape_cast %75 : vector<4x8xf32> to vector<4x8x1xf32>
    %77 = tpu.reciprocal %76 {approx = true} : vector<4x8x1xf32> -> vector<4x8x1xf32>
    %78 = vector.broadcast %77 : vector<4x8x1xf32> to vector<4x8x8xf32>
    %79 = arith.mulf %74, %78 : vector<4x8x8xf32>
    %c1_36 = arith.constant 1 : index
    %c0_37 = arith.constant 0 : index
    %c0_38 = arith.constant 0 : index
    %c0_39 = arith.constant 0 : index
    %80 = vector.load %arg20[%c1_36, %c0_37, %c0_38, %c0_39] : memref<2x4x8x8xf32, #tpu.memory_space<vmem>>, vector<1x4x8x8xf32>
    %81 = vector.shape_cast %80 : vector<1x4x8x8xf32> to vector<4x8x8xf32>
    %82 = vector.shape_cast %79 : vector<4x8x8xf32> to vector<1x4x8x8xf32>
    tpu.vector_store %arg20[%c1_36, %c0_37, %c0_38, %c0_39], %82 {strides = array<i32>} : memref<2x4x8x8xf32, #tpu.memory_space<vmem>>, vector<1x4x8x8xf32>,
    %83 = arith.truncf %79 : vector<4x8x8xf32> to vector<4x8x8xbf16>
    "tpu.trace_start"() <{level = 10 : i32, message = "hqk,hkd->hqd"}> : () -> ()
    %cst_40 = arith.constant dense<0.000000e+00> : vector<4x8x8xf32>
    %84 = tpu.matmul %83, %63, %cst_40 {dimension_numbers = #tpu.dot_dimension_numbers<[2], [1], [1], [2], [0, 0, 0, 1, 1, 2], [0], [0]>} : vector<4x8x8xbf16>, vector<4x8x8xbf16>, vector<4x8x8xf32> -> vector<4x8x8xf32>
    "tpu.trace_stop"() : () -> ()
    %85 = arith.truncf %84 : vector<4x8x8xf32> to vector<4x8x8xbf16>
    %86 = tpu.transpose %85, [1, 0, 2] : vector<4x8x8xbf16> -> vector<8x4x8xbf16>
    %87 = vector.shape_cast %86 : vector<8x4x8xbf16> to vector<8x32xbf16>
    %c8 = arith.constant 8 : index
    %c0_41 = arith.constant 0 : index
    %88 = vector.load %arg21[%c8, %c0_41] : memref<16x32xbf16, #tpu.memory_space<vmem>>, vector<8x32xbf16>
    tpu.vector_store %arg21[%c8, %c0_41], %87 {strides = array<i32>} : memref<16x32xbf16, #tpu.memory_space<vmem>>, vector<8x32xbf16>,
    %c0_42 = arith.constant 0 : index
    %c0_43 = arith.constant 0 : index
    %89 = vector.load %arg21[%c0_42, %c0_43] : memref<16x32xbf16, #tpu.memory_space<vmem>>, vector<16x32xbf16>
    %c0_44 = arith.constant 0 : index
    %c0_45 = arith.constant 0 : index
    %90 = vector.load %arg9[%c0_44, %c0_45] : memref<32x32xbf16, #tpu.memory_space<vmem>>, vector<32x32xbf16>
    %cst_46 = arith.constant dense<0.000000e+00> : vector<16x32xf32>
    %91 = tpu.matmul %89, %90, %cst_46 {dimension_numbers = #tpu.dot_dimension_numbers<[1], [0], [0], [1], [0, 0, 1, 1], [], []>} : vector<16x32xbf16>, vector<32x32xbf16>, vector<16x32xf32> -> vector<16x32xf32>
    %c0_47 = arith.constant 0 : index
    %c0_48 = arith.constant 0 : index
    %92 = vector.load %arg10[%c0_47, %c0_48] : memref<1x32xf32, #tpu.memory_space<vmem>>, vector<1x32xf32>
    %93 = vector.broadcast %92 : vector<1x32xf32> to vector<16x32xf32>
    %94 = arith.addf %91, %93 : vector<16x32xf32>
    %95 = arith.addf %1, %94 : vector<16x32xf32>
    %c0_49 = arith.constant 0 : index
    %c0_50 = arith.constant 0 : index
    %96 = vector.load %arg11[%c0_49, %c0_50] : memref<1x32xf32, #tpu.memory_space<vmem>>, vector<1x32xf32>
    %c0_51 = arith.constant 0 : index
    %c0_52 = arith.constant 0 : index
    %97 = vector.load %arg12[%c0_51, %c0_52] : memref<1x32xf32, #tpu.memory_space<vmem>>, vector<1x32xf32>
    %cst_53 = arith.constant dense<0.000000e+00> : vector<16xf32>
    %98 = vector.multi_reduction <add>, %95, %cst_53 [1] : vector<16x32xf32> to vector<16xf32>
    %99 = vector.shape_cast %98 : vector<16xf32> to vector<16x1xf32>
    %cst_54 = arith.constant 3.200000e+01 : f32
    %100 = vector.broadcast %cst_54 : f32 to vector<16x1xf32>
    %101 = arith.divf %99, %100 : vector<16x1xf32>
    %102 = vector.broadcast %101 : vector<16x1xf32> to vector<16x32xf32>
    %103 = arith.subf %95, %102 : vector<16x32xf32>
    %104 = arith.mulf %103, %103 : vector<16x32xf32>
    %cst_55 = arith.constant dense<0.000000e+00> : vector<16xf32>
    %105 = vector.multi_reduction <add>, %104, %cst_55 [1] : vector<16x32xf32> to vector<16xf32>
    %106 = vector.shape_cast %105 : vector<16xf32> to vector<16x1xf32>
    %cst_56 = arith.constant 3.200000e+01 : f32
    %107 = vector.broadcast %cst_56 : f32 to vector<16x1xf32>
    %108 = arith.divf %106, %107 : vector<16x1xf32>
    %cst_57 = arith.constant 9.99999974E-6 : f32
    %109 = vector.broadcast %cst_57 : f32 to vector<16x1xf32>
    %110 = arith.addf %108, %109 : vector<16x1xf32>
    %111 = math.rsqrt %110 : vector<16x1xf32>
    %112 = vector.broadcast %111 : vector<16x1xf32> to vector<16x32xf32>
    %113 = arith.mulf %103, %112 : vector<16x32xf32>
    %114 = vector.broadcast %96 : vector<1x32xf32> to vector<16x32xf32>
    %115 = arith.mulf %113, %114 : vector<16x32xf32>
    %116 = vector.broadcast %97 : vector<1x32xf32> to vector<16x32xf32>
    %117 = arith.addf %115, %116 : vector<16x32xf32>
    %118 = arith.truncf %117 : vector<16x32xf32> to vector<16x32xbf16>
    %c0_58 = arith.constant 0 : index
    %c0_59 = arith.constant 0 : index
    %119 = vector.load %arg13[%c0_58, %c0_59] : memref<32x64xbf16, #tpu.memory_space<vmem>>, vector<32x64xbf16>
    %cst_60 = arith.constant dense<0.000000e+00> : vector<16x64xf32>
    %120 = tpu.matmul %118, %119, %cst_60 {dimension_numbers = #tpu.dot_dimension_numbers<[1], [0], [0], [1], [0, 0, 1, 1], [], []>} : vector<16x32xbf16>, vector<32x64xbf16>, vector<16x64xf32> -> vector<16x64xf32>
    %c0_61 = arith.constant 0 : index
    %c0_62 = arith.constant 0 : index
    %121 = vector.load %arg14[%c0_61, %c0_62] : memref<1x64xf32, #tpu.memory_space<vmem>>, vector<1x64xf32>
    %122 = vector.broadcast %121 : vector<1x64xf32> to vector<16x64xf32>
    %123 = arith.addf %120, %122 : vector<16x64xf32>
    %cst_63 = arith.constant 0.000000e+00 : f32
    %124 = vector.broadcast %cst_63 : f32 to vector<16x64xf32>
    %125 = arith.maximumf %123, %124 : vector<16x64xf32>
    %126 = arith.truncf %125 : vector<16x64xf32> to vector<16x64xbf16>
    %c0_64 = arith.constant 0 : index
    %c0_65 = arith.constant 0 : index
    %127 = vector.load %arg15[%c0_64, %c0_65] : memref<64x32xbf16, #tpu.memory_space<vmem>>, vector<64x32xbf16>
    %cst_66 = arith.constant dense<0.000000e+00> : vector<16x32xf32>
    %128 = tpu.matmul %126, %127, %cst_66 {dimension_numbers = #tpu.dot_dimension_numbers<[1], [0], [0], [1], [0, 0, 1, 1], [], []>} : vector<16x64xbf16>, vector<64x32xbf16>, vector<16x32xf32> -> vector<16x32xf32>
    %c0_67 = arith.constant 0 : index
    %c0_68 = arith.constant 0 : index
    %129 = vector.load %arg16[%c0_67, %c0_68] : memref<1x32xf32, #tpu.memory_space<vmem>>, vector<1x32xf32>
    %130 = vector.broadcast %129 : vector<1x32xf32> to vector<16x32xf32>
    %131 = arith.addf %128, %130 : vector<16x32xf32>
    %132 = arith.addf %117, %131 : vector<16x32xf32>
    %c0_69 = arith.constant 0 : index
    %c0_70 = arith.constant 0 : index
    %133 = vector.load %arg17[%c0_69, %c0_70] : memref<1x32xf32, #tpu.memory_space<vmem>>, vector<1x32xf32>
    %c0_71 = arith.constant 0 : index
    %c0_72 = arith.constant 0 : index
    %134 = vector.load %arg18[%c0_71, %c0_72] : memref<1x32xf32, #tpu.memory_space<vmem>>, vector<1x32xf32>
    %cst_73 = arith.constant dense<0.000000e+00> : vector<16xf32>
    %135 = vector.multi_reduction <add>, %132, %cst_73 [1] : vector<16x32xf32> to vector<16xf32>
    %136 = vector.shape_cast %135 : vector<16xf32> to vector<16x1xf32>
    %cst_74 = arith.constant 3.200000e+01 : f32
    %137 = vector.broadcast %cst_74 : f32 to vector<16x1xf32>
    %138 = arith.divf %136, %137 : vector<16x1xf32>
    %139 = vector.broadcast %138 : vector<16x1xf32> to vector<16x32xf32>
    %140 = arith.subf %132, %139 : vector<16x32xf32>
    %141 = arith.mulf %140, %140 : vector<16x32xf32>
    %cst_75 = arith.constant dense<0.000000e+00> : vector<16xf32>
    %142 = vector.multi_reduction <add>, %141, %cst_75 [1] : vector<16x32xf32> to vector<16xf32>
    %143 = vector.shape_cast %142 : vector<16xf32> to vector<16x1xf32>
    %cst_76 = arith.constant 3.200000e+01 : f32
    %144 = vector.broadcast %cst_76 : f32 to vector<16x1xf32>
    %145 = arith.divf %143, %144 : vector<16x1xf32>
    %cst_77 = arith.constant 9.99999974E-6 : f32
    %146 = vector.broadcast %cst_77 : f32 to vector<16x1xf32>
    %147 = arith.addf %145, %146 : vector<16x1xf32>
    %148 = math.rsqrt %147 : vector<16x1xf32>
    %149 = vector.broadcast %148 : vector<16x1xf32> to vector<16x32xf32>
    %150 = arith.mulf %140, %149 : vector<16x32xf32>
    %151 = vector.broadcast %133 : vector<1x32xf32> to vector<16x32xf32>
    %152 = arith.mulf %150, %151 : vector<16x32xf32>
    %153 = vector.broadcast %134 : vector<1x32xf32> to vector<16x32xf32>
    %154 = arith.addf %152, %153 : vector<16x32xf32>
    %155 = vector.shape_cast %154 : vector<16x32xf32> to vector<2x8x32xf32>
    %c0_78 = arith.constant 0 : index
    %c0_79 = arith.constant 0 : index
    %c0_80 = arith.constant 0 : index
    %156 = vector.load %arg19[%c0_78, %c0_79, %c0_80] : memref<2x8x32xf32, #tpu.memory_space<vmem>>, vector<2x8x32xf32>
    tpu.vector_store %arg19[%c0_78, %c0_79, %c0_80], %155 {strides = array<i32>} : memref<2x8x32xf32, #tpu.memory_space<vmem>>, vector<2x8x32xf32>,
    return
  }
  func.func @transform_0(%arg0: i32) -> (i32, i32, i32) {
    %c0_i32 = arith.constant 0 : i32
    %c0_i32_0 = arith.constant 0 : i32
    %c0_i32_1 = arith.constant 0 : i32
    return %arg0, %c0_i32, %c0_i32_0 : i32, i32, i32
  }
  func.func @transform_1(%arg0: i32) -> (i32, i32, i32, i32) {
    %c0_i32 = arith.constant 0 : i32
    %c0_i32_0 = arith.constant 0 : i32
    %c0_i32_1 = arith.constant 0 : i32
    %c0_i32_2 = arith.constant 0 : i32
    return %arg0, %c0_i32, %c0_i32_0, %c0_i32_1 : i32, i32, i32, i32
  }
  func.func @transform_2(%arg0: i32) -> (i32, i32) {
    %c0_i32 = arith.constant 0 : i32
    %c0_i32_0 = arith.constant 0 : i32
    %c0_i32_1 = arith.constant 0 : i32
    return %c0_i32, %c0_i32_0 : i32, i32
  }
  func.func @transform_3(%arg0: i32) -> (i32, i32) {
    %c0_i32 = arith.constant 0 : i32
    %c0_i32_0 = arith.constant 0 : i32
    %c0_i32_1 = arith.constant 0 : i32
    return %c0_i32, %c0_i32_0 : i32, i32
  }
  func.func @transform_4(%arg0: i32) -> (i32, i32) {
    %c0_i32 = arith.constant 0 : i32
    %c0_i32_0 = arith.constant 0 : i32
    %c0_i32_1 = arith.constant 0 : i32
    return %c0_i32, %c0_i32_0 : i32, i32
  }
  func.func @transform_5(%arg0: i32) -> (i32, i32) {
    %c0_i32 = arith.constant 0 : i32
    %c0_i32_0 = arith.constant 0 : i32
    %c0_i32_1 = arith.constant 0 : i32
    return %c0_i32, %c0_i32_0 : i32, i32
  }
  func.func @transform_6(%arg0: i32) -> (i32, i32) {
    %c0_i32 = arith.constant 0 : i32
    %c0_i32_0 = arith.constant 0 : i32
    %c0_i32_1 = arith.constant 0 : i32
    return %c0_i32, %c0_i32_0 : i32, i32
  }
  func.func @transform_7(%arg0: i32) -> (i32, i32) {
    %c0_i32 = arith.constant 0 : i32
    %c0_i32_0 = arith.constant 0 : i32
    %c0_i32_1 = arith.constant 0 : i32
    return %c0_i32, %c0_i32_0 : i32, i32
  }
  func.func @transform_8(%arg0: i32) -> (i32, i32) {
    %c0_i32 = arith.constant 0 : i32
    %c0_i32_0 = arith.constant 0 : i32
    %c0_i32_1 = arith.constant 0 : i32
    return %c0_i32, %c0_i32_0 : i32, i32
  }
  func.func @transform_9(%arg0: i32) -> (i32, i32) {
    %c0_i32 = arith.constant 0 : i32
    %c0_i32_0 = arith.constant 0 : i32
    %c0_i32_1 = arith.constant 0 : i32
    return %c0_i32, %c0_i32_0 : i32, i32
  }
  func.func @transform_10(%arg0: i32) -> (i32, i32) {
    %c0_i32 = arith.constant 0 : i32
    %c0_i32_0 = arith.constant 0 : i32
    %c0_i32_1 = arith.constant 0 : i32
    return %c0_i32, %c0_i32_0 : i32, i32
  }
  func.func @transform_11(%arg0: i32) -> (i32, i32) {
    %c0_i32 = arith.constant 0 : i32
    %c0_i32_0 = arith.constant 0 : i32
    %c0_i32_1 = arith.constant 0 : i32
    return %c0_i32, %c0_i32_0 : i32, i32
  }
  func.func @transform_12(%arg0: i32) -> (i32, i32) {
    %c0_i32 = arith.constant 0 : i32
    %c0_i32_0 = arith.constant 0 : i32
    %c0_i32_1 = arith.constant 0 : i32
    return %c0_i32, %c0_i32_0 : i32, i32
  }
  func.func @transform_13(%arg0: i32) -> (i32, i32) {
    %c0_i32 = arith.constant 0 : i32
    %c0_i32_0 = arith.constant 0 : i32
    %c0_i32_1 = arith.constant 0 : i32
    return %c0_i32, %c0_i32_0 : i32, i32
  }
  func.func @transform_14(%arg0: i32) -> (i32, i32) {
    %c0_i32 = arith.constant 0 : i32
    %c0_i32_0 = arith.constant 0 : i32
    %c0_i32_1 = arith.constant 0 : i32
    return %c0_i32, %c0_i32_0 : i32, i32
  }
  func.func @transform_15(%arg0: i32) -> (i32, i32) {
    %c0_i32 = arith.constant 0 : i32
    %c0_i32_0 = arith.constant 0 : i32
    %c0_i32_1 = arith.constant 0 : i32
    return %c0_i32, %c0_i32_0 : i32, i32
  }
  func.func @transform_16(%arg0: i32) -> (i32, i32) {
    %c0_i32 = arith.constant 0 : i32
    %c0_i32_0 = arith.constant 0 : i32
    %c0_i32_1 = arith.constant 0 : i32
    return %c0_i32, %c0_i32_0 : i32, i32
  }
  func.func @transform_17(%arg0: i32) -> (i32, i32) {
    %c0_i32 = arith.constant 0 : i32
    %c0_i32_0 = arith.constant 0 : i32
    %c0_i32_1 = arith.constant 0 : i32
    return %c0_i32, %c0_i32_0 : i32, i32
  }
  func.func @transform_18(%arg0: i32) -> (i32, i32, i32) {
    %c0_i32 = arith.constant 0 : i32
    %c0_i32_0 = arith.constant 0 : i32
    %c0_i32_1 = arith.constant 0 : i32
    return %arg0, %c0_i32, %c0_i32_0 : i32, i32, i32
  }
  func.func @transform_19(%arg0: i32) -> (i32, i32, i32, i32) {
    %c0_i32 = arith.constant 0 : i32
    %c0_i32_0 = arith.constant 0 : i32
    %c0_i32_1 = arith.constant 0 : i32
    %c0_i32_2 = arith.constant 0 : i32
    return %arg0, %c0_i32, %c0_i32_0, %c0_i32_1 : i32, i32, i32, i32
  }
}

</mosaic_0001>

<llo_original>
// kernel: tpu_custom_call.1
$region0: #{tpu_custom_call.1}
  #allocation0 [shape = 'u32[]', space=smem, size = 0x4, offset = 0x4, fixed_abs, tag = 'smem constant byte address 0x4 - core index']
  #allocation1 [shape = 'u32[72,128]{1,0:T(1,128)}', space=vmem, size = 0x9000, scoped, tag = 'internal scratch']
  #allocation2 [shape = 'bf16[16,32]{1,0:T(8,128)(2,1)}', space=vmem, size = 0x1000, scoped, tag = 'scratch operand']
  %s0 = inlined_call_operand.vmem [shape: f32[2,8,32], index: 0, kind: input, shape index: {}]
  %s1 = inlined_call_operand.vmem [shape: f32[2,1,8,8], index: 1, kind: input, shape index: {}]
  %s2 = inlined_call_operand.vmem [shape: bf16[32,32], index: 2, kind: input, shape index: {}]
  %s3 = inlined_call_operand.vmem [shape: f32[1,32], index: 3, kind: input, shape index: {}]
  %s4 = inlined_call_operand.hbm [shape: bf16[32,32], index: 4, kind: input, shape index: {}]
  %s5 = inlined_call_operand.vmem [shape: f32[1,32], index: 5, kind: input, shape index: {}]
  %s6 = inlined_call_operand.hbm [shape: bf16[32,32], index: 6, kind: input, shape index: {}]
  %s7 = inlined_call_operand.vmem [shape: f32[1,32], index: 7, kind: input, shape index: {}]
  %s8 = inlined_call_operand.hbm [shape: bf16[32,32], index: 8, kind: input, shape index: {}]
  %s9 = inlined_call_operand.vmem [shape: f32[1,32], index: 9, kind: input, shape index: {}]
  %s10 = inlined_call_operand.vmem [shape: f32[1,32], index: 10, kind: input, shape index: {}]
  %s11 = inlined_call_operand.vmem [shape: f32[1,32], index: 11, kind: input, shape index: {}]
  %s12 = inlined_call_operand.hbm [shape: bf16[32,64], index: 12, kind: input, shape index: {}]
  %s13 = inlined_call_operand.vmem [shape: f32[1,64], index: 13, kind: input, shape index: {}]
  %s14 = inlined_call_operand.vmem [shape: bf16[64,32], index: 14, kind: input, shape index: {}]
  %s15 = inlined_call_operand.vmem [shape: f32[1,32], index: 15, kind: input, shape index: {}]
  %s16 = inlined_call_operand.vmem [shape: f32[1,32], index: 16, kind: input, shape index: {}]
  %s17 = inlined_call_operand.vmem [shape: f32[1,32], index: 17, kind: input, shape index: {}]
  %s18 = inlined_call_operand.hbm [shape: f32[2,8,32], index: 18, kind: output, shape index: {0}]
  %s19 = inlined_call_operand.hbm [shape: f32[2,4,8,8], index: 19, kind: output, shape index: {1}]
  %20 = xla_tuple %s18, %s19
  %s21 = sld [smem:[#allocation0]]
  $region106: #{tpu_custom_call.1} parent=0
    _
  %s23 = ssub.s32 1, %s21
  %s24 = scalar_select 0, %s23, %s21
  $region1: #{tpu_custom_call.1} parent=0
    #allocation3 [shape = 'u8[8192]{0}', space=vmem, size = 0x2000, scoped, tag = 'input window, operand 4, single buffered']
    #allocation4 [shape = 's32[1]{0}', space=sflag, size = 0x4, scoped, tag = 'scoped memory for tpu_custom_call.1']
    #allocation5 [shape = 's32[1]{0}', space=sflag, size = 0x4, scoped, tag = 'scoped memory for tpu_custom_call.1']
    #allocation6 [shape = 'u8[8192]{0}', space=vmem, size = 0x2000, scoped, tag = 'input window, operand 6, single buffered']
    #allocation7 [shape = 's32[1]{0}', space=sflag, size = 0x4, scoped, tag = 'scoped memory for tpu_custom_call.1']
    #allocation8 [shape = 'u8[8192]{0}', space=vmem, size = 0x2000, scoped, tag = 'input window, operand 8, single buffered']
    #allocation9 [shape = 'u8[8192]{0}', space=vmem, size = 0x2000, scoped, tag = 'input window, operand 12, single buffered']
    #allocation10 [shape = 's32[1]{0}', space=sflag, size = 0x4, scoped, tag = 'scoped memory for tpu_custom_call.1']
    #allocation11 [shape = 'u8[8192]{0}', space=vmem, size = 0x2000, scoped, tag = 'output window, operand 0, single buffered']
    #allocation12 [shape = 'u8[32768]{0}', space=vmem, size = 0x8000, scoped, tag = 'output window, operand 1, single buffered']
    #allocation13 [shape = 's32[1]{0}', space=sflag, size = 0x4, scoped, tag = 'scoped memory for tpu_custom_call.1']
    %25 = vsyncpa [#allocation4], 0
    %26 = vsyncpa [#allocation7], 0
    %27 = vsyncpa [#allocation10], 0
    %28 = vsyncpa [#allocation5], 0
    %29 = vsyncpa [#allocation13], 0
    // Predicated region
    $region2: #{tpu_custom_call.1} parent=1 // pred_check
      _
    $region3: #{tpu_custom_call.1} parent=1 // pred_check_branch
      %31 = sbr.rel (0) target = $region5
    $region4: #{tpu_custom_call.1} parent=1 // pred_region
      _
    $region5: #{tpu_custom_call.1} parent=1 // pred_fallthru
      _
    // Predicated region
    $region6: #{tpu_custom_call.1} parent=1 // pred_check
      _
    $region7: #{tpu_custom_call.1} parent=1 // pred_check_branch
      %33 = sbr.rel (0) target = $region9
    $region8: #{tpu_custom_call.1} parent=1 // pred_region
      _
    $region9: #{tpu_custom_call.1} parent=1 // pred_fallthru
      _
    // Predicated region
    $region10: #{tpu_custom_call.1} parent=1 // pred_check
      _
    $region11: #{tpu_custom_call.1} parent=1 // pred_check_branch
      %35 = sbr.rel (0) target = $region13
    $region12: #{tpu_custom_call.1} parent=1 // pred_region
      _
    $region13: #{tpu_custom_call.1} parent=1 // pred_fallthru
      _
    // Predicated region
    $region14: #{tpu_custom_call.1} parent=1 // pred_check
      _
    $region15: #{tpu_custom_call.1} parent=1 // pred_check_branch
      %37 = sbr.rel (0) target = $region17
    $region16: #{tpu_custom_call.1} parent=1 // pred_region
      _
    $region17: #{tpu_custom_call.1} parent=1 // pred_fallthru
      _
    // Predicated region
    $region18: #{tpu_custom_call.1} parent=1 // pred_check
      _
    $region19: #{tpu_custom_call.1} parent=1 // pred_check_branch
      %39 = sbr.rel (0) target = $region21
    $region20: #{tpu_custom_call.1} parent=1 // pred_region
      %41 = vsyncadd [#allocation4], 0
      %s42 = sshll.u32 %s4, 4
      %s43 = int_to_ptr.hbm [resolvable:$true] %s42
      %s44 = sshll.u32 [#allocation3], 4
      %s45 = int_to_ptr.vmem [resolvable:$true] %s44
      %50 = dma.hbm_to_vmem [thread:$0]  %s43, 256, %s45, [#allocation4], 64, 64, 4
    $region21: #{tpu_custom_call.1} parent=1 // pred_fallthru
      _
    // Predicated region
    $region22: #{tpu_custom_call.1} parent=1 // pred_check
      _
    $region23: #{tpu_custom_call.1} parent=1 // pred_check_branch
      %52 = sbr.rel (0) target = $region25
    $region24: #{tpu_custom_call.1} parent=1 // pred_region
      _
    $region25: #{tpu_custom_call.1} parent=1 // pred_fallthru
      _
    // Predicated region
    $region26: #{tpu_custom_call.1} parent=1 // pred_check
      _
    $region27: #{tpu_custom_call.1} parent=1 // pred_check_branch
      %54 = sbr.rel (0) target = $region29
    $region28: #{tpu_custom_call.1} parent=1 // pred_region
      %56 = vsyncadd [#allocation7], 0
      %s57 = sshll.u32 %s6, 4
      %s58 = int_to_ptr.hbm [resolvable:$true] %s57
      %s59 = sshll.u32 [#allocation6], 4
      %s60 = int_to_ptr.vmem [resolvable:$true] %s59
      %65 = dma.hbm_to_vmem [thread:$0]  %s58, 256, %s60, [#allocation7], 64, 64, 4
    $region29: #{tpu_custom_call.1} parent=1 // pred_fallthru
      _
    // Predicated region
    $region30: #{tpu_custom_call.1} parent=1 // pred_check
      _
    $region31: #{tpu_custom_call.1} parent=1 // pred_check_branch
      %67 = sbr.rel (0) target = $region33
    $region32: #{tpu_custom_call.1} parent=1 // pred_region
      _
    $region33: #{tpu_custom_call.1} parent=1 // pred_fallthru
      _
    // Predicated region
    $region34: #{tpu_custom_call.1} parent=1 // pred_check
      _
    $region35: #{tpu_custom_call.1} parent=1 // pred_check_branch
      %69 = sbr.rel (0) target = $region37
    $region36: #{tpu_custom_call.1} parent=1 // pred_region
      %71 = vsyncadd [#allocation7], 0
      %s72 = sshll.u32 %s8, 4
      %s73 = int_to_ptr.hbm [resolvable:$true] %s72
      %s74 = sshll.u32 [#allocation8], 4
      %s75 = int_to_ptr.vmem [resolvable:$true] %s74
      %80 = dma.hbm_to_vmem [thread:$0]  %s73, 256, %s75, [#allocation7], 64, 64, 4
    $region37: #{tpu_custom_call.1} parent=1 // pred_fallthru
      _
    // Predicated region
    $region38: #{tpu_custom_call.1} parent=1 // pred_check
      _
    $region39: #{tpu_custom_call.1} parent=1 // pred_check_branch
      %82 = sbr.rel (0) target = $region41
    $region40: #{tpu_custom_call.1} parent=1 // pred_region
      _
    $region41: #{tpu_custom_call.1} parent=1 // pred_fallthru
      _
    // Predicated region
    $region42: #{tpu_custom_call.1} parent=1 // pred_check
      _
    $region43: #{tpu_custom_call.1} parent=1 // pred_check_branch
      %84 = sbr.rel (0) target = $region45
    $region44: #{tpu_custom_call.1} parent=1 // pred_region
      _
    $region45: #{tpu_custom_call.1} parent=1 // pred_fallthru
      _
    // Predicated region
    $region46: #{tpu_custom_call.1} parent=1 // pred_check
      _
    $region47: #{tpu_custom_call.1} parent=1 // pred_check_branch
      %86 = sbr.rel (0) target = $region49
    $region48: #{tpu_custom_call.1} parent=1 // pred_region
      _
    $region49: #{tpu_custom_call.1} parent=1 // pred_fallthru
      _
    // Predicated region
    $region50: #{tpu_custom_call.1} parent=1 // pred_check
      _
    $region51: #{tpu_custom_call.1} parent=1 // pred_check_branch
      %88 = sbr.rel (0) target = $region53
    $region52: #{tpu_custom_call.1} parent=1 // pred_region
      %90 = vsyncadd [#allocation10], 0
      %s91 = sshll.u32 %s12, 4
      %s92 = int_to_ptr.hbm [resolvable:$true] %s91
      %s93 = sshll.u32 [#allocation9], 4
      %s94 = int_to_ptr.vmem [resolvable:$true] %s93
      %99 = dma.hbm_to_vmem [thread:$0]  %s92, 256, %s94, [#allocation10], 64, 64, 4
    $region53: #{tpu_custom_call.1} parent=1 // pred_fallthru
      _
    // Predicated region
    $region54: #{tpu_custom_call.1} parent=1 // pred_check
      _
    $region55: #{tpu_custom_call.1} parent=1 // pred_check_branch
      %101 = sbr.rel (0) target = $region57
    $region56: #{tpu_custom_call.1} parent=1 // pred_region
      _
    $region57: #{tpu_custom_call.1} parent=1 // pred_fallthru
      _
    // Predicated region
    $region58: #{tpu_custom_call.1} parent=1 // pred_check
      _
    $region59: #{tpu_custom_call.1} parent=1 // pred_check_branch
      %103 = sbr.rel (0) target = $region61
    $region60: #{tpu_custom_call.1} parent=1 // pred_region
      _
    $region61: #{tpu_custom_call.1} parent=1 // pred_fallthru
      _
    // Predicated region
    $region62: #{tpu_custom_call.1} parent=1 // pred_check
      _
    $region63: #{tpu_custom_call.1} parent=1 // pred_check_branch
      %105 = sbr.rel (0) target = $region65
    $region64: #{tpu_custom_call.1} parent=1 // pred_region
      _
    $region65: #{tpu_custom_call.1} parent=1 // pred_fallthru
      _
    // Predicated region
    $region66: #{tpu_custom_call.1} parent=1 // pred_check
      _
    $region67: #{tpu_custom_call.1} parent=1 // pred_check_branch
      %107 = sbr.rel (0) target = $region69
    $region68: #{tpu_custom_call.1} parent=1 // pred_region
      _
    $region69: #{tpu_custom_call.1} parent=1 // pred_fallthru
      _
    // Predicated region
    $region70: #{tpu_custom_call.1} parent=1 // pred_check
      _
    $region71: #{tpu_custom_call.1} parent=1 // pred_check_branch
      %109 = sbr.rel (0) target = $region73
    $region72: #{tpu_custom_call.1} parent=1 // pred_region
      _
    $region73: #{tpu_custom_call.1} parent=1 // pred_fallthru
      _
    // Predicated region
    $region74: #{tpu_custom_call.1} parent=1 // pred_check
      _
    $region75: #{tpu_custom_call.1} parent=1 // pred_check_branch
      %111 = sbr.rel (0) target = $region77
    $region76: #{tpu_custom_call.1} parent=1 // pred_region
      %113 = dma.done [#allocation4], 256
    $region77: #{tpu_custom_call.1} parent=1 // pred_fallthru
      _
    // Predicated region
    $region78: #{tpu_custom_call.1} parent=1 // pred_check
      _
    $region79: #{tpu_custom_call.1} parent=1 // pred_check_branch
      %115 = sbr.rel (0) target = $region81
    $region80: #{tpu_custom_call.1} parent=1 // pred_region
      %117 = dma.done [#allocation7], 256
    $region81: #{tpu_custom_call.1} parent=1 // pred_fallthru
      _
    // Predicated region
    $region82: #{tpu_custom_call.1} parent=1 // pred_check
      _
    $region83: #{tpu_custom_call.1} parent=1 // pred_check_branch
      %119 = sbr.rel (0) target = $region85
    $region84: #{tpu_custom_call.1} parent=1 // pred_region
      %121 = dma.done [#allocation7], 256
    $region85: #{tpu_custom_call.1} parent=1 // pred_fallthru
      _
    // Predicated region
    $region86: #{tpu_custom_call.1} parent=1 // pred_check
      _
    $region87: #{tpu_custom_call.1} parent=1 // pred_check_branch
      %123 = sbr.rel (0) target = $region89
    $region88: #{tpu_custom_call.1} parent=1 // pred_region
      %125 = dma.done [#allocation10], 256
    $region89: #{tpu_custom_call.1} parent=1 // pred_fallthru
      _
    %v127 = vld [vmem:[%s0] sm:$0xff]
    %v128 = vld [vmem:[%s0 + $0x8] sm:$0xff]
    %v129 = vpack.c.bf16 %v128, %v127
    %v130 = vld [vmem:[%s2] sm:$0xf]
    %v131 = vld [vmem:[%s2 + $0x4] sm:$0xf]
    %v132 = vld [vmem:[%s2 + $0x8] sm:$0xf]
    %v133 = vld [vmem:[%s2 + $0xc] sm:$0xf]
    %v134 = vld [vmem:[%s3] sm:$0x1]
    %v136 = vperm.slane %v134, 0
    %v142 = vunpack.c.l.b16 %v130
    %v143 = vunpack.c.l.b16 %v131
    %v144 = vunpack.c.l.b16 %v132
    %v145 = vunpack.c.l.b16 %v133
    %v146 = vpack.c.b16 %v143, %v142
    %v147 = vpack.c.b16 %v145, %v144
    %vm150 = vcmask 261120
    %v152 = vsel %vm150, %v129, 0
    %154 = vmatpush.bf16.msra.mxu0 0
    %155 = vmatpush.bf16.msra.mxu0 0
    %156 = vmatpush.bf16.msra.mxu0 0
    %157 = vmatpush.bf16.msra.mxu0 0
    %158 = vmatpush.bf16.msra.mxu0 0
    %159 = vmatpush.bf16.msra.mxu0 0
    %160 = vmatpush.bf16.msra.mxu0 %v147
    %161 = vmatpush.bf16.msra.mxu0 %v146
    %162 = vmatmul.bf16.gmra.mxu0 %v152
    %v163 = vpop.f32.mrf.mxu0
    %v164 = vadd.f32 %v136, %v163
    %v165 = vpop.f32.mrf.mxu0
    %v166 = vadd.f32 %v136, %v165
    %167 = vdwg.mxu0
    %v168 = vpack.c.bf16 %v164, %v164
    %v169 = vpack.c.bf16 %v166, %v166
    %v170 = vld [vmem:[#allocation3] sm:$0xf]
    %v171 = vld [vmem:[#allocation3 + $0x4] sm:$0xf]
    %v172 = vld [vmem:[#allocation3 + $0x8] sm:$0xf]
    %v173 = vld [vmem:[#allocation3 + $0xc] sm:$0xf]
    %v174 = vld [vmem:[%s5] sm:$0x1]
    %v176 = vperm.slane %v174, 0
    %v182 = vunpack.c.l.b16 %v170
    %v183 = vunpack.c.l.b16 %v171
    %v184 = vunpack.c.l.b16 %v172
    %v185 = vunpack.c.l.b16 %v173
    %v186 = vpack.c.b16 %v183, %v182
    %v187 = vpack.c.b16 %v185, %v184
    %190 = vmatpush.bf16.msra.mxu0 0
    %191 = vmatpush.bf16.msra.mxu0 0
    %192 = vmatpush.bf16.msra.mxu0 0
    %193 = vmatpush.bf16.msra.mxu0 0
    %194 = vmatpush.bf16.msra.mxu0 0
    %195 = vmatpush.bf16.msra.mxu0 0
    %196 = vmatpush.bf16.msra.mxu0 %v187
    %197 = vmatpush.bf16.msra.mxu0 %v186
    %198 = vmatmul.bf16.gmra.mxu0 %v152
    %v199 = vpop.f32.mrf.mxu0
    %v200 = vadd.f32 %v176, %v199
    %v201 = vpop.f32.mrf.mxu0
    %v202 = vadd.f32 %v176, %v201
    %203 = vdwg.mxu0
    %v204 = vpack.c.bf16 %v200, %v200
    %v205 = vpack.c.bf16 %v202, %v202
    %v206 = vld [vmem:[#allocation6] sm:$0xf]
    %v207 = vld [vmem:[#allocation6 + $0x4] sm:$0xf]
    %v208 = vld [vmem:[#allocation6 + $0x8] sm:$0xf]
    %v209 = vld [vmem:[#allocation6 + $0xc] sm:$0xf]
    %v210 = vld [vmem:[%s7] sm:$0x1]
    %v212 = vperm.slane %v210, 0
    %v218 = vunpack.c.l.b16 %v206
    %v219 = vunpack.c.l.b16 %v207
    %v220 = vunpack.c.l.b16 %v208
    %v221 = vunpack.c.l.b16 %v209
    %v222 = vpack.c.b16 %v219, %v218
    %v223 = vpack.c.b16 %v221, %v220
    %226 = vmatpush.bf16.msra.mxu0 0
    %227 = vmatpush.bf16.msra.mxu0 0
    %228 = vmatpush.bf16.msra.mxu0 0
    %229 = vmatpush.bf16.msra.mxu0 0
    %230 = vmatpush.bf16.msra.mxu0 0
    %231 = vmatpush.bf16.msra.mxu0 0
    %232 = vmatpush.bf16.msra.mxu0 %v223
    %233 = vmatpush.bf16.msra.mxu0 %v222
    %234 = vmatmul.bf16.gmra.mxu0 %v152
    %v235 = vpop.f32.mrf.mxu0
    %v236 = vadd.f32 %v212, %v235
    %v237 = vpop.f32.mrf.mxu0
    %v238 = vadd.f32 %v212, %v237
    %239 = vdwg.mxu0
    %v240 = vpack.c.bf16 %v236, %v236
    %v241 = vpack.c.bf16 %v238, %v238
    %243 = vrot.lane.b32.xlu0 %v168, 120
    %v244 = vpop.permute.xlu0 %243
    %245 = vrot.lane.b32.xlu0 %v168, 112
    %v246 = vpop.permute.xlu0 %245
    %247 = vrot.lane.b32.xlu0 %v168, 104
    %v248 = vpop.permute.xlu0 %247
    %v251 = vpack.i.b16 %v244, %v168
    %v252 = vshrl.u32 %v168, 16
    %v253 = vshrl.u32 %v244, 16
    %v254 = vpack.i.b16 %v253, %v252
    %v257 = vpack.i.b16 %v248, %v246
    %v258 = vshrl.u32 %v246, 16
    %v259 = vshrl.u32 %v248, 16
    %v260 = vpack.i.b16 %v259, %v258
    %v263 = vunpack.c.l.s4 1983009808
    %v264 = vunpack.c.0.s8 %v263
    %v265 = vperm.slane %v251, %v264
    %v268 = vunpack.c.l.s4 1983009808
    %v269 = vunpack.c.0.s8 %v268
    %v270 = vperm.slane %v257, %v269
    %v271 = vrot.slane %v270, 4
    %vm272 = vcmask 1047556
    %v273 = vsel %vm272, %v271, %v265
    %v274 = vrot.slane %v265, 4
    %v275 = vsel %vm272, %v270, %v274
    %v277 = vunpack.c.l.s4 1934713408
    %v278 = vunpack.c.0.s8 %v277
    %v279 = vperm.slane %v273, %v278
    %v281 = vunpack.c.l.s4 1934713408
    %v282 = vunpack.c.0.s8 %v281
    %v283 = vperm.slane %v275, %v282
    %v284 = vrot.slane %v279, 4
    %v285 = vsel %vm272, 0, %v284
    %v286 = vrot.slane %v283, 4
    %v287 = vsel %vm272, 0, %v286
    %v290 = vunpack.c.l.s4 1983009808
    %v291 = vunpack.c.0.s8 %v290
    %v292 = vperm.slane %v254, %v291
    %v295 = vunpack.c.l.s4 1983009808
    %v296 = vunpack.c.0.s8 %v295
    %v297 = vperm.slane %v260, %v296
    %v298 = vrot.slane %v297, 4
    %v299 = vsel %vm272, %v298, %v292
    %v300 = vrot.slane %v292, 4
    %v301 = vsel %vm272, %v297, %v300
    %v303 = vunpack.c.l.s4 1934713408
    %v304 = vunpack.c.0.s8 %v303
    %v305 = vperm.slane %v299, %v304
    %v307 = vunpack.c.l.s4 1934713408
    %v308 = vunpack.c.0.s8 %v307
    %v309 = vperm.slane %v301, %v308
    %v310 = vrot.slane %v305, 4
    %v311 = vsel %vm272, 0, %v310
    %v312 = vrot.slane %v309, 4
    %v313 = vsel %vm272, 0, %v312
    %v314 = vsel %vm272, %v286, %v279
    %v316 = vunpack.c.l.s4 1983009808
    %v317 = vunpack.c.0.s8 %v316
    %v318 = vperm.slane %v314, %v317
    %v319 = vrot.slane %v287, 4
    %v320 = vsel %vm272, %v319, %v285
    %v322 = vunpack.c.l.s4 1983009808
    %v323 = vunpack.c.0.s8 %v322
    %v324 = vperm.slane %v320, %v323
    %v325 = vrot.slane %v324, 4
    %v326 = vsel %vm272, %v325, %v318
    %v328 = vunpack.c.l.s4 1934713408
    %v329 = vunpack.c.0.s8 %v328
    %v330 = vperm.slane %v326, %v329
    %v331 = vrot.slane %v330, 4
    %v332 = vsel %vm272, 0, %v331
    %v333 = vsel %vm272, %v312, %v305
    %v335 = vunpack.c.l.s4 1983009808
    %v336 = vunpack.c.0.s8 %v335
    %v337 = vperm.slane %v333, %v336
    %v338 = vrot.slane %v313, 4
    %v339 = vsel %vm272, %v338, %v311
    %v341 = vunpack.c.l.s4 1983009808
    %v342 = vunpack.c.0.s8 %v341
    %v343 = vperm.slane %v339, %v342
    %v344 = vrot.slane %v343, 4
    %v345 = vsel %vm272, %v344, %v337
    %v347 = vunpack.c.l.s4 1934713408
    %v348 = vunpack.c.0.s8 %v347
    %v349 = vperm.slane %v345, %v348
    %v350 = vrot.slane %v349, 4
    %v351 = vsel %vm272, 0, %v350
    %v354 = vpack.i.b16 %v349, %v330
    %v355 = vshrl.u32 %v330, 16
    %v356 = vshrl.u32 %v349, 16
    %v357 = vpack.i.b16 %v356, %v355
    %v360 = vpack.i.b16 %v351, %v332
    %v361 = vshrl.u32 %v332, 16
    %v362 = vshrl.u32 %v351, 16
    %v363 = vpack.i.b16 %v362, %v361
    %365 = vrot.lane.b32.xlu0 %v204, 120
    %v366 = vpop.permute.xlu0 %365
    %367 = vrot.lane.b32.xlu0 %v204, 112
    %v368 = vpop.permute.xlu0 %367
    %369 = vrot.lane.b32.xlu0 %v204, 104
    %v370 = vpop.permute.xlu0 %369
    %v373 = vpack.i.b16 %v366, %v204
    %v374 = vshrl.u32 %v204, 16
    %v375 = vshrl.u32 %v366, 16
    %v376 = vpack.i.b16 %v375, %v374
    %v379 = vpack.i.b16 %v370, %v368
    %v380 = vshrl.u32 %v368, 16
    %v381 = vshrl.u32 %v370, 16
    %v382 = vpack.i.b16 %v381, %v380
    %v385 = vunpack.c.l.s4 1983009808
    %v386 = vunpack.c.0.s8 %v385
    %v387 = vperm.slane %v373, %v386
    %v390 = vunpack.c.l.s4 1983009808
    %v391 = vunpack.c.0.s8 %v390
    %v392 = vperm.slane %v379, %v391
    %v393 = vrot.slane %v392, 4
    %v394 = vsel %vm272, %v393, %v387
    %v395 = vrot.slane %v387, 4
    %v396 = vsel %vm272, %v392, %v395
    %v398 = vunpack.c.l.s4 1934713408
    %v399 = vunpack.c.0.s8 %v398
    %v400 = vperm.slane %v394, %v399
    %v402 = vunpack.c.l.s4 1934713408
    %v403 = vunpack.c.0.s8 %v402
    %v404 = vperm.slane %v396, %v403
    %v405 = vrot.slane %v400, 4
    %v406 = vsel %vm272, 0, %v405
    %v407 = vrot.slane %v404, 4
    %v408 = vsel %vm272, 0, %v407
    %v411 = vunpack.c.l.s4 1983009808
    %v412 = vunpack.c.0.s8 %v411
    %v413 = vperm.slane %v376, %v412
    %v416 = vunpack.c.l.s4 1983009808
    %v417 = vunpack.c.0.s8 %v416
    %v418 = vperm.slane %v382, %v417
    %v419 = vrot.slane %v418, 4
    %v420 = vsel %vm272, %v419, %v413
    %v421 = vrot.slane %v413, 4
    %v422 = vsel %vm272, %v418, %v421
    %v424 = vunpack.c.l.s4 1934713408
    %v425 = vunpack.c.0.s8 %v424
    %v426 = vperm.slane %v420, %v425
    %v428 = vunpack.c.l.s4 1934713408
    %v429 = vunpack.c.0.s8 %v428
    %v430 = vperm.slane %v422, %v429
    %v431 = vrot.slane %v426, 4
    %v432 = vsel %vm272, 0, %v431
    %v433 = vrot.slane %v430, 4
    %v434 = vsel %vm272, 0, %v433
    %v435 = vsel %vm272, %v407, %v400
    %v437 = vunpack.c.l.s4 1983009808
    %v438 = vunpack.c.0.s8 %v437
    %v439 = vperm.slane %v435, %v438
    %v440 = vrot.slane %v408, 4
    %v441 = vsel %vm272, %v440, %v406
    %v443 = vunpack.c.l.s4 1983009808
    %v444 = vunpack.c.0.s8 %v443
    %v445 = vperm.slane %v441, %v444
    %v446 = vrot.slane %v445, 4
    %v447 = vsel %vm272, %v446, %v439
    %v449 = vunpack.c.l.s4 1934713408
    %v450 = vunpack.c.0.s8 %v449
    %v451 = vperm.slane %v447, %v450
    %v452 = vrot.slane %v451, 4
    %v453 = vsel %vm272, 0, %v452
    %v454 = vsel %vm272, %v433, %v426
    %v456 = vunpack.c.l.s4 1983009808
    %v457 = vunpack.c.0.s8 %v456
    %v458 = vperm.slane %v454, %v457
    %v459 = vrot.slane %v434, 4
    %v460 = vsel %vm272, %v459, %v432
    %v462 = vunpack.c.l.s4 1983009808
    %v463 = vunpack.c.0.s8 %v462
    %v464 = vperm.slane %v460, %v463
    %v465 = vrot.slane %v464, 4
    %v466 = vsel %vm272, %v465, %v458
    %v468 = vunpack.c.l.s4 1934713408
    %v469 = vunpack.c.0.s8 %v468
    %v470 = vperm.slane %v466, %v469
    %v471 = vrot.slane %v470, 4
    %v472 = vsel %vm272, 0, %v471
    %v475 = vpack.i.b16 %v470, %v451
    %v476 = vshrl.u32 %v451, 16
    %v477 = vshrl.u32 %v470, 16
    %v478 = vpack.i.b16 %v477, %v476
    %v481 = vpack.i.b16 %v472, %v453
    %v482 = vshrl.u32 %v453, 16
    %v483 = vshrl.u32 %v472, 16
    %v484 = vpack.i.b16 %v483, %v482
    %486 = vrot.lane.b32.xlu0 %v240, 120
    %v487 = vpop.permute.xlu0 %486
    %488 = vrot.lane.b32.xlu0 %v240, 112
    %v489 = vpop.permute.xlu0 %488
    %490 = vrot.lane.b32.xlu0 %v240, 104
    %v491 = vpop.permute.xlu0 %490
    %v494 = vpack.i.b16 %v487, %v240
    %v495 = vshrl.u32 %v240, 16
    %v496 = vshrl.u32 %v487, 16
    %v497 = vpack.i.b16 %v496, %v495
    %v500 = vpack.i.b16 %v491, %v489
    %v501 = vshrl.u32 %v489, 16
    %v502 = vshrl.u32 %v491, 16
    %v503 = vpack.i.b16 %v502, %v501
    %v506 = vunpack.c.l.s4 1983009808
    %v507 = vunpack.c.0.s8 %v506
    %v508 = vperm.slane %v494, %v507
    %v511 = vunpack.c.l.s4 1983009808
    %v512 = vunpack.c.0.s8 %v511
    %v513 = vperm.slane %v500, %v512
    %v514 = vrot.slane %v513, 4
    %v515 = vsel %vm272, %v514, %v508
    %v516 = vrot.slane %v508, 4
    %v517 = vsel %vm272, %v513, %v516
    %v519 = vunpack.c.l.s4 1934713408
    %v520 = vunpack.c.0.s8 %v519
    %v521 = vperm.slane %v515, %v520
    %v523 = vunpack.c.l.s4 1934713408
    %v524 = vunpack.c.0.s8 %v523
    %v525 = vperm.slane %v517, %v524
    %v526 = vrot.slane %v521, 4
    %v527 = vsel %vm272, 0, %v526
    %v528 = vrot.slane %v525, 4
    %v529 = vsel %vm272, 0, %v528
    %v532 = vunpack.c.l.s4 1983009808
    %v533 = vunpack.c.0.s8 %v532
    %v534 = vperm.slane %v497, %v533
    %v537 = vunpack.c.l.s4 1983009808
    %v538 = vunpack.c.0.s8 %v537
    %v539 = vperm.slane %v503, %v538
    %v540 = vrot.slane %v539, 4
    %v541 = vsel %vm272, %v540, %v534
    %v542 = vrot.slane %v534, 4
    %v543 = vsel %vm272, %v539, %v542
    %v545 = vunpack.c.l.s4 1934713408
    %v546 = vunpack.c.0.s8 %v545
    %v547 = vperm.slane %v541, %v546
    %v549 = vunpack.c.l.s4 1934713408
    %v550 = vunpack.c.0.s8 %v549
    %v551 = vperm.slane %v543, %v550
    %v552 = vrot.slane %v547, 4
    %v553 = vsel %vm272, 0, %v552
    %v554 = vrot.slane %v551, 4
    %v555 = vsel %vm272, 0, %v554
    %v556 = vsel %vm272, %v528, %v521
    %v558 = vunpack.c.l.s4 1983009808
    %v559 = vunpack.c.0.s8 %v558
    %v560 = vperm.slane %v556, %v559
    %v561 = vrot.slane %v529, 4
    %v562 = vsel %vm272, %v561, %v527
    %v564 = vunpack.c.l.s4 1983009808
    %v565 = vunpack.c.0.s8 %v564
    %v566 = vperm.slane %v562, %v565
    %v567 = vrot.slane %v566, 4
    %v568 = vsel %vm272, %v567, %v560
    %v570 = vunpack.c.l.s4 1934713408
    %v571 = vunpack.c.0.s8 %v570
    %v572 = vperm.slane %v568, %v571
    %v573 = vrot.slane %v572, 4
    %v574 = vsel %vm272, 0, %v573
    %v575 = vsel %vm272, %v554, %v547
    %v577 = vunpack.c.l.s4 1983009808
    %v578 = vunpack.c.0.s8 %v577
    %v579 = vperm.slane %v575, %v578
    %v580 = vrot.slane %v555, 4
    %v581 = vsel %vm272, %v580, %v553
    %v583 = vunpack.c.l.s4 1983009808
    %v584 = vunpack.c.0.s8 %v583
    %v585 = vperm.slane %v581, %v584
    %v586 = vrot.slane %v585, 4
    %v587 = vsel %vm272, %v586, %v579
    %v589 = vunpack.c.l.s4 1934713408
    %v590 = vunpack.c.0.s8 %v589
    %v591 = vperm.slane %v587, %v590
    %v592 = vrot.slane %v591, 4
    %v593 = vsel %vm272, 0, %v592
    %v596 = vpack.i.b16 %v591, %v572
    %v597 = vshrl.u32 %v572, 16
    %v598 = vshrl.u32 %v591, 16
    %v599 = vpack.i.b16 %v598, %v597
    %v602 = vpack.i.b16 %v593, %v574
    %v603 = vshrl.u32 %v574, 16
    %v604 = vshrl.u32 %v593, 16
    %v605 = vpack.i.b16 %v604, %v603
    %v606 = vld [vmem:[%s1] sm:$0xff]
    %vm607 = vcmask 64512
    %v609 = vsel %vm607, %v354, 0
    %v612 = vsel %vm607, %v475, 0
    %614 = vmatpush.bf16.xpose.msra.mxu0 0
    %615 = vmatpush.bf16.xpose.msra.mxu0 0
    %616 = vmatpush.bf16.xpose.msra.mxu0 0
    %617 = vmatpush.bf16.xpose.msra.mxu0 0
    %618 = vmatpush.bf16.xpose.msra.mxu0 0
    %619 = vmatpush.bf16.xpose.msra.mxu0 0
    %620 = vmatpush.bf16.xpose.msra.mxu0 0
    %621 = vmatpush.bf16.xpose.msra.mxu0 %v612
    %622 = vmatmul.bf16.gmra.mxu0 %v609
    %v623 = vpop.f32.mrf.mxu0
    %v624 = vadd.f32 %v606, %v623
    %v625 = vpop.f32.mrf.mxu0
    %626 = vdwg.mxu0
    %v628 = vsel %vm607, %v357, 0
    %v631 = vsel %vm607, %v478, 0
    %633 = vmatpush.bf16.xpose.msra.mxu0 0
    %634 = vmatpush.bf16.xpose.msra.mxu0 0
    %635 = vmatpush.bf16.xpose.msra.mxu0 0
    %636 = vmatpush.bf16.xpose.msra.mxu0 0
    %637 = vmatpush.bf16.xpose.msra.mxu0 0
    %638 = vmatpush.bf16.xpose.msra.mxu0 0
    %639 = vmatpush.bf16.xpose.msra.mxu0 0
    %640 = vmatpush.bf16.xpose.msra.mxu0 %v631
    %641 = vmatmul.bf16.gmra.mxu0 %v628
    %v642 = vpop.f32.mrf.mxu0
    %v643 = vadd.f32 %v606, %v642
    %v644 = vpop.f32.mrf.mxu0
    %645 = vdwg.mxu0
    %v647 = vsel %vm607, %v360, 0
    %v650 = vsel %vm607, %v481, 0
    %652 = vmatpush.bf16.xpose.msra.mxu0 0
    %653 = vmatpush.bf16.xpose.msra.mxu0 0
    %654 = vmatpush.bf16.xpose.msra.mxu0 0
    %655 = vmatpush.bf16.xpose.msra.mxu0 0
    %656 = vmatpush.bf16.xpose.msra.mxu0 0
    %657 = vmatpush.bf16.xpose.msra.mxu0 0
    %658 = vmatpush.bf16.xpose.msra.mxu0 0
    %659 = vmatpush.bf16.xpose.msra.mxu0 %v650
    %660 = vmatmul.bf16.gmra.mxu0 %v647
    %v661 = vpop.f32.mrf.mxu0
    %v662 = vadd.f32 %v606, %v661
    %v663 = vpop.f32.mrf.mxu0
    %664 = vdwg.mxu0
    %v666 = vsel %vm607, %v363, 0
    %v669 = vsel %vm607, %v484, 0
    %671 = vmatpush.bf16.xpose.msra.mxu0 0
    %672 = vmatpush.bf16.xpose.msra.mxu0 0
    %673 = vmatpush.bf16.xpose.msra.mxu0 0
    %674 = vmatpush.bf16.xpose.msra.mxu0 0
    %675 = vmatpush.bf16.xpose.msra.mxu0 0
    %676 = vmatpush.bf16.xpose.msra.mxu0 0
    %677 = vmatpush.bf16.xpose.msra.mxu0 0
    %678 = vmatpush.bf16.xpose.msra.mxu0 %v669
    %679 = vmatmul.bf16.gmra.mxu0 %v666
    %v680 = vpop.f32.mrf.mxu0
    %v681 = vadd.f32 %v606, %v680
    %v682 = vpop.f32.mrf.mxu0
    %683 = vdwg.mxu0
    %v684 = vsel %vm607, %v624, -inf
    %685 = vmax.xlane.f32.xlu0 %v684
    %v686 = vpop.xlane.xlu0 %685
    %v687 = vsel %vm607, %v643, -inf
    %688 = vmax.xlane.f32.xlu0 %v687
    %v689 = vpop.xlane.xlu0 %688
    %v690 = vsel %vm607, %v662, -inf
    %691 = vmax.xlane.f32.xlu0 %v690
    %v692 = vpop.xlane.xlu0 %691
    %v693 = vsel %vm607, %v681, -inf
    %694 = vmax.xlane.f32.xlu0 %v693
    %v695 = vpop.xlane.xlu0 %694
    %v696 = vsub.f32 %v624, %v686
    %v697 = vsub.f32 %v643, %v689
    %v698 = vsub.f32 %v662, %v692
    %v699 = vsub.f32 %v681, %v695
    %v700 = vmul.f32 %v696, 1.442695
    %v701 = vpow.pop %v700
    %v702 = vmul.f32 %v697, 1.442695
    %v703 = vpow.pop %v702
    %v704 = vmul.f32 %v698, 1.442695
    %v705 = vpow.pop %v704
    %v706 = vmul.f32 %v699, 1.442695
    %v707 = vpow.pop %v706
    %v708 = vsel %vm607, %v701, 0.0
    %709 = vadd.xlane.f32.xlu0 %v708
    %v710 = vpop.xlane.xlu0 %709
    %v711 = vsel %vm607, %v703, 0.0
    %712 = vadd.xlane.f32.xlu0 %v711
    %v713 = vpop.xlane.xlu0 %712
    %v714 = vsel %vm607, %v705, 0.0
    %715 = vadd.xlane.f32.xlu0 %v714
    %v716 = vpop.xlane.xlu0 %715
    %v717 = vsel %vm607, %v707, 0.0
    %718 = vadd.xlane.f32.xlu0 %v717
    %v719 = vpop.xlane.xlu0 %718
    %v720 = vrcp.pop %v710
    %v721 = vrcp.pop %v713
    %v722 = vrcp.pop %v716
    %v723 = vrcp.pop %v719
    %v724 = vmul.f32 %v701, %v720
    %v725 = vmul.f32 %v703, %v721
    %v726 = vmul.f32 %v705, %v722
    %v727 = vmul.f32 %v707, %v723
    %728 = vst.msk [vmem:[#allocation12] sm:$0xff] %vm607, %v724
    %729 = vst.msk [vmem:[#allocation12 + $0x8] sm:$0xff] %vm607, %v725
    %730 = vst.msk [vmem:[#allocation12 + $0x10] sm:$0xff] %vm607, %v726
    %731 = vst.msk [vmem:[#allocation12 + $0x18] sm:$0xff] %vm607, %v727
    %v732 = vpack.c.bf16 %v724, %v724
    %v733 = vpack.c.bf16 %v725, %v725
    %v734 = vpack.c.bf16 %v726, %v726
    %v735 = vpack.c.bf16 %v727, %v727
    %v737 = vsel %vm607, %v732, 0
    %vm739 = vcmask 1043456
    %v741 = vsel %vm739, %v596, 0
    %743 = vmatpush.bf16.msra.mxu0 0
    %744 = vmatpush.bf16.msra.mxu0 0
    %745 = vmatpush.bf16.msra.mxu0 0
    %746 = vmatpush.bf16.msra.mxu0 0
    %747 = vmatpush.bf16.msra.mxu0 0
    %748 = vmatpush.bf16.msra.mxu0 0
    %749 = vmatpush.bf16.msra.mxu0 0
    %750 = vmatpush.bf16.msra.mxu0 %v741
    %751 = vmatmul.bf16.gmra.mxu0 %v737
    %v752 = vpop.f32.mrf.mxu0
    %v753 = vadd.f32 0.0, %v752
    %v754 = vpop.f32.mrf.mxu0
    %755 = vdwg.mxu0
    %v757 = vsel %vm607, %v733, 0
    %v760 = vsel %vm739, %v599, 0
    %762 = vmatpush.bf16.msra.mxu0 0
    %763 = vmatpush.bf16.msra.mxu0 0
    %764 = vmatpush.bf16.msra.mxu0 0
    %765 = vmatpush.bf16.msra.mxu0 0
    %766 = vmatpush.bf16.msra.mxu0 0
    %767 = vmatpush.bf16.msra.mxu0 0
    %768 = vmatpush.bf16.msra.mxu0 0
    %769 = vmatpush.bf16.msra.mxu0 %v760
    %770 = vmatmul.bf16.gmra.mxu0 %v757
    %v771 = vpop.f32.mrf.mxu0
    %v772 = vadd.f32 0.0, %v771
    %v773 = vpop.f32.mrf.mxu0
    %774 = vdwg.mxu0
    %v776 = vsel %vm607, %v734, 0
    %v779 = vsel %vm739, %v602, 0
    %781 = vmatpush.bf16.msra.mxu0 0
    %782 = vmatpush.bf16.msra.mxu0 0
    %783 = vmatpush.bf16.msra.mxu0 0
    %784 = vmatpush.bf16.msra.mxu0 0
    %785 = vmatpush.bf16.msra.mxu0 0
    %786 = vmatpush.bf16.msra.mxu0 0
    %787 = vmatpush.bf16.msra.mxu0 0
    %788 = vmatpush.bf16.msra.mxu0 %v779
    %789 = vmatmul.bf16.gmra.mxu0 %v776
    %v790 = vpop.f32.mrf.mxu0
    %v791 = vadd.f32 0.0, %v790
    %v792 = vpop.f32.mrf.mxu0
    %793 = vdwg.mxu0
    %v795 = vsel %vm607, %v735, 0
    %v798 = vsel %vm739, %v605, 0
    %800 = vmatpush.bf16.msra.mxu0 0
    %801 = vmatpush.bf16.msra.mxu0 0
    %802 = vmatpush.bf16.msra.mxu0 0
    %803 = vmatpush.bf16.msra.mxu0 0
    %804 = vmatpush.bf16.msra.mxu0 0
    %805 = vmatpush.bf16.msra.mxu0 0
    %806 = vmatpush.bf16.msra.mxu0 0
    %807 = vmatpush.bf16.msra.mxu0 %v798
    %808 = vmatmul.bf16.gmra.mxu0 %v795
    %v809 = vpop.f32.mrf.mxu0
    %v810 = vadd.f32 0.0, %v809
    %v811 = vpop.f32.mrf.mxu0
    %812 = vdwg.mxu0
    %v813 = vpack.c.bf16 %v753, %v753
    %v814 = vpack.c.bf16 %v772, %v772
    %v815 = vpack.c.bf16 %v791, %v791
    %v816 = vpack.c.bf16 %v810, %v810
    %v819 = vpack.i.b16 %v814, %v813
    %v820 = vshrl.u32 %v813, 16
    %v821 = vshrl.u32 %v814, 16
    %v822 = vpack.i.b16 %v821, %v820
    %v825 = vpack.i.b16 %v816, %v815
    %v826 = vshrl.u32 %v815, 16
    %v827 = vshrl.u32 %v816, 16
    %v828 = vpack.i.b16 %v827, %v826
    %v831 = vunpack.c.l.s4 1983009808
    %v832 = vunpack.c.0.s8 %v831
    %v833 = vperm.slane %v819, %v832
    %v836 = vunpack.c.l.s4 1983009808
    %v837 = vunpack.c.0.s8 %v836
    %v838 = vperm.slane %v825, %v837
    %v839 = vrot.slane %v838, 4
    %v840 = vsel %vm272, %v839, %v833
    %v841 = vrot.slane %v833, 4
    %v842 = vsel %vm272, %v838, %v841
    %v844 = vunpack.c.l.s4 1934713408
    %v845 = vunpack.c.0.s8 %v844
    %v846 = vperm.slane %v840, %v845
    %v848 = vunpack.c.l.s4 1934713408
    %v849 = vunpack.c.0.s8 %v848
    %v850 = vperm.slane %v842, %v849
    %v851 = vrot.slane %v846, 4
    %v852 = vsel %vm272, 0, %v851
    %v853 = vrot.slane %v850, 4
    %v854 = vsel %vm272, 0, %v853
    %v857 = vunpack.c.l.s4 1983009808
    %v858 = vunpack.c.0.s8 %v857
    %v859 = vperm.slane %v822, %v858
    %v862 = vunpack.c.l.s4 1983009808
    %v863 = vunpack.c.0.s8 %v862
    %v864 = vperm.slane %v828, %v863
    %v865 = vrot.slane %v864, 4
    %v866 = vsel %vm272, %v865, %v859
    %v867 = vrot.slane %v859, 4
    %v868 = vsel %vm272, %v864, %v867
    %v870 = vunpack.c.l.s4 1934713408
    %v871 = vunpack.c.0.s8 %v870
    %v872 = vperm.slane %v866, %v871
    %v874 = vunpack.c.l.s4 1934713408
    %v875 = vunpack.c.0.s8 %v874
    %v876 = vperm.slane %v868, %v875
    %v877 = vrot.slane %v872, 4
    %v878 = vsel %vm272, 0, %v877
    %v879 = vrot.slane %v876, 4
    %v880 = vsel %vm272, 0, %v879
    %v881 = vsel %vm272, %v853, %v846
    %v883 = vunpack.c.l.s4 1983009808
    %v884 = vunpack.c.0.s8 %v883
    %v885 = vperm.slane %v881, %v884
    %v886 = vrot.slane %v854, 4
    %v887 = vsel %vm272, %v886, %v852
    %v889 = vunpack.c.l.s4 1983009808
    %v890 = vunpack.c.0.s8 %v889
    %v891 = vperm.slane %v887, %v890
    %v892 = vrot.slane %v891, 4
    %v893 = vsel %vm272, %v892, %v885
    %v895 = vunpack.c.l.s4 1934713408
    %v896 = vunpack.c.0.s8 %v895
    %v897 = vperm.slane %v893, %v896
    %v898 = vrot.slane %v897, 4
    %v899 = vsel %vm272, 0, %v898
    %v900 = vsel %vm272, %v879, %v872
    %v902 = vunpack.c.l.s4 1983009808
    %v903 = vunpack.c.0.s8 %v902
    %v904 = vperm.slane %v900, %v903
    %v905 = vrot.slane %v880, 4
    %v906 = vsel %vm272, %v905, %v878
    %v908 = vunpack.c.l.s4 1983009808
    %v909 = vunpack.c.0.s8 %v908
    %v910 = vperm.slane %v906, %v909
    %v911 = vrot.slane %v910, 4
    %v912 = vsel %vm272, %v911, %v904
    %v914 = vunpack.c.l.s4 1934713408
    %v915 = vunpack.c.0.s8 %v914
    %v916 = vperm.slane %v912, %v915
    %v917 = vrot.slane %v916, 4
    %v918 = vsel %vm272, 0, %v917
    %v921 = vpack.i.b16 %v916, %v897
    %v922 = vshrl.u32 %v897, 16
    %v923 = vshrl.u32 %v916, 16
    %v924 = vpack.i.b16 %v923, %v922
    %v927 = vpack.i.b16 %v918, %v899
    %v928 = vshrl.u32 %v899, 16
    %v929 = vshrl.u32 %v918, 16
    %v930 = vpack.i.b16 %v929, %v928
    %v931 = vunpack.c.l.b16 %v924
    %v932 = vpack.c.b16 %v931, %v931
    %933 = vrot.lane.b32.xlu0 %v932, 8
    %v934 = vpop.permute.xlu0 %933
    %v935 = vunpack.c.l.b16 %v927
    %v936 = vpack.c.b16 %v935, %v935
    %937 = vrot.lane.b32.xlu0 %v936, 16
    %v938 = vpop.permute.xlu0 %937
    %v939 = vunpack.c.l.b16 %v930
    %v940 = vpack.c.b16 %v939, %v939
    %941 = vrot.lane.b32.xlu0 %v940, 24
    %v942 = vpop.permute.xlu0 %941
    %v945 = vsel %vm607, %v921, %v934
    %vm946 = vcmask 130048
    %v948 = vsel %vm946, %v945, %v938
    %vm949 = vcmask 195584
    %v951 = vsel %vm949, %v948, %v942
    %vm953 = vcmask 257024
    %954 = vst.msk [vmem:[#allocation2] sm:$0xf] %vm953, %v951
    %956 = vrot.lane.b32.xlu0 %v169, 120
    %v957 = vpop.permute.xlu0 %956
    %958 = vrot.lane.b32.xlu0 %v169, 112
    %v959 = vpop.permute.xlu0 %958
    %960 = vrot.lane.b32.xlu0 %v169, 104
    %v961 = vpop.permute.xlu0 %960
    %v964 = vpack.i.b16 %v957, %v169
    %v965 = vshrl.u32 %v169, 16
    %v966 = vshrl.u32 %v957, 16
    %v967 = vpack.i.b16 %v966, %v965
    %v970 = vpack.i.b16 %v961, %v959
    %v971 = vshrl.u32 %v959, 16
    %v972 = vshrl.u32 %v961, 16
    %v973 = vpack.i.b16 %v972, %v971
    %v976 = vunpack.c.l.s4 1983009808
    %v977 = vunpack.c.0.s8 %v976
    %v978 = vperm.slane %v964, %v977
    %v981 = vunpack.c.l.s4 1983009808
    %v982 = vunpack.c.0.s8 %v981
    %v983 = vperm.slane %v970, %v982
    %v984 = vrot.slane %v983, 4
    %v985 = vsel %vm272, %v984, %v978
    %v986 = vrot.slane %v978, 4
    %v987 = vsel %vm272, %v983, %v986
    %v989 = vunpack.c.l.s4 1934713408
    %v990 = vunpack.c.0.s8 %v989
    %v991 = vperm.slane %v985, %v990
    %v993 = vunpack.c.l.s4 1934713408
    %v994 = vunpack.c.0.s8 %v993
    %v995 = vperm.slane %v987, %v994
    %v996 = vrot.slane %v991, 4
    %v997 = vsel %vm272, 0, %v996
    %v998 = vrot.slane %v995, 4
    %v999 = vsel %vm272, 0, %v998
    %v1002 = vunpack.c.l.s4 1983009808
    %v1003 = vunpack.c.0.s8 %v1002
    %v1004 = vperm.slane %v967, %v1003
    %v1007 = vunpack.c.l.s4 1983009808
    %v1008 = vunpack.c.0.s8 %v1007
    %v1009 = vperm.slane %v973, %v1008
    %v1010 = vrot.slane %v1009, 4
    %v1011 = vsel %vm272, %v1010, %v1004
    %v1012 = vrot.slane %v1004, 4
    %v1013 = vsel %vm272, %v1009, %v1012
    %v1015 = vunpack.c.l.s4 1934713408
    %v1016 = vunpack.c.0.s8 %v1015
    %v1017 = vperm.slane %v1011, %v1016
    %v1019 = vunpack.c.l.s4 1934713408
    %v1020 = vunpack.c.0.s8 %v1019
    %v1021 = vperm.slane %v1013, %v1020
    %v1022 = vrot.slane %v1017, 4
    %v1023 = vsel %vm272, 0, %v1022
    %v1024 = vrot.slane %v1021, 4
    %v1025 = vsel %vm272, 0, %v1024
    %v1026 = vsel %vm272, %v998, %v991
    %v1028 = vunpack.c.l.s4 1983009808
    %v1029 = vunpack.c.0.s8 %v1028
    %v1030 = vperm.slane %v1026, %v1029
    %v1031 = vrot.slane %v999, 4
    %v1032 = vsel %vm272, %v1031, %v997
    %v1034 = vunpack.c.l.s4 1983009808
    %v1035 = vunpack.c.0.s8 %v1034
    %v1036 = vperm.slane %v1032, %v1035
    %v1037 = vrot.slane %v1036, 4
    %v1038 = vsel %vm272, %v1037, %v1030
    %v1040 = vunpack.c.l.s4 1934713408
    %v1041 = vunpack.c.0.s8 %v1040
    %v1042 = vperm.slane %v1038, %v1041
    %v1043 = vrot.slane %v1042, 4
    %v1044 = vsel %vm272, 0, %v1043
    %v1045 = vsel %vm272, %v1024, %v1017
    %v1047 = vunpack.c.l.s4 1983009808
    %v1048 = vunpack.c.0.s8 %v1047
    %v1049 = vperm.slane %v1045, %v1048
    %v1050 = vrot.slane %v1025, 4
    %v1051 = vsel %vm272, %v1050, %v1023
    %v1053 = vunpack.c.l.s4 1983009808
    %v1054 = vunpack.c.0.s8 %v1053
    %v1055 = vperm.slane %v1051, %v1054
    %v1056 = vrot.slane %v1055, 4
    %v1057 = vsel %vm272, %v1056, %v1049
    %v1059 = vunpack.c.l.s4 1934713408
    %v1060 = vunpack.c.0.s8 %v1059
    %v1061 = vperm.slane %v1057, %v1060
    %v1062 = vrot.slane %v1061, 4
    %v1063 = vsel %vm272, 0, %v1062
    %v1066 = vpack.i.b16 %v1061, %v1042
    %v1067 = vshrl.u32 %v1042, 16
    %v1068 = vshrl.u32 %v1061, 16
    %v1069 = vpack.i.b16 %v1068, %v1067
    %v1072 = vpack.i.b16 %v1063, %v1044
    %v1073 = vshrl.u32 %v1044, 16
    %v1074 = vshrl.u32 %v1063, 16
    %v1075 = vpack.i.b16 %v1074, %v1073
    %1077 = vrot.lane.b32.xlu0 %v205, 120
    %v1078 = vpop.permute.xlu0 %1077
    %1079 = vrot.lane.b32.xlu0 %v205, 112
    %v1080 = vpop.permute.xlu0 %1079
    %1081 = vrot.lane.b32.xlu0 %v205, 104
    %v1082 = vpop.permute.xlu0 %1081
    %v1085 = vpack.i.b16 %v1078, %v205
    %v1086 = vshrl.u32 %v205, 16
    %v1087 = vshrl.u32 %v1078, 16
    %v1088 = vpack.i.b16 %v1087, %v1086
    %v1091 = vpack.i.b16 %v1082, %v1080
    %v1092 = vshrl.u32 %v1080, 16
    %v1093 = vshrl.u32 %v1082, 16
    %v1094 = vpack.i.b16 %v1093, %v1092
    %v1097 = vunpack.c.l.s4 1983009808
    %v1098 = vunpack.c.0.s8 %v1097
    %v1099 = vperm.slane %v1085, %v1098
    %v1102 = vunpack.c.l.s4 1983009808
    %v1103 = vunpack.c.0.s8 %v1102
    %v1104 = vperm.slane %v1091, %v1103
    %v1105 = vrot.slane %v1104, 4
    %v1106 = vsel %vm272, %v1105, %v1099
    %v1107 = vrot.slane %v1099, 4
    %v1108 = vsel %vm272, %v1104, %v1107
    %v1110 = vunpack.c.l.s4 1934713408
    %v1111 = vunpack.c.0.s8 %v1110
    %v1112 = vperm.slane %v1106, %v1111
    %v1114 = vunpack.c.l.s4 1934713408
    %v1115 = vunpack.c.0.s8 %v1114
    %v1116 = vperm.slane %v1108, %v1115
    %v1117 = vrot.slane %v1112, 4
    %v1118 = vsel %vm272, 0, %v1117
    %v1119 = vrot.slane %v1116, 4
    %v1120 = vsel %vm272, 0, %v1119
    %v1123 = vunpack.c.l.s4 1983009808
    %v1124 = vunpack.c.0.s8 %v1123
    %v1125 = vperm.slane %v1088, %v1124
    %v1128 = vunpack.c.l.s4 1983009808
    %v1129 = vunpack.c.0.s8 %v1128
    %v1130 = vperm.slane %v1094, %v1129
    %v1131 = vrot.slane %v1130, 4
    %v1132 = vsel %vm272, %v1131, %v1125
    %v1133 = vrot.slane %v1125, 4
    %v1134 = vsel %vm272, %v1130, %v1133
    %v1136 = vunpack.c.l.s4 1934713408
    %v1137 = vunpack.c.0.s8 %v1136
    %v1138 = vperm.slane %v1132, %v1137
    %v1140 = vunpack.c.l.s4 1934713408
    %v1141 = vunpack.c.0.s8 %v1140
    %v1142 = vperm.slane %v1134, %v1141
    %v1143 = vrot.slane %v1138, 4
    %v1144 = vsel %vm272, 0, %v1143
    %v1145 = vrot.slane %v1142, 4
    %v1146 = vsel %vm272, 0, %v1145
    %v1147 = vsel %vm272, %v1119, %v1112
    %v1149 = vunpack.c.l.s4 1983009808
    %v1150 = vunpack.c.0.s8 %v1149
    %v1151 = vperm.slane %v1147, %v1150
    %v1152 = vrot.slane %v1120, 4
    %v1153 = vsel %vm272, %v1152, %v1118
    %v1155 = vunpack.c.l.s4 1983009808
    %v1156 = vunpack.c.0.s8 %v1155
    %v1157 = vperm.slane %v1153, %v1156
    %v1158 = vrot.slane %v1157, 4
    %v1159 = vsel %vm272, %v1158, %v1151
    %v1161 = vunpack.c.l.s4 1934713408
    %v1162 = vunpack.c.0.s8 %v1161
    %v1163 = vperm.slane %v1159, %v1162
    %v1164 = vrot.slane %v1163, 4
    %v1165 = vsel %vm272, 0, %v1164
    %v1166 = vsel %vm272, %v1145, %v1138
    %v1168 = vunpack.c.l.s4 1983009808
    %v1169 = vunpack.c.0.s8 %v1168
    %v1170 = vperm.slane %v1166, %v1169
    %v1171 = vrot.slane %v1146, 4
    %v1172 = vsel %vm272, %v1171, %v1144
    %v1174 = vunpack.c.l.s4 1983009808
    %v1175 = vunpack.c.0.s8 %v1174
    %v1176 = vperm.slane %v1172, %v1175
    %v1177 = vrot.slane %v1176, 4
    %v1178 = vsel %vm272, %v1177, %v1170
    %v1180 = vunpack.c.l.s4 1934713408
    %v1181 = vunpack.c.0.s8 %v1180
    %v1182 = vperm.slane %v1178, %v1181
    %v1183 = vrot.slane %v1182, 4
    %v1184 = vsel %vm272, 0, %v1183
    %v1187 = vpack.i.b16 %v1182, %v1163
    %v1188 = vshrl.u32 %v1163, 16
    %v1189 = vshrl.u32 %v1182, 16
    %v1190 = vpack.i.b16 %v1189, %v1188
    %v1193 = vpack.i.b16 %v1184, %v1165
    %v1194 = vshrl.u32 %v1165, 16
    %v1195 = vshrl.u32 %v1184, 16
    %v1196 = vpack.i.b16 %v1195, %v1194
    %1198 = vrot.lane.b32.xlu0 %v241, 120
    %v1199 = vpop.permute.xlu0 %1198
    %1200 = vrot.lane.b32.xlu0 %v241, 112
    %v1201 = vpop.permute.xlu0 %1200
    %1202 = vrot.lane.b32.xlu0 %v241, 104
    %v1203 = vpop.permute.xlu0 %1202
    %v1206 = vpack.i.b16 %v1199, %v241
    %v1207 = vshrl.u32 %v241, 16
    %v1208 = vshrl.u32 %v1199, 16
    %v1209 = vpack.i.b16 %v1208, %v1207
    %v1212 = vpack.i.b16 %v1203, %v1201
    %v1213 = vshrl.u32 %v1201, 16
    %v1214 = vshrl.u32 %v1203, 16
    %v1215 = vpack.i.b16 %v1214, %v1213
    %v1218 = vunpack.c.l.s4 1983009808
    %v1219 = vunpack.c.0.s8 %v1218
    %v1220 = vperm.slane %v1206, %v1219
    %v1223 = vunpack.c.l.s4 1983009808
    %v1224 = vunpack.c.0.s8 %v1223
    %v1225 = vperm.slane %v1212, %v1224
    %v1226 = vrot.slane %v1225, 4
    %v1227 = vsel %vm272, %v1226, %v1220
    %v1228 = vrot.slane %v1220, 4
    %v1229 = vsel %vm272, %v1225, %v1228
    %v1231 = vunpack.c.l.s4 1934713408
    %v1232 = vunpack.c.0.s8 %v1231
    %v1233 = vperm.slane %v1227, %v1232
    %v1235 = vunpack.c.l.s4 1934713408
    %v1236 = vunpack.c.0.s8 %v1235
    %v1237 = vperm.slane %v1229, %v1236
    %v1238 = vrot.slane %v1233, 4
    %v1239 = vsel %vm272, 0, %v1238
    %v1240 = vrot.slane %v1237, 4
    %v1241 = vsel %vm272, 0, %v1240
    %v1244 = vunpack.c.l.s4 1983009808
    %v1245 = vunpack.c.0.s8 %v1244
    %v1246 = vperm.slane %v1209, %v1245
    %v1249 = vunpack.c.l.s4 1983009808
    %v1250 = vunpack.c.0.s8 %v1249
    %v1251 = vperm.slane %v1215, %v1250
    %v1252 = vrot.slane %v1251, 4
    %v1253 = vsel %vm272, %v1252, %v1246
    %v1254 = vrot.slane %v1246, 4
    %v1255 = vsel %vm272, %v1251, %v1254
    %v1257 = vunpack.c.l.s4 1934713408
    %v1258 = vunpack.c.0.s8 %v1257
    %v1259 = vperm.slane %v1253, %v1258
    %v1261 = vunpack.c.l.s4 1934713408
    %v1262 = vunpack.c.0.s8 %v1261
    %v1263 = vperm.slane %v1255, %v1262
    %v1264 = vrot.slane %v1259, 4
    %v1265 = vsel %vm272, 0, %v1264
    %v1266 = vrot.slane %v1263, 4
    %v1267 = vsel %vm272, 0, %v1266
    %v1268 = vsel %vm272, %v1240, %v1233
    %v1270 = vunpack.c.l.s4 1983009808
    %v1271 = vunpack.c.0.s8 %v1270
    %v1272 = vperm.slane %v1268, %v1271
    %v1273 = vrot.slane %v1241, 4
    %v1274 = vsel %vm272, %v1273, %v1239
    %v1276 = vunpack.c.l.s4 1983009808
    %v1277 = vunpack.c.0.s8 %v1276
    %v1278 = vperm.slane %v1274, %v1277
    %v1279 = vrot.slane %v1278, 4
    %v1280 = vsel %vm272, %v1279, %v1272
    %v1282 = vunpack.c.l.s4 1934713408
    %v1283 = vunpack.c.0.s8 %v1282
    %v1284 = vperm.slane %v1280, %v1283
    %v1285 = vrot.slane %v1284, 4
    %v1286 = vsel %vm272, 0, %v1285
    %v1287 = vsel %vm272, %v1266, %v1259
    %v1289 = vunpack.c.l.s4 1983009808
    %v1290 = vunpack.c.0.s8 %v1289
    %v1291 = vperm.slane %v1287, %v1290
    %v1292 = vrot.slane %v1267, 4
    %v1293 = vsel %vm272, %v1292, %v1265
    %v1295 = vunpack.c.l.s4 1983009808
    %v1296 = vunpack.c.0.s8 %v1295
    %v1297 = vperm.slane %v1293, %v1296
    %v1298 = vrot.slane %v1297, 4
    %v1299 = vsel %vm272, %v1298, %v1291
    %v1301 = vunpack.c.l.s4 1934713408
    %v1302 = vunpack.c.0.s8 %v1301
    %v1303 = vperm.slane %v1299, %v1302
    %v1304 = vrot.slane %v1303, 4
    %v1305 = vsel %vm272, 0, %v1304
    %v1308 = vpack.i.b16 %v1303, %v1284
    %v1309 = vshrl.u32 %v1284, 16
    %v1310 = vshrl.u32 %v1303, 16
    %v1311 = vpack.i.b16 %v1310, %v1309
    %v1314 = vpack.i.b16 %v1305, %v1286
    %v1315 = vshrl.u32 %v1286, 16
    %v1316 = vshrl.u32 %v1305, 16
    %v1317 = vpack.i.b16 %v1316, %v1315
    %s1318 = scalar_lea.vmem %s1, 8
    %v1319 = vld [vmem:[%s1318] sm:$0xff]
    %v1321 = vsel %vm607, %v1066, 0
    %v1324 = vsel %vm607, %v1187, 0
    %1326 = vmatpush.bf16.xpose.msra.mxu0 0
    %1327 = vmatpush.bf16.xpose.msra.mxu0 0
    %1328 = vmatpush.bf16.xpose.msra.mxu0 0
    %1329 = vmatpush.bf16.xpose.msra.mxu0 0
    %1330 = vmatpush.bf16.xpose.msra.mxu0 0
    %1331 = vmatpush.bf16.xpose.msra.mxu0 0
    %1332 = vmatpush.bf16.xpose.msra.mxu0 0
    %1333 = vmatpush.bf16.xpose.msra.mxu0 %v1324
    %1334 = vmatmul.bf16.gmra.mxu0 %v1321
    %v1335 = vpop.f32.mrf.mxu0
    %v1336 = vadd.f32 %v1319, %v1335
    %v1337 = vpop.f32.mrf.mxu0
    %1338 = vdwg.mxu0
    %v1340 = vsel %vm607, %v1069, 0
    %v1343 = vsel %vm607, %v1190, 0
    %1345 = vmatpush.bf16.xpose.msra.mxu0 0
    %1346 = vmatpush.bf16.xpose.msra.mxu0 0
    %1347 = vmatpush.bf16.xpose.msra.mxu0 0
    %1348 = vmatpush.bf16.xpose.msra.mxu0 0
    %1349 = vmatpush.bf16.xpose.msra.mxu0 0
    %1350 = vmatpush.bf16.xpose.msra.mxu0 0
    %1351 = vmatpush.bf16.xpose.msra.mxu0 0
    %1352 = vmatpush.bf16.xpose.msra.mxu0 %v1343
    %1353 = vmatmul.bf16.gmra.mxu0 %v1340
    %v1354 = vpop.f32.mrf.mxu0
    %v1355 = vadd.f32 %v1319, %v1354
    %v1356 = vpop.f32.mrf.mxu0
    %1357 = vdwg.mxu0
    %v1359 = vsel %vm607, %v1072, 0
    %v1362 = vsel %vm607, %v1193, 0
    %1364 = vmatpush.bf16.xpose.msra.mxu0 0
    %1365 = vmatpush.bf16.xpose.msra.mxu0 0
    %1366 = vmatpush.bf16.xpose.msra.mxu0 0
    %1367 = vmatpush.bf16.xpose.msra.mxu0 0
    %1368 = vmatpush.bf16.xpose.msra.mxu0 0
    %1369 = vmatpush.bf16.xpose.msra.mxu0 0
    %1370 = vmatpush.bf16.xpose.msra.mxu0 0
    %1371 = vmatpush.bf16.xpose.msra.mxu0 %v1362
    %1372 = vmatmul.bf16.gmra.mxu0 %v1359
    %v1373 = vpop.f32.mrf.mxu0
    %v1374 = vadd.f32 %v1319, %v1373
    %v1375 = vpop.f32.mrf.mxu0
    %1376 = vdwg.mxu0
    %v1378 = vsel %vm607, %v1075, 0
    %v1381 = vsel %vm607, %v1196, 0
    %1383 = vmatpush.bf16.xpose.msra.mxu0 0
    %1384 = vmatpush.bf16.xpose.msra.mxu0 0
    %1385 = vmatpush.bf16.xpose.msra.mxu0 0
    %1386 = vmatpush.bf16.xpose.msra.mxu0 0
    %1387 = vmatpush.bf16.xpose.msra.mxu0 0
    %1388 = vmatpush.bf16.xpose.msra.mxu0 0
    %1389 = vmatpush.bf16.xpose.msra.mxu0 0
    %1390 = vmatpush.bf16.xpose.msra.mxu0 %v1381
    %1391 = vmatmul.bf16.gmra.mxu0 %v1378
    %v1392 = vpop.f32.mrf.mxu0
    %v1393 = vadd.f32 %v1319, %v1392
    %v1394 = vpop.f32.mrf.mxu0
    %1395 = vdwg.mxu0
    %v1396 = vsel %vm607, %v1336, -inf
    %1397 = vmax.xlane.f32.xlu0 %v1396
    %v1398 = vpop.xlane.xlu0 %1397
    %v1399 = vsel %vm607, %v1355, -inf
    %1400 = vmax.xlane.f32.xlu0 %v1399
    %v1401 = vpop.xlane.xlu0 %1400
    %v1402 = vsel %vm607, %v1374, -inf
    %1403 = vmax.xlane.f32.xlu0 %v1402
    %v1404 = vpop.xlane.xlu0 %1403
    %v1405 = vsel %vm607, %v1393, -inf
    %1406 = vmax.xlane.f32.xlu0 %v1405
    %v1407 = vpop.xlane.xlu0 %1406
    %v1408 = vsub.f32 %v1336, %v1398
    %v1409 = vsub.f32 %v1355, %v1401
    %v1410 = vsub.f32 %v1374, %v1404
    %v1411 = vsub.f32 %v1393, %v1407
    %v1412 = vmul.f32 %v1408, 1.442695
    %v1413 = vpow.pop %v1412
    %v1414 = vmul.f32 %v1409, 1.442695
    %v1415 = vpow.pop %v1414
    %v1416 = vmul.f32 %v1410, 1.442695
    %v1417 = vpow.pop %v1416
    %v1418 = vmul.f32 %v1411, 1.442695
    %v1419 = vpow.pop %v1418
    %v1420 = vsel %vm607, %v1413, 0.0
    %1421 = vadd.xlane.f32.xlu0 %v1420
    %v1422 = vpop.xlane.xlu0 %1421
    %v1423 = vsel %vm607, %v1415, 0.0
    %1424 = vadd.xlane.f32.xlu0 %v1423
    %v1425 = vpop.xlane.xlu0 %1424
    %v1426 = vsel %vm607, %v1417, 0.0
    %1427 = vadd.xlane.f32.xlu0 %v1426
    %v1428 = vpop.xlane.xlu0 %1427
    %v1429 = vsel %vm607, %v1419, 0.0
    %1430 = vadd.xlane.f32.xlu0 %v1429
    %v1431 = vpop.xlane.xlu0 %1430
    %v1432 = vrcp.pop %v1422
    %v1433 = vrcp.pop %v1425
    %v1434 = vrcp.pop %v1428
    %v1435 = vrcp.pop %v1431
    %v1436 = vmul.f32 %v1413, %v1432
    %v1437 = vmul.f32 %v1415, %v1433
    %v1438 = vmul.f32 %v1417, %v1434
    %v1439 = vmul.f32 %v1419, %v1435
    %s1440 = scalar_lea.vmem [#allocation12], 32
    %1441 = vst.msk [vmem:[%s1440] sm:$0xff] %vm607, %v1436
    %1442 = vst.msk [vmem:[%s1440 + $0x8] sm:$0xff] %vm607, %v1437
    %1443 = vst.msk [vmem:[%s1440 + $0x10] sm:$0xff] %vm607, %v1438
    %1444 = vst.msk [vmem:[%s1440 + $0x18] sm:$0xff] %vm607, %v1439
    %v1445 = vpack.c.bf16 %v1436, %v1436
    %v1446 = vpack.c.bf16 %v1437, %v1437
    %v1447 = vpack.c.bf16 %v1438, %v1438
    %v1448 = vpack.c.bf16 %v1439, %v1439
    %v1450 = vsel %vm607, %v1445, 0
    %v1453 = vsel %vm739, %v1308, 0
    %1455 = vmatpush.bf16.msra.mxu0 0
    %1456 = vmatpush.bf16.msra.mxu0 0
    %1457 = vmatpush.bf16.msra.mxu0 0
    %1458 = vmatpush.bf16.msra.mxu0 0
    %1459 = vmatpush.bf16.msra.mxu0 0
    %1460 = vmatpush.bf16.msra.mxu0 0
    %1461 = vmatpush.bf16.msra.mxu0 0
    %1462 = vmatpush.bf16.msra.mxu0 %v1453
    %1463 = vmatmul.bf16.gmra.mxu0 %v1450
    %v1464 = vpop.f32.mrf.mxu0
    %v1465 = vadd.f32 0.0, %v1464
    %v1466 = vpop.f32.mrf.mxu0
    %1467 = vdwg.mxu0
    %v1469 = vsel %vm607, %v1446, 0
    %v1472 = vsel %vm739, %v1311, 0
    %1474 = vmatpush.bf16.msra.mxu0 0
    %1475 = vmatpush.bf16.msra.mxu0 0
    %1476 = vmatpush.bf16.msra.mxu0 0
    %1477 = vmatpush.bf16.msra.mxu0 0
    %1478 = vmatpush.bf16.msra.mxu0 0
    %1479 = vmatpush.bf16.msra.mxu0 0
    %1480 = vmatpush.bf16.msra.mxu0 0
    %1481 = vmatpush.bf16.msra.mxu0 %v1472
    %1482 = vmatmul.bf16.gmra.mxu0 %v1469
    %v1483 = vpop.f32.mrf.mxu0
    %v1484 = vadd.f32 0.0, %v1483
    %v1485 = vpop.f32.mrf.mxu0
    %1486 = vdwg.mxu0
    %v1488 = vsel %vm607, %v1447, 0
    %v1491 = vsel %vm739, %v1314, 0
    %1493 = vmatpush.bf16.msra.mxu0 0
    %1494 = vmatpush.bf16.msra.mxu0 0
    %1495 = vmatpush.bf16.msra.mxu0 0
    %1496 = vmatpush.bf16.msra.mxu0 0
    %1497 = vmatpush.bf16.msra.mxu0 0
    %1498 = vmatpush.bf16.msra.mxu0 0
    %1499 = vmatpush.bf16.msra.mxu0 0
    %1500 = vmatpush.bf16.msra.mxu0 %v1491
    %1501 = vmatmul.bf16.gmra.mxu0 %v1488
    %v1502 = vpop.f32.mrf.mxu0
    %v1503 = vadd.f32 0.0, %v1502
    %v1504 = vpop.f32.mrf.mxu0
    %1505 = vdwg.mxu0
    %v1507 = vsel %vm607, %v1448, 0
    %v1510 = vsel %vm739, %v1317, 0
    %1512 = vmatpush.bf16.msra.mxu0 0
    %1513 = vmatpush.bf16.msra.mxu0 0
    %1514 = vmatpush.bf16.msra.mxu0 0
    %1515 = vmatpush.bf16.msra.mxu0 0
    %1516 = vmatpush.bf16.msra.mxu0 0
    %1517 = vmatpush.bf16.msra.mxu0 0
    %1518 = vmatpush.bf16.msra.mxu0 0
    %1519 = vmatpush.bf16.msra.mxu0 %v1510
    %1520 = vmatmul.bf16.gmra.mxu0 %v1507
    %v1521 = vpop.f32.mrf.mxu0
    %v1522 = vadd.f32 0.0, %v1521
    %v1523 = vpop.f32.mrf.mxu0
    %1524 = vdwg.mxu0
    %v1525 = vpack.c.bf16 %v1465, %v1465
    %v1526 = vpack.c.bf16 %v1484, %v1484
    %v1527 = vpack.c.bf16 %v1503, %v1503
    %v1528 = vpack.c.bf16 %v1522, %v1522
    %v1531 = vpack.i.b16 %v1526, %v1525
    %v1532 = vshrl.u32 %v1525, 16
    %v1533 = vshrl.u32 %v1526, 16
    %v1534 = vpack.i.b16 %v1533, %v1532
    %v1537 = vpack.i.b16 %v1528, %v1527
    %v1538 = vshrl.u32 %v1527, 16
    %v1539 = vshrl.u32 %v1528, 16
    %v1540 = vpack.i.b16 %v1539, %v1538
    %v1543 = vunpack.c.l.s4 1983009808
    %v1544 = vunpack.c.0.s8 %v1543
    %v1545 = vperm.slane %v1531, %v1544
    %v1548 = vunpack.c.l.s4 1983009808
    %v1549 = vunpack.c.0.s8 %v1548
    %v1550 = vperm.slane %v1537, %v1549
    %v1551 = vrot.slane %v1550, 4
    %v1552 = vsel %vm272, %v1551, %v1545
    %v1553 = vrot.slane %v1545, 4
    %v1554 = vsel %vm272, %v1550, %v1553
    %v1556 = vunpack.c.l.s4 1934713408
    %v1557 = vunpack.c.0.s8 %v1556
    %v1558 = vperm.slane %v1552, %v1557
    %v1560 = vunpack.c.l.s4 1934713408
    %v1561 = vunpack.c.0.s8 %v1560
    %v1562 = vperm.slane %v1554, %v1561
    %v1563 = vrot.slane %v1558, 4
    %v1564 = vsel %vm272, 0, %v1563
    %v1565 = vrot.slane %v1562, 4
    %v1566 = vsel %vm272, 0, %v1565
    %v1569 = vunpack.c.l.s4 1983009808
    %v1570 = vunpack.c.0.s8 %v1569
    %v1571 = vperm.slane %v1534, %v1570
    %v1574 = vunpack.c.l.s4 1983009808
    %v1575 = vunpack.c.0.s8 %v1574
    %v1576 = vperm.slane %v1540, %v1575
    %v1577 = vrot.slane %v1576, 4
    %v1578 = vsel %vm272, %v1577, %v1571
    %v1579 = vrot.slane %v1571, 4
    %v1580 = vsel %vm272, %v1576, %v1579
    %v1582 = vunpack.c.l.s4 1934713408
    %v1583 = vunpack.c.0.s8 %v1582
    %v1584 = vperm.slane %v1578, %v1583
    %v1586 = vunpack.c.l.s4 1934713408
    %v1587 = vunpack.c.0.s8 %v1586
    %v1588 = vperm.slane %v1580, %v1587
    %v1589 = vrot.slane %v1584, 4
    %v1590 = vsel %vm272, 0, %v1589
    %v1591 = vrot.slane %v1588, 4
    %v1592 = vsel %vm272, 0, %v1591
    %v1593 = vsel %vm272, %v1565, %v1558
    %v1595 = vunpack.c.l.s4 1983009808
    %v1596 = vunpack.c.0.s8 %v1595
    %v1597 = vperm.slane %v1593, %v1596
    %v1598 = vrot.slane %v1566, 4
    %v1599 = vsel %vm272, %v1598, %v1564
    %v1601 = vunpack.c.l.s4 1983009808
    %v1602 = vunpack.c.0.s8 %v1601
    %v1603 = vperm.slane %v1599, %v1602
    %v1604 = vrot.slane %v1603, 4
    %v1605 = vsel %vm272, %v1604, %v1597
    %v1607 = vunpack.c.l.s4 1934713408
    %v1608 = vunpack.c.0.s8 %v1607
    %v1609 = vperm.slane %v1605, %v1608
    %v1610 = vrot.slane %v1609, 4
    %v1611 = vsel %vm272, 0, %v1610
    %v1612 = vsel %vm272, %v1591, %v1584
    %v1614 = vunpack.c.l.s4 1983009808
    %v1615 = vunpack.c.0.s8 %v1614
    %v1616 = vperm.slane %v1612, %v1615
    %v1617 = vrot.slane %v1592, 4
    %v1618 = vsel %vm272, %v1617, %v1590
    %v1620 = vunpack.c.l.s4 1983009808
    %v1621 = vunpack.c.0.s8 %v1620
    %v1622 = vperm.slane %v1618, %v1621
    %v1623 = vrot.slane %v1622, 4
    %v1624 = vsel %vm272, %v1623, %v1616
    %v1626 = vunpack.c.l.s4 1934713408
    %v1627 = vunpack.c.0.s8 %v1626
    %v1628 = vperm.slane %v1624, %v1627
    %v1629 = vrot.slane %v1628, 4
    %v1630 = vsel %vm272, 0, %v1629
    %v1633 = vpack.i.b16 %v1628, %v1609
    %v1634 = vshrl.u32 %v1609, 16
    %v1635 = vshrl.u32 %v1628, 16
    %v1636 = vpack.i.b16 %v1635, %v1634
    %v1639 = vpack.i.b16 %v1630, %v1611
    %v1640 = vshrl.u32 %v1611, 16
    %v1641 = vshrl.u32 %v1630, 16
    %v1642 = vpack.i.b16 %v1641, %v1640
    %v1643 = vunpack.c.l.b16 %v1636
    %v1644 = vpack.c.b16 %v1643, %v1643
    %1645 = vrot.lane.b32.xlu0 %v1644, 8
    %v1646 = vpop.permute.xlu0 %1645
    %v1647 = vunpack.c.l.b16 %v1639
    %v1648 = vpack.c.b16 %v1647, %v1647
    %1649 = vrot.lane.b32.xlu0 %v1648, 16
    %v1650 = vpop.permute.xlu0 %1649
    %v1651 = vunpack.c.l.b16 %v1642
    %v1652 = vpack.c.b16 %v1651, %v1651
    %1653 = vrot.lane.b32.xlu0 %v1652, 24
    %v1654 = vpop.permute.xlu0 %1653
    %v1657 = vsel %vm607, %v1633, %v1646
    %v1659 = vsel %vm946, %v1657, %v1650
    %v1661 = vsel %vm949, %v1659, %v1654
    %1663 = vst.msk [vmem:[#allocation2 + $0x4] sm:$0xf] %vm953, %v1661
    %v1664 = vld [vmem:[#allocation2] sm:$0xf]
    %v1665 = vld [vmem:[#allocation2 + $0x4] sm:$0xf]
    %v1666 = vld [vmem:[#allocation8] sm:$0xf]
    %v1667 = vld [vmem:[#allocation8 + $0x4] sm:$0xf]
    %v1668 = vld [vmem:[#allocation8 + $0x8] sm:$0xf]
    %v1669 = vld [vmem:[#allocation8 + $0xc] sm:$0xf]
    %v1670 = vld [vmem:[%s9] sm:$0x1]
    %v1672 = vperm.slane %v1670, 0
    %v1676 = vunpack.c.l.b16 %v1664
    %v1677 = vunpack.c.l.b16 %v1665
    %v1678 = vpack.c.b16 %v1677, %v1676
    %v1683 = vunpack.c.l.b16 %v1666
    %v1684 = vunpack.c.l.b16 %v1667
    %v1685 = vunpack.c.l.b16 %v1668
    %v1686 = vunpack.c.l.b16 %v1669
    %v1687 = vpack.c.b16 %v1684, %v1683
    %v1688 = vpack.c.b16 %v1686, %v1685
    %v1692 = vsel %vm150, %v1678, 0
    %1694 = vmatpush.bf16.msra.mxu0 0
    %1695 = vmatpush.bf16.msra.mxu0 0
    %1696 = vmatpush.bf16.msra.mxu0 0
    %1697 = vmatpush.bf16.msra.mxu0 0
    %1698 = vmatpush.bf16.msra.mxu0 0
    %1699 = vmatpush.bf16.msra.mxu0 0
    %1700 = vmatpush.bf16.msra.mxu0 %v1688
    %1701 = vmatpush.bf16.msra.mxu0 %v1687
    %1702 = vmatmul.bf16.gmra.mxu0 %v1692
    %v1703 = vpop.f32.mrf.mxu0
    %v1704 = vadd.f32 %v1672, %v1703
    %v1705 = vpop.f32.mrf.mxu0
    %v1706 = vadd.f32 %v1672, %v1705
    %1707 = vdwg.mxu0
    %v1708 = vadd.f32 %v127, %v1704
    %v1709 = vadd.f32 %v128, %v1706
    %v1710 = vld [vmem:[%s10] sm:$0x1]
    %v1711 = vld [vmem:[%s11] sm:$0x1]
    %v1712 = vsel %vm150, %v1708, 0.0
    %1713 = vadd.xlane.f32.xlu0 %v1712
    %v1714 = vpop.xlane.xlu0 %1713
    %v1715 = vsel %vm150, %v1709, 0.0
    %1716 = vadd.xlane.f32.xlu0 %v1715
    %v1717 = vpop.xlane.xlu0 %1716
    %v1718 = vrcp.pop 32.0
    %v1719 = vmul.f32 32.0, %v1718
    %v1720 = vsub.f32 1.0, %v1719
    %v1721 = vmul.f32 %v1718, %v1720
    %v1722 = vadd.f32 %v1718, %v1721
    %vm1723 = vweird.f32 %v1718
    %v1724 = vsel %vm1723, %v1718, %v1722
    %v1725 = vmul.f32 %v1714, %v1724
    %v1726 = vmul.f32 %v1717, %v1724
    %v1727 = vsub.f32 %v1708, %v1725
    %v1728 = vsub.f32 %v1709, %v1726
    %v1729 = vmul.f32 %v1727, %v1727
    %v1730 = vmul.f32 %v1728, %v1728
    %v1731 = vsel %vm150, %v1729, 0.0
    %1732 = vadd.xlane.f32.xlu0 %v1731
    %v1733 = vpop.xlane.xlu0 %1732
    %v1734 = vsel %vm150, %v1730, 0.0
    %1735 = vadd.xlane.f32.xlu0 %v1734
    %v1736 = vpop.xlane.xlu0 %1735
    %v1737 = vmul.f32 %v1733, %v1724
    %v1738 = vmul.f32 %v1736, %v1724
    %v1739 = vadd.f32 %v1737, 1e-05
    %v1740 = vadd.f32 %v1738, 1e-05
    %v1741 = vrsqrt.pop %v1739
    %v1742 = vmul.f32 %v1741, %v1739
    %v1743 = vmul.f32 %v1742, %v1741
    %v1744 = vmul.f32 0.5, %v1743
    %v1745 = vsub.f32 1.5, %v1744
    %v1746 = vmul.f32 %v1741, %v1745
    %vm1747 = vweird.f32 %v1739
    %vm1748 = vweird.f32 %v1741
    %vm1749 = vmor %vm1747, %vm1748
    %v1750 = vsel %vm1749, %v1741, %v1746
    %v1751 = vrsqrt.pop %v1740
    %v1752 = vmul.f32 %v1751, %v1740
    %v1753 = vmul.f32 %v1752, %v1751
    %v1754 = vmul.f32 0.5, %v1753
    %v1755 = vsub.f32 1.5, %v1754
    %v1756 = vmul.f32 %v1751, %v1755
    %vm1757 = vweird.f32 %v1740
    %vm1758 = vweird.f32 %v1751
    %vm1759 = vmor %vm1757, %vm1758
    %v1760 = vsel %vm1759, %v1751, %v1756
    %v1761 = vmul.f32 %v1727, %v1750
    %v1762 = vmul.f32 %v1728, %v1760
    %v1764 = vperm.slane %v1710, 0
    %v1766 = vmul.f32 %v1761, %v1764
    %v1767 = vmul.f32 %v1762, %v1764
    %v1769 = vperm.slane %v1711, 0
    %v1771 = vadd.f32 %v1766, %v1769
    %v1772 = vadd.f32 %v1767, %v1769
    %v1773 = vpack.c.bf16 %v1772, %v1771
    %v1774 = vld [vmem:[#allocation9] sm:$0xf]
    %v1775 = vld [vmem:[#allocation9 + $0x4] sm:$0xf]
    %v1776 = vld [vmem:[#allocation9 + $0x8] sm:$0xf]
    %v1777 = vld [vmem:[#allocation9 + $0xc] sm:$0xf]
    %v1778 = vld [vmem:[%s13] sm:$0x1]
    %v1780 = vperm.slane %v1778, 0
    %v1786 = vunpack.c.l.b16 %v1774
    %v1787 = vunpack.c.l.b16 %v1775
    %v1788 = vunpack.c.l.b16 %v1776
    %v1789 = vunpack.c.l.b16 %v1777
    %v1790 = vpack.c.b16 %v1787, %v1786
    %v1791 = vpack.c.b16 %v1789, %v1788
    %v1795 = vsel %vm150, %v1773, 0
    %1797 = vmatpush.bf16.msra.mxu0 0
    %1798 = vmatpush.bf16.msra.mxu0 0
    %1799 = vmatpush.bf16.msra.mxu0 0
    %1800 = vmatpush.bf16.msra.mxu0 0
    %1801 = vmatpush.bf16.msra.mxu0 0
    %1802 = vmatpush.bf16.msra.mxu0 0
    %1803 = vmatpush.bf16.msra.mxu0 %v1791
    %1804 = vmatpush.bf16.msra.mxu0 %v1790
    %1805 = vmatmul.bf16.gmra.mxu0 %v1795
    %v1806 = vpop.f32.mrf.mxu0
    %v1807 = vadd.f32 %v1780, %v1806
    %v1808 = vpop.f32.mrf.mxu0
    %v1809 = vadd.f32 %v1780, %v1808
    %1810 = vdwg.mxu0
    %v1811 = vmax.f32 %v1807, 0.0
    %v1812 = vmax.f32 %v1809, 0.0
    %v1813 = vpack.c.bf16 %v1812, %v1811
    %v1814 = vld [vmem:[%s14] sm:$0xf]
    %v1815 = vld [vmem:[%s14 + $0x4] sm:$0xf]
    %v1816 = vld [vmem:[%s14 + $0x8] sm:$0xf]
    %v1817 = vld [vmem:[%s14 + $0xc] sm:$0xf]
    %v1818 = vld [vmem:[%s14 + $0x10] sm:$0xf]
    %v1819 = vld [vmem:[%s14 + $0x14] sm:$0xf]
    %v1820 = vld [vmem:[%s14 + $0x18] sm:$0xf]
    %v1821 = vld [vmem:[%s14 + $0x1c] sm:$0xf]
    %v1822 = vld [vmem:[%s15] sm:$0x1]
    %v1824 = vperm.slane %v1822, 0
    %v1834 = vunpack.c.l.b16 %v1814
    %v1835 = vunpack.c.l.b16 %v1815
    %v1836 = vunpack.c.l.b16 %v1816
    %v1837 = vunpack.c.l.b16 %v1817
    %v1838 = vunpack.c.l.b16 %v1818
    %v1839 = vunpack.c.l.b16 %v1819
    %v1840 = vunpack.c.l.b16 %v1820
    %v1841 = vunpack.c.l.b16 %v1821
    %v1842 = vpack.c.b16 %v1835, %v1834
    %v1843 = vpack.c.b16 %v1837, %v1836
    %v1844 = vpack.c.b16 %v1839, %v1838
    %v1845 = vpack.c.b16 %v1841, %v1840
    %vm1850 = vcmask 523264
    %v1852 = vsel %vm1850, %v1813, 0
    %1854 = vmatpush.bf16.msra.mxu0 0
    %1855 = vmatpush.bf16.msra.mxu0 0
    %1856 = vmatpush.bf16.msra.mxu0 0
    %1857 = vmatpush.bf16.msra.mxu0 0
    %1858 = vmatpush.bf16.msra.mxu0 %v1845
    %1859 = vmatpush.bf16.msra.mxu0 %v1844
    %1860 = vmatpush.bf16.msra.mxu0 %v1843
    %1861 = vmatpush.bf16.msra.mxu0 %v1842
    %1862 = vmatmul.bf16.gmra.mxu0 %v1852
    %v1863 = vpop.f32.mrf.mxu0
    %v1864 = vadd.f32 %v1824, %v1863
    %v1865 = vpop.f32.mrf.mxu0
    %v1866 = vadd.f32 %v1824, %v1865
    %1867 = vdwg.mxu0
    %v1868 = vadd.f32 %v1771, %v1864
    %v1869 = vadd.f32 %v1772, %v1866
    %v1870 = vld [vmem:[%s16] sm:$0x1]
    %v1871 = vld [vmem:[%s17] sm:$0x1]
    %v1872 = vsel %vm150, %v1868, 0.0
    %1873 = vadd.xlane.f32.xlu0 %v1872
    %v1874 = vpop.xlane.xlu0 %1873
    %v1875 = vsel %vm150, %v1869, 0.0
    %1876 = vadd.xlane.f32.xlu0 %v1875
    %v1877 = vpop.xlane.xlu0 %1876
    %v1878 = vmul.f32 %v1874, %v1724
    %v1879 = vmul.f32 %v1877, %v1724
    %v1880 = vsub.f32 %v1868, %v1878
    %v1881 = vsub.f32 %v1869, %v1879
    %v1882 = vmul.f32 %v1880, %v1880
    %v1883 = vmul.f32 %v1881, %v1881
    %v1884 = vsel %vm150, %v1882, 0.0
    %1885 = vadd.xlane.f32.xlu0 %v1884
    %v1886 = vpop.xlane.xlu0 %1885
    %v1887 = vsel %vm150, %v1883, 0.0
    %1888 = vadd.xlane.f32.xlu0 %v1887
    %v1889 = vpop.xlane.xlu0 %1888
    %v1890 = vmul.f32 %v1886, %v1724
    %v1891 = vmul.f32 %v1889, %v1724
    %v1892 = vadd.f32 %v1890, 1e-05
    %v1893 = vadd.f32 %v1891, 1e-05
    %v1894 = vrsqrt.pop %v1892
    %v1895 = vmul.f32 %v1894, %v1892
    %v1896 = vmul.f32 %v1895, %v1894
    %v1897 = vmul.f32 0.5, %v1896
    %v1898 = vsub.f32 1.5, %v1897
    %v1899 = vmul.f32 %v1894, %v1898
    %vm1900 = vweird.f32 %v1892
    %vm1901 = vweird.f32 %v1894
    %vm1902 = vmor %vm1900, %vm1901
    %v1903 = vsel %vm1902, %v1894, %v1899
    %v1904 = vrsqrt.pop %v1893
    %v1905 = vmul.f32 %v1904, %v1893
    %v1906 = vmul.f32 %v1905, %v1904
    %v1907 = vmul.f32 0.5, %v1906
    %v1908 = vsub.f32 1.5, %v1907
    %v1909 = vmul.f32 %v1904, %v1908
    %vm1910 = vweird.f32 %v1893
    %vm1911 = vweird.f32 %v1904
    %vm1912 = vmor %vm1910, %vm1911
    %v1913 = vsel %vm1912, %v1904, %v1909
    %v1914 = vmul.f32 %v1880, %v1903
    %v1915 = vmul.f32 %v1881, %v1913
    %v1917 = vperm.slane %v1870, 0
    %v1919 = vmul.f32 %v1914, %v1917
    %v1920 = vmul.f32 %v1915, %v1917
    %v1922 = vperm.slane %v1871, 0
    %v1924 = vadd.f32 %v1919, %v1922
    %v1925 = vadd.f32 %v1920, %v1922
    %1926 = vst.msk [vmem:[#allocation11] sm:$0xff] %vm150, %v1924
    %1927 = vst.msk [vmem:[#allocation11 + $0x8] sm:$0xff] %vm150, %v1925
    // Predicated region
    $region90: #{tpu_custom_call.1} parent=1 // pred_check
      _
    $region91: #{tpu_custom_call.1} parent=1 // pred_check_branch
      %1929 = sbr.rel (0) target = $region93
    $region92: #{tpu_custom_call.1} parent=1 // pred_region
      %1931 = vsyncadd [#allocation5], 0
      %s1932 = sshll.u32 [#allocation11], 4
      %s1933 = int_to_ptr.vmem [resolvable:$true] %s1932
      %s1934 = sshll.u32 %s18, 4
      %s1935 = int_to_ptr.hbm [resolvable:$true] %s1934
      %1940 = dma.vmem_to_hbm [thread:$0]  %s1933, 256, %s1935, [#allocation5], 128, 128, 8
    $region93: #{tpu_custom_call.1} parent=1 // pred_fallthru
      _
    // Predicated region
    $region94: #{tpu_custom_call.1} parent=1 // pred_check
      _
    $region95: #{tpu_custom_call.1} parent=1 // pred_check_branch
      %1942 = sbr.rel (0) target = $region97
    $region96: #{tpu_custom_call.1} parent=1 // pred_region
      %1944 = vsyncadd [#allocation13], 0
      %s1945 = sshll.u32 [#allocation12], 4
      %s1946 = int_to_ptr.vmem [resolvable:$true] %s1945
      %s1947 = sshll.u32 %s19, 4
      %s1948 = int_to_ptr.hbm [resolvable:$true] %s1947
      %1953 = dma.vmem_to_hbm [thread:$0]  %s1946, 1024, %s1948, [#allocation13], 128, 128, 8
    $region97: #{tpu_custom_call.1} parent=1 // pred_fallthru
      _
    // Predicated region
    $region98: #{tpu_custom_call.1} parent=1 // pred_check
      _
    $region99: #{tpu_custom_call.1} parent=1 // pred_check_branch
      %1955 = sbr.rel (0) target = $region101
    $region100: #{tpu_custom_call.1} parent=1 // pred_region
      %1957 = dma.done [#allocation5], 256
    $region101: #{tpu_custom_call.1} parent=1 // pred_fallthru
      _
    // Predicated region
    $region102: #{tpu_custom_call.1} parent=1 // pred_check
      _
    $region103: #{tpu_custom_call.1} parent=1 // pred_check_branch
      %1959 = sbr.rel (0) target = $region105
    $region104: #{tpu_custom_call.1} parent=1 // pred_region
      %1961 = dma.done [#allocation13], 1024
    $region105: #{tpu_custom_call.1} parent=1 // pred_fallthru
      _
    %1962 = vsyncpa [#allocation4], 1
    %1963 = vsyncpa [#allocation7], 1
    %1964 = vsyncpa [#allocation10], 1
    %1965 = vsyncpa [#allocation5], 1
    %1966 = vsyncpa [#allocation13], 1

// kernel: tpu_custom_call.1
$region0: #{tpu_custom_call.1}
  #allocation0 [shape = 'u32[]', space=smem, size = 0x4, offset = 0x4, fixed_abs, tag = 'smem constant byte address 0x4 - core index']
  #allocation1 [shape = 'u32[72,128]{1,0:T(1,128)}', space=vmem, size = 0x9000, scoped, tag = 'internal scratch']
  #allocation2 [shape = 'bf16[16,32]{1,0:T(8,128)(2,1)}', space=vmem, size = 0x1000, scoped, tag = 'scratch operand']
  %s0 = inlined_call_operand.vmem [shape: f32[2,8,32], index: 0, kind: input, shape index: {}]
  %s1 = inlined_call_operand.vmem [shape: f32[2,1,8,8], index: 1, kind: input, shape index: {}]
  %s2 = inlined_call_operand.vmem [shape: bf16[32,32], index: 2, kind: input, shape index: {}]
  %s3 = inlined_call_operand.vmem [shape: f32[1,32], index: 3, kind: input, shape index: {}]
  %s4 = inlined_call_operand.hbm [shape: bf16[32,32], index: 4, kind: input, shape index: {}]
  %s5 = inlined_call_operand.vmem [shape: f32[1,32], index: 5, kind: input, shape index: {}]
  %s6 = inlined_call_operand.hbm [shape: bf16[32,32], index: 6, kind: input, shape index: {}]
  %s7 = inlined_call_operand.vmem [shape: f32[1,32], index: 7, kind: input, shape index: {}]
  %s8 = inlined_call_operand.hbm [shape: bf16[32,32], index: 8, kind: input, shape index: {}]
  %s9 = inlined_call_operand.vmem [shape: f32[1,32], index: 9, kind: input, shape index: {}]
  %s10 = inlined_call_operand.vmem [shape: f32[1,32], index: 10, kind: input, shape index: {}]
  %s11 = inlined_call_operand.vmem [shape: f32[1,32], index: 11, kind: input, shape index: {}]
  %s12 = inlined_call_operand.hbm [shape: bf16[32,64], index: 12, kind: input, shape index: {}]
  %s13 = inlined_call_operand.vmem [shape: f32[1,64], index: 13, kind: input, shape index: {}]
  %s14 = inlined_call_operand.vmem [shape: bf16[64,32], index: 14, kind: input, shape index: {}]
  %s15 = inlined_call_operand.vmem [shape: f32[1,32], index: 15, kind: input, shape index: {}]
  %s16 = inlined_call_operand.vmem [shape: f32[1,32], index: 16, kind: input, shape index: {}]
  %s17 = inlined_call_operand.vmem [shape: f32[1,32], index: 17, kind: input, shape index: {}]
  %s18 = inlined_call_operand.hbm [shape: f32[2,8,32], index: 18, kind: output, shape index: {0}]
  %s19 = inlined_call_operand.hbm [shape: f32[2,4,8,8], index: 19, kind: output, shape index: {1}]
  %20 = xla_tuple %s18, %s19
  %s21 = sld [smem:[#allocation0]]
  $region106: #{tpu_custom_call.1} parent=0
    _
  %s23 = ssub.s32 1, %s21
  %s24 = scalar_select 0, %s23, %s21
  $region1: #{tpu_custom_call.1} parent=0
    #allocation3 [shape = 'u8[8192]{0}', space=vmem, size = 0x2000, scoped, tag = 'input window, operand 4, single buffered']
    #allocation4 [shape = 's32[1]{0}', space=sflag, size = 0x4, scoped, tag = 'scoped memory for tpu_custom_call.1']
    #allocation5 [shape = 's32[1]{0}', space=sflag, size = 0x4, scoped, tag = 'scoped memory for tpu_custom_call.1']
    #allocation6 [shape = 'u8[8192]{0}', space=vmem, size = 0x2000, scoped, tag = 'input window, operand 6, single buffered']
    #allocation7 [shape = 's32[1]{0}', space=sflag, size = 0x4, scoped, tag = 'scoped memory for tpu_custom_call.1']
    #allocation8 [shape = 'u8[8192]{0}', space=vmem, size = 0x2000, scoped, tag = 'input window, operand 8, single buffered']
    #allocation9 [shape = 'u8[8192]{0}', space=vmem, size = 0x2000, scoped, tag = 'input window, operand 12, single buffered']
    #allocation10 [shape = 's32[1]{0}', space=sflag, size = 0x4, scoped, tag = 'scoped memory for tpu_custom_call.1']
    #allocation11 [shape = 'u8[8192]{0}', space=vmem, size = 0x2000, scoped, tag = 'output window, operand 0, single buffered']
    #allocation12 [shape = 'u8[32768]{0}', space=vmem, size = 0x8000, scoped, tag = 'output window, operand 1, single buffered']
    #allocation13 [shape = 's32[1]{0}', space=sflag, size = 0x4, scoped, tag = 'scoped memory for tpu_custom_call.1']
    %25 = vsyncpa [#allocation4], 0
    %26 = vsyncpa [#allocation7], 0
    %27 = vsyncpa [#allocation10], 0
    %28 = vsyncpa [#allocation5], 0
    %29 = vsyncpa [#allocation13], 0
    // Predicated region
    $region2: #{tpu_custom_call.1} parent=1 // pred_check
      _
    $region3: #{tpu_custom_call.1} parent=1 // pred_check_branch
      %31 = sbr.rel (0) target = $region5
    $region4: #{tpu_custom_call.1} parent=1 // pred_region
      _
    $region5: #{tpu_custom_call.1} parent=1 // pred_fallthru
      _
    // Predicated region
    $region6: #{tpu_custom_call.1} parent=1 // pred_check
      _
    $region7: #{tpu_custom_call.1} parent=1 // pred_check_branch
      %33 = sbr.rel (0) target = $region9
    $region8: #{tpu_custom_call.1} parent=1 // pred_region
      _
    $region9: #{tpu_custom_call.1} parent=1 // pred_fallthru
      _
    // Predicated region
    $region10: #{tpu_custom_call.1} parent=1 // pred_check
      _
    $region11: #{tpu_custom_call.1} parent=1 // pred_check_branch
      %35 = sbr.rel (0) target = $region13
    $region12: #{tpu_custom_call.1} parent=1 // pred_region
      _
    $region13: #{tpu_custom_call.1} parent=1 // pred_fallthru
      _
    // Predicated region
    $region14: #{tpu_custom_call.1} parent=1 // pred_check
      _
    $region15: #{tpu_custom_call.1} parent=1 // pred_check_branch
      %37 = sbr.rel (0) target = $region17
    $region16: #{tpu_custom_call.1} parent=1 // pred_region
      _
    $region17: #{tpu_custom_call.1} parent=1 // pred_fallthru
      _
    // Predicated region
    $region18: #{tpu_custom_call.1} parent=1 // pred_check
      _
    $region19: #{tpu_custom_call.1} parent=1 // pred_check_branch
      %39 = sbr.rel (0) target = $region21
    $region20: #{tpu_custom_call.1} parent=1 // pred_region
      %41 = vsyncadd [#allocation4], 0
      %s42 = sshll.u32 %s4, 4
      %s43 = int_to_ptr.hbm [resolvable:$true] %s42
      %s44 = sshll.u32 [#allocation3], 4
      %s45 = int_to_ptr.vmem [resolvable:$true] %s44
      %50 = dma.hbm_to_vmem [thread:$0]  %s43, 256, %s45, [#allocation4], 64, 64, 4
    $region21: #{tpu_custom_call.1} parent=1 // pred_fallthru
      _
    // Predicated region
    $region22: #{tpu_custom_call.1} parent=1 // pred_check
      _
    $region23: #{tpu_custom_call.1} parent=1 // pred_check_branch
      %52 = sbr.rel (0) target = $region25
    $region24: #{tpu_custom_call.1} parent=1 // pred_region
      _
    $region25: #{tpu_custom_call.1} parent=1 // pred_fallthru
      _
    // Predicated region
    $region26: #{tpu_custom_call.1} parent=1 // pred_check
      _
    $region27: #{tpu_custom_call.1} parent=1 // pred_check_branch
      %54 = sbr.rel (0) target = $region29
    $region28: #{tpu_custom_call.1} parent=1 // pred_region
      %56 = vsyncadd [#allocation7], 0
      %s57 = sshll.u32 %s6, 4
      %s58 = int_to_ptr.hbm [resolvable:$true] %s57
      %s59 = sshll.u32 [#allocation6], 4
      %s60 = int_to_ptr.vmem [resolvable:$true] %s59
      %65 = dma.hbm_to_vmem [thread:$0]  %s58, 256, %s60, [#allocation7], 64, 64, 4
    $region29: #{tpu_custom_call.1} parent=1 // pred_fallthru
      _
    // Predicated region
    $region30: #{tpu_custom_call.1} parent=1 // pred_check
      _
    $region31: #{tpu_custom_call.1} parent=1 // pred_check_branch
      %67 = sbr.rel (0) target = $region33
    $region32: #{tpu_custom_call.1} parent=1 // pred_region
      _
    $region33: #{tpu_custom_call.1} parent=1 // pred_fallthru
      _
    // Predicated region
    $region34: #{tpu_custom_call.1} parent=1 // pred_check
      _
    $region35: #{tpu_custom_call.1} parent=1 // pred_check_branch
      %69 = sbr.rel (0) target = $region37
    $region36: #{tpu_custom_call.1} parent=1 // pred_region
      %71 = vsyncadd [#allocation7], 0
      %s72 = sshll.u32 %s8, 4
      %s73 = int_to_ptr.hbm [resolvable:$true] %s72
      %s74 = sshll.u32 [#allocation8], 4
      %s75 = int_to_ptr.vmem [resolvable:$true] %s74
      %80 = dma.hbm_to_vmem [thread:$0]  %s73, 256, %s75, [#allocation7], 64, 64, 4
    $region37: #{tpu_custom_call.1} parent=1 // pred_fallthru
      _
    // Predicated region
    $region38: #{tpu_custom_call.1} parent=1 // pred_check
      _
    $region39: #{tpu_custom_call.1} parent=1 // pred_check_branch
      %82 = sbr.rel (0) target = $region41
    $region40: #{tpu_custom_call.1} parent=1 // pred_region
      _
    $region41: #{tpu_custom_call.1} parent=1 // pred_fallthru
      _
    // Predicated region
    $region42: #{tpu_custom_call.1} parent=1 // pred_check
      _
    $region43: #{tpu_custom_call.1} parent=1 // pred_check_branch
      %84 = sbr.rel (0) target = $region45
    $region44: #{tpu_custom_call.1} parent=1 // pred_region
      _
    $region45: #{tpu_custom_call.1} parent=1 // pred_fallthru
      _
    // Predicated region
    $region46: #{tpu_custom_call.1} parent=1 // pred_check
      _
    $region47: #{tpu_custom_call.1} parent=1 // pred_check_branch
      %86 = sbr.rel (0) target = $region49
    $region48: #{tpu_custom_call.1} parent=1 // pred_region
      _
    $region49: #{tpu_custom_call.1} parent=1 // pred_fallthru
      _
    // Predicated region
    $region50: #{tpu_custom_call.1} parent=1 // pred_check
      _
    $region51: #{tpu_custom_call.1} parent=1 // pred_check_branch
      %88 = sbr.rel (0) target = $region53
    $region52: #{tpu_custom_call.1} parent=1 // pred_region
      %90 = vsyncadd [#allocation10], 0
      %s91 = sshll.u32 %s12, 4
      %s92 = int_to_ptr.hbm [resolvable:$true] %s91
      %s93 = sshll.u32 [#allocation9], 4
      %s94 = int_to_ptr.vmem [resolvable:$true] %s93
      %99 = dma.hbm_to_vmem [thread:$0]  %s92, 256, %s94, [#allocation10], 64, 64, 4
    $region53: #{tpu_custom_call.1} parent=1 // pred_fallthru
      _
    // Predicated region
    $region54: #{tpu_custom_call.1} parent=1 // pred_check
      _
    $region55: #{tpu_custom_call.1} parent=1 // pred_check_branch
      %101 = sbr.rel (0) target = $region57
    $region56: #{tpu_custom_call.1} parent=1 // pred_region
      _
    $region57: #{tpu_custom_call.1} parent=1 // pred_fallthru
      _
    // Predicated region
    $region58: #{tpu_custom_call.1} parent=1 // pred_check
      _
    $region59: #{tpu_custom_call.1} parent=1 // pred_check_branch
      %103 = sbr.rel (0) target = $region61
    $region60: #{tpu_custom_call.1} parent=1 // pred_region
      _
    $region61: #{tpu_custom_call.1} parent=1 // pred_fallthru
      _
    // Predicated region
    $region62: #{tpu_custom_call.1} parent=1 // pred_check
      _
    $region63: #{tpu_custom_call.1} parent=1 // pred_check_branch
      %105 = sbr.rel (0) target = $region65
    $region64: #{tpu_custom_call.1} parent=1 // pred_region
      _
    $region65: #{tpu_custom_call.1} parent=1 // pred_fallthru
      _
    // Predicated region
    $region66: #{tpu_custom_call.1} parent=1 // pred_check
      _
    $region67: #{tpu_custom_call.1} parent=1 // pred_check_branch
      %107 = sbr.rel (0) target = $region69
    $region68: #{tpu_custom_call.1} parent=1 // pred_region
      _
    $region69: #{tpu_custom_call.1} parent=1 // pred_fallthru
      _
    // Predicated region
    $region70: #{tpu_custom_call.1} parent=1 // pred_check
      _
    $region71: #{tpu_custom_call.1} parent=1 // pred_check_branch
      %109 = sbr.rel (0) target = $region73
    $region72: #{tpu_custom_call.1} parent=1 // pred_region
      _
    $region73: #{tpu_custom_call.1} parent=1 // pred_fallthru
      _
    // Predicated region
    $region74: #{tpu_custom_call.1} parent=1 // pred_check
      _
    $region75: #{tpu_custom_call.1} parent=1 // pred_check_branch
      %111 = sbr.rel (0) target = $region77
    $region76: #{tpu_custom_call.1} parent=1 // pred_region
      %113 = dma.done [#allocation4], 256
    $region77: #{tpu_custom_call.1} parent=1 // pred_fallthru
      _
    // Predicated region
    $region78: #{tpu_custom_call.1} parent=1 // pred_check
      _
    $region79: #{tpu_custom_call.1} parent=1 // pred_check_branch
      %115 = sbr.rel (0) target = $region81
    $region80: #{tpu_custom_call.1} parent=1 // pred_region
      %117 = dma.done [#allocation7], 256
    $region81: #{tpu_custom_call.1} parent=1 // pred_fallthru
      _
    // Predicated region
    $region82: #{tpu_custom_call.1} parent=1 // pred_check
      _
    $region83: #{tpu_custom_call.1} parent=1 // pred_check_branch
      %119 = sbr.rel (0) target = $region85
    $region84: #{tpu_custom_call.1} parent=1 // pred_region
      %121 = dma.done [#allocation7], 256
    $region85: #{tpu_custom_call.1} parent=1 // pred_fallthru
      _
    // Predicated region
    $region86: #{tpu_custom_call.1} parent=1 // pred_check
      _
    $region87: #{tpu_custom_call.1} parent=1 // pred_check_branch
      %123 = sbr.rel (0) target = $region89
    $region88: #{tpu_custom_call.1} parent=1 // pred_region
      %125 = dma.done [#allocation10], 256
    $region89: #{tpu_custom_call.1} parent=1 // pred_fallthru
      _
    %v127 = vld [vmem:[%s0] sm:$0xff]
    %v128 = vld [vmem:[%s0 + $0x8] sm:$0xff]
    %v129 = vpack.c.bf16 %v128, %v127
    %v130 = vld [vmem:[%s2] sm:$0xf]
    %v131 = vld [vmem:[%s2 + $0x4] sm:$0xf]
    %v132 = vld [vmem:[%s2 + $0x8] sm:$0xf]
    %v133 = vld [vmem:[%s2 + $0xc] sm:$0xf]
    %v134 = vld [vmem:[%s3] sm:$0x1]
    %v136 = vperm.slane %v134, 0
    %v142 = vunpack.c.l.b16 %v130
    %v143 = vunpack.c.l.b16 %v131
    %v144 = vunpack.c.l.b16 %v132
    %v145 = vunpack.c.l.b16 %v133
    %v146 = vpack.c.b16 %v143, %v142
    %v147 = vpack.c.b16 %v145, %v144
    %vm150 = vcmask 261120
    %v152 = vsel %vm150, %v129, 0
    %154 = vmatpush.bf16.msra.mxu0 0
    %155 = vmatpush.bf16.msra.mxu0 0
    %156 = vmatpush.bf16.msra.mxu0 0
    %157 = vmatpush.bf16.msra.mxu0 0
    %158 = vmatpush.bf16.msra.mxu0 0
    %159 = vmatpush.bf16.msra.mxu0 0
    %160 = vmatpush.bf16.msra.mxu0 %v147
    %161 = vmatpush.bf16.msra.mxu0 %v146
    %162 = vmatmul.bf16.gmra.mxu0 %v152
    %v163 = vpop.f32.mrf.mxu0
    %v164 = vadd.f32 %v136, %v163
    %v165 = vpop.f32.mrf.mxu0
    %v166 = vadd.f32 %v136, %v165
    %167 = vdwg.mxu0
    %v168 = vpack.c.bf16 %v164, %v164
    %v169 = vpack.c.bf16 %v166, %v166
    %v170 = vld [vmem:[#allocation3] sm:$0xf]
    %v171 = vld [vmem:[#allocation3 + $0x4] sm:$0xf]
    %v172 = vld [vmem:[#allocation3 + $0x8] sm:$0xf]
    %v173 = vld [vmem:[#allocation3 + $0xc] sm:$0xf]
    %v174 = vld [vmem:[%s5] sm:$0x1]
    %v176 = vperm.slane %v174, 0
    %v182 = vunpack.c.l.b16 %v170
    %v183 = vunpack.c.l.b16 %v171
    %v184 = vunpack.c.l.b16 %v172
    %v185 = vunpack.c.l.b16 %v173
    %v186 = vpack.c.b16 %v183, %v182
    %v187 = vpack.c.b16 %v185, %v184
    %190 = vmatpush.bf16.msra.mxu0 0
    %191 = vmatpush.bf16.msra.mxu0 0
    %192 = vmatpush.bf16.msra.mxu0 0
    %193 = vmatpush.bf16.msra.mxu0 0
    %194 = vmatpush.bf16.msra.mxu0 0
    %195 = vmatpush.bf16.msra.mxu0 0
    %196 = vmatpush.bf16.msra.mxu0 %v187
    %197 = vmatpush.bf16.msra.mxu0 %v186
    %198 = vmatmul.bf16.gmra.mxu0 %v152
    %v199 = vpop.f32.mrf.mxu0
    %v200 = vadd.f32 %v176, %v199
    %v201 = vpop.f32.mrf.mxu0
    %v202 = vadd.f32 %v176, %v201
    %203 = vdwg.mxu0
    %v204 = vpack.c.bf16 %v200, %v200
    %v205 = vpack.c.bf16 %v202, %v202
    %v206 = vld [vmem:[#allocation6] sm:$0xf]
    %v207 = vld [vmem:[#allocation6 + $0x4] sm:$0xf]
    %v208 = vld [vmem:[#allocation6 + $0x8] sm:$0xf]
    %v209 = vld [vmem:[#allocation6 + $0xc] sm:$0xf]
    %v210 = vld [vmem:[%s7] sm:$0x1]
    %v212 = vperm.slane %v210, 0
    %v218 = vunpack.c.l.b16 %v206
    %v219 = vunpack.c.l.b16 %v207
    %v220 = vunpack.c.l.b16 %v208
    %v221 = vunpack.c.l.b16 %v209
    %v222 = vpack.c.b16 %v219, %v218
    %v223 = vpack.c.b16 %v221, %v220
    %226 = vmatpush.bf16.msra.mxu0 0
    %227 = vmatpush.bf16.msra.mxu0 0
    %228 = vmatpush.bf16.msra.mxu0 0
    %229 = vmatpush.bf16.msra.mxu0 0
    %230 = vmatpush.bf16.msra.mxu0 0
    %231 = vmatpush.bf16.msra.mxu0 0
    %232 = vmatpush.bf16.msra.mxu0 %v223
    %233 = vmatpush.bf16.msra.mxu0 %v222
    %234 = vmatmul.bf16.gmra.mxu0 %v152
    %v235 = vpop.f32.mrf.mxu0
    %v236 = vadd.f32 %v212, %v235
    %v237 = vpop.f32.mrf.mxu0
    %v238 = vadd.f32 %v212, %v237
    %239 = vdwg.mxu0
    %v240 = vpack.c.bf16 %v236, %v236
    %v241 = vpack.c.bf16 %v238, %v238
    %243 = vrot.lane.b32.xlu0 %v168, 120
    %v244 = vpop.permute.xlu0 %243
    %245 = vrot.lane.b32.xlu0 %v168, 112
    %v246 = vpop.permute.xlu0 %245
    %247 = vrot.lane.b32.xlu0 %v168, 104
    %v248 = vpop.permute.xlu0 %247
    %v251 = vpack.i.b16 %v244, %v168
    %v252 = vshrl.u32 %v168, 16
    %v253 = vshrl.u32 %v244, 16
    %v254 = vpack.i.b16 %v253, %v252
    %v257 = vpack.i.b16 %v248, %v246
    %v258 = vshrl.u32 %v246, 16
    %v259 = vshrl.u32 %v248, 16
    %v260 = vpack.i.b16 %v259, %v258
    %v263 = vunpack.c.l.s4 1983009808
    %v264 = vunpack.c.0.s8 %v263
    %v265 = vperm.slane %v251, %v264
    %v268 = vunpack.c.l.s4 1983009808
    %v269 = vunpack.c.0.s8 %v268
    %v270 = vperm.slane %v257, %v269
    %v271 = vrot.slane %v270, 4
    %vm272 = vcmask 1047556
    %v273 = vsel %vm272, %v271, %v265
    %v274 = vrot.slane %v265, 4
    %v275 = vsel %vm272, %v270, %v274
    %v277 = vunpack.c.l.s4 1934713408
    %v278 = vunpack.c.0.s8 %v277
    %v279 = vperm.slane %v273, %v278
    %v281 = vunpack.c.l.s4 1934713408
    %v282 = vunpack.c.0.s8 %v281
    %v283 = vperm.slane %v275, %v282
    %v284 = vrot.slane %v279, 4
    %v285 = vsel %vm272, 0, %v284
    %v286 = vrot.slane %v283, 4
    %v287 = vsel %vm272, 0, %v286
    %v290 = vunpack.c.l.s4 1983009808
    %v291 = vunpack.c.0.s8 %v290
    %v292 = vperm.slane %v254, %v291
    %v295 = vunpack.c.l.s4 1983009808
    %v296 = vunpack.c.0.s8 %v295
    %v297 = vperm.slane %v260, %v296
    %v298 = vrot.slane %v297, 4
    %v299 = vsel %vm272, %v298, %v292
    %v300 = vrot.slane %v292, 4
    %v301 = vsel %vm272, %v297, %v300
    %v303 = vunpack.c.l.s4 1934713408
    %v304 = vunpack.c.0.s8 %v303
    %v305 = vperm.slane %v299, %v304
    %v307 = vunpack.c.l.s4 1934713408
    %v308 = vunpack.c.0.s8 %v307
    %v309 = vperm.slane %v301, %v308
    %v310 = vrot.slane %v305, 4
    %v311 = vsel %vm272, 0, %v310
    %v312 = vrot.slane %v309, 4
    %v313 = vsel %vm272, 0, %v312
    %v314 = vsel %vm272, %v286, %v279
    %v316 = vunpack.c.l.s4 1983009808
    %v317 = vunpack.c.0.s8 %v316
    %v318 = vperm.slane %v314, %v317
    %v319 = vrot.slane %v287, 4
    %v320 = vsel %vm272, %v319, %v285
    %v322 = vunpack.c.l.s4 1983009808
    %v323 = vunpack.c.0.s8 %v322
    %v324 = vperm.slane %v320, %v323
    %v325 = vrot.slane %v324, 4
    %v326 = vsel %vm272, %v325, %v318
    %v328 = vunpack.c.l.s4 1934713408
    %v329 = vunpack.c.0.s8 %v328
    %v330 = vperm.slane %v326, %v329
    %v331 = vrot.slane %v330, 4
    %v332 = vsel %vm272, 0, %v331
    %v333 = vsel %vm272, %v312, %v305
    %v335 = vunpack.c.l.s4 1983009808
    %v336 = vunpack.c.0.s8 %v335
    %v337 = vperm.slane %v333, %v336
    %v338 = vrot.slane %v313, 4
    %v339 = vsel %vm272, %v338, %v311
    %v341 = vunpack.c.l.s4 1983009808
    %v342 = vunpack.c.0.s8 %v341
    %v343 = vperm.slane %v339, %v342
    %v344 = vrot.slane %v343, 4
    %v345 = vsel %vm272, %v344, %v337
    %v347 = vunpack.c.l.s4 1934713408
    %v348 = vunpack.c.0.s8 %v347
    %v349 = vperm.slane %v345, %v348
    %v350 = vrot.slane %v349, 4
    %v351 = vsel %vm272, 0, %v350
    %v354 = vpack.i.b16 %v349, %v330
    %v355 = vshrl.u32 %v330, 16
    %v356 = vshrl.u32 %v349, 16
    %v357 = vpack.i.b16 %v356, %v355
    %v360 = vpack.i.b16 %v351, %v332
    %v361 = vshrl.u32 %v332, 16
    %v362 = vshrl.u32 %v351, 16
    %v363 = vpack.i.b16 %v362, %v361
    %365 = vrot.lane.b32.xlu0 %v204, 120
    %v366 = vpop.permute.xlu0 %365
    %367 = vrot.lane.b32.xlu0 %v204, 112
    %v368 = vpop.permute.xlu0 %367
    %369 = vrot.lane.b32.xlu0 %v204, 104
    %v370 = vpop.permute.xlu0 %369
    %v373 = vpack.i.b16 %v366, %v204
    %v374 = vshrl.u32 %v204, 16
    %v375 = vshrl.u32 %v366, 16
    %v376 = vpack.i.b16 %v375, %v374
    %v379 = vpack.i.b16 %v370, %v368
    %v380 = vshrl.u32 %v368, 16
    %v381 = vshrl.u32 %v370, 16
    %v382 = vpack.i.b16 %v381, %v380
    %v385 = vunpack.c.l.s4 1983009808
    %v386 = vunpack.c.0.s8 %v385
    %v387 = vperm.slane %v373, %v386
    %v390 = vunpack.c.l.s4 1983009808
    %v391 = vunpack.c.0.s8 %v390
    %v392 = vperm.slane %v379, %v391
    %v393 = vrot.slane %v392, 4
    %v394 = vsel %vm272, %v393, %v387
    %v395 = vrot.slane %v387, 4
    %v396 = vsel %vm272, %v392, %v395
    %v398 = vunpack.c.l.s4 1934713408
    %v399 = vunpack.c.0.s8 %v398
    %v400 = vperm.slane %v394, %v399
    %v402 = vunpack.c.l.s4 1934713408
    %v403 = vunpack.c.0.s8 %v402
    %v404 = vperm.slane %v396, %v403
    %v405 = vrot.slane %v400, 4
    %v406 = vsel %vm272, 0, %v405
    %v407 = vrot.slane %v404, 4
    %v408 = vsel %vm272, 0, %v407
    %v411 = vunpack.c.l.s4 1983009808
    %v412 = vunpack.c.0.s8 %v411
    %v413 = vperm.slane %v376, %v412
    %v416 = vunpack.c.l.s4 1983009808
    %v417 = vunpack.c.0.s8 %v416
    %v418 = vperm.slane %v382, %v417
    %v419 = vrot.slane %v418, 4
    %v420 = vsel %vm272, %v419, %v413
    %v421 = vrot.slane %v413, 4
    %v422 = vsel %vm272, %v418, %v421
    %v424 = vunpack.c.l.s4 1934713408
    %v425 = vunpack.c.0.s8 %v424
    %v426 = vperm.slane %v420, %v425
    %v428 = vunpack.c.l.s4 1934713408
    %v429 = vunpack.c.0.s8 %v428
    %v430 = vperm.slane %v422, %v429
    %v431 = vrot.slane %v426, 4
    %v432 = vsel %vm272, 0, %v431
    %v433 = vrot.slane %v430, 4
    %v434 = vsel %vm272, 0, %v433
    %v435 = vsel %vm272, %v407, %v400
    %v437 = vunpack.c.l.s4 1983009808
    %v438 = vunpack.c.0.s8 %v437
    %v439 = vperm.slane %v435, %v438
    %v440 = vrot.slane %v408, 4
    %v441 = vsel %vm272, %v440, %v406
    %v443 = vunpack.c.l.s4 1983009808
    %v444 = vunpack.c.0.s8 %v443
    %v445 = vperm.slane %v441, %v444
    %v446 = vrot.slane %v445, 4
    %v447 = vsel %vm272, %v446, %v439
    %v449 = vunpack.c.l.s4 1934713408
    %v450 = vunpack.c.0.s8 %v449
    %v451 = vperm.slane %v447, %v450
    %v452 = vrot.slane %v451, 4
    %v453 = vsel %vm272, 0, %v452
    %v454 = vsel %vm272, %v433, %v426
    %v456 = vunpack.c.l.s4 1983009808
    %v457 = vunpack.c.0.s8 %v456
    %v458 = vperm.slane %v454, %v457
    %v459 = vrot.slane %v434, 4
    %v460 = vsel %vm272, %v459, %v432
    %v462 = vunpack.c.l.s4 1983009808
    %v463 = vunpack.c.0.s8 %v462
    %v464 = vperm.slane %v460, %v463
    %v465 = vrot.slane %v464, 4
    %v466 = vsel %vm272, %v465, %v458
    %v468 = vunpack.c.l.s4 1934713408
    %v469 = vunpack.c.0.s8 %v468
    %v470 = vperm.slane %v466, %v469
    %v471 = vrot.slane %v470, 4
    %v472 = vsel %vm272, 0, %v471
    %v475 = vpack.i.b16 %v470, %v451
    %v476 = vshrl.u32 %v451, 16
    %v477 = vshrl.u32 %v470, 16
    %v478 = vpack.i.b16 %v477, %v476
    %v481 = vpack.i.b16 %v472, %v453
    %v482 = vshrl.u32 %v453, 16
    %v483 = vshrl.u32 %v472, 16
    %v484 = vpack.i.b16 %v483, %v482
    %486 = vrot.lane.b32.xlu0 %v240, 120
    %v487 = vpop.permute.xlu0 %486
    %488 = vrot.lane.b32.xlu0 %v240, 112
    %v489 = vpop.permute.xlu0 %488
    %490 = vrot.lane.b32.xlu0 %v240, 104
    %v491 = vpop.permute.xlu0 %490
    %v494 = vpack.i.b16 %v487, %v240
    %v495 = vshrl.u32 %v240, 16
    %v496 = vshrl.u32 %v487, 16
    %v497 = vpack.i.b16 %v496, %v495
    %v500 = vpack.i.b16 %v491, %v489
    %v501 = vshrl.u32 %v489, 16
    %v502 = vshrl.u32 %v491, 16
    %v503 = vpack.i.b16 %v502, %v501
    %v506 = vunpack.c.l.s4 1983009808
    %v507 = vunpack.c.0.s8 %v506
    %v508 = vperm.slane %v494, %v507
    %v511 = vunpack.c.l.s4 1983009808
    %v512 = vunpack.c.0.s8 %v511
    %v513 = vperm.slane %v500, %v512
    %v514 = vrot.slane %v513, 4
    %v515 = vsel %vm272, %v514, %v508
    %v516 = vrot.slane %v508, 4
    %v517 = vsel %vm272, %v513, %v516
    %v519 = vunpack.c.l.s4 1934713408
    %v520 = vunpack.c.0.s8 %v519
    %v521 = vperm.slane %v515, %v520
    %v523 = vunpack.c.l.s4 1934713408
    %v524 = vunpack.c.0.s8 %v523
    %v525 = vperm.slane %v517, %v524
    %v526 = vrot.slane %v521, 4
    %v527 = vsel %vm272, 0, %v526
    %v528 = vrot.slane %v525, 4
    %v529 = vsel %vm272, 0, %v528
    %v532 = vunpack.c.l.s4 1983009808
    %v533 = vunpack.c.0.s8 %v532
    %v534 = vperm.slane %v497, %v533
    %v537 = vunpack.c.l.s4 1983009808
    %v538 = vunpack.c.0.s8 %v537
    %v539 = vperm.slane %v503, %v538
    %v540 = vrot.slane %v539, 4
    %v541 = vsel %vm272, %v540, %v534
    %v542 = vrot.slane %v534, 4
    %v543 = vsel %vm272, %v539, %v542
    %v545 = vunpack.c.l.s4 1934713408
    %v546 = vunpack.c.0.s8 %v545
    %v547 = vperm.slane %v541, %v546
    %v549 = vunpack.c.l.s4 1934713408
    %v550 = vunpack.c.0.s8 %v549
    %v551 = vperm.slane %v543, %v550
    %v552 = vrot.slane %v547, 4
    %v553 = vsel %vm272, 0, %v552
    %v554 = vrot.slane %v551, 4
    %v555 = vsel %vm272, 0, %v554
    %v556 = vsel %vm272, %v528, %v521
    %v558 = vunpack.c.l.s4 1983009808
    %v559 = vunpack.c.0.s8 %v558
    %v560 = vperm.slane %v556, %v559
    %v561 = vrot.slane %v529, 4
    %v562 = vsel %vm272, %v561, %v527
    %v564 = vunpack.c.l.s4 1983009808
    %v565 = vunpack.c.0.s8 %v564
    %v566 = vperm.slane %v562, %v565
    %v567 = vrot.slane %v566, 4
    %v568 = vsel %vm272, %v567, %v560
    %v570 = vunpack.c.l.s4 1934713408
    %v571 = vunpack.c.0.s8 %v570
    %v572 = vperm.slane %v568, %v571
    %v573 = vrot.slane %v572, 4
    %v574 = vsel %vm272, 0, %v573
    %v575 = vsel %vm272, %v554, %v547
    %v577 = vunpack.c.l.s4 1983009808
    %v578 = vunpack.c.0.s8 %v577
    %v579 = vperm.slane %v575, %v578
    %v580 = vrot.slane %v555, 4
    %v581 = vsel %vm272, %v580, %v553
    %v583 = vunpack.c.l.s4 1983009808
    %v584 = vunpack.c.0.s8 %v583
    %v585 = vperm.slane %v581, %v584
    %v586 = vrot.slane %v585, 4
    %v587 = vsel %vm272, %v586, %v579
    %v589 = vunpack.c.l.s4 1934713408
    %v590 = vunpack.c.0.s8 %v589
    %v591 = vperm.slane %v587, %v590
    %v592 = vrot.slane %v591, 4
    %v593 = vsel %vm272, 0, %v592
    %v596 = vpack.i.b16 %v591, %v572
    %v597 = vshrl.u32 %v572, 16
    %v598 = vshrl.u32 %v591, 16
    %v599 = vpack.i.b16 %v598, %v597
    %v602 = vpack.i.b16 %v593, %v574
    %v603 = vshrl.u32 %v574, 16
    %v604 = vshrl.u32 %v593, 16
    %v605 = vpack.i.b16 %v604, %v603
    %v606 = vld [vmem:[%s1] sm:$0xff]
    %vm607 = vcmask 64512
    %v609 = vsel %vm607, %v354, 0
    %v612 = vsel %vm607, %v475, 0
    %614 = vmatpush.bf16.xpose.msra.mxu0 0
    %615 = vmatpush.bf16.xpose.msra.mxu0 0
    %616 = vmatpush.bf16.xpose.msra.mxu0 0
    %617 = vmatpush.bf16.xpose.msra.mxu0 0
    %618 = vmatpush.bf16.xpose.msra.mxu0 0
    %619 = vmatpush.bf16.xpose.msra.mxu0 0
    %620 = vmatpush.bf16.xpose.msra.mxu0 0
    %621 = vmatpush.bf16.xpose.msra.mxu0 %v612
    %622 = vmatmul.bf16.gmra.mxu0 %v609
    %v623 = vpop.f32.mrf.mxu0
    %v624 = vadd.f32 %v606, %v623
    %v625 = vpop.f32.mrf.mxu0
    %626 = vdwg.mxu0
    %v628 = vsel %vm607, %v357, 0
    %v631 = vsel %vm607, %v478, 0
    %633 = vmatpush.bf16.xpose.msra.mxu0 0
    %634 = vmatpush.bf16.xpose.msra.mxu0 0
    %635 = vmatpush.bf16.xpose.msra.mxu0 0
    %636 = vmatpush.bf16.xpose.msra.mxu0 0
    %637 = vmatpush.bf16.xpose.msra.mxu0 0
    %638 = vmatpush.bf16.xpose.msra.mxu0 0
    %639 = vmatpush.bf16.xpose.msra.mxu0 0
    %640 = vmatpush.bf16.xpose.msra.mxu0 %v631
    %641 = vmatmul.bf16.gmra.mxu0 %v628
    %v642 = vpop.f32.mrf.mxu0
    %v643 = vadd.f32 %v606, %v642
    %v644 = vpop.f32.mrf.mxu0
    %645 = vdwg.mxu0
    %v647 = vsel %vm607, %v360, 0
    %v650 = vsel %vm607, %v481, 0
    %652 = vmatpush.bf16.xpose.msra.mxu0 0
    %653 = vmatpush.bf16.xpose.msra.mxu0 0
    %654 = vmatpush.bf16.xpose.msra.mxu0 0
    %655 = vmatpush.bf16.xpose.msra.mxu0 0
    %656 = vmatpush.bf16.xpose.msra.mxu0 0
    %657 = vmatpush.bf16.xpose.msra.mxu0 0
    %658 = vmatpush.bf16.xpose.msra.mxu0 0
    %659 = vmatpush.bf16.xpose.msra.mxu0 %v650
    %660 = vmatmul.bf16.gmra.mxu0 %v647
    %v661 = vpop.f32.mrf.mxu0
    %v662 = vadd.f32 %v606, %v661
    %v663 = vpop.f32.mrf.mxu0
    %664 = vdwg.mxu0
    %v666 = vsel %vm607, %v363, 0
    %v669 = vsel %vm607, %v484, 0
    %671 = vmatpush.bf16.xpose.msra.mxu0 0
    %672 = vmatpush.bf16.xpose.msra.mxu0 0
    %673 = vmatpush.bf16.xpose.msra.mxu0 0
    %674 = vmatpush.bf16.xpose.msra.mxu0 0
    %675 = vmatpush.bf16.xpose.msra.mxu0 0
    %676 = vmatpush.bf16.xpose.msra.mxu0 0
    %677 = vmatpush.bf16.xpose.msra.mxu0 0
    %678 = vmatpush.bf16.xpose.msra.mxu0 %v669
    %679 = vmatmul.bf16.gmra.mxu0 %v666
    %v680 = vpop.f32.mrf.mxu0
    %v681 = vadd.f32 %v606, %v680
    %v682 = vpop.f32.mrf.mxu0
    %683 = vdwg.mxu0
    %v684 = vsel %vm607, %v624, -inf
    %685 = vmax.xlane.f32.xlu0 %v684
    %v686 = vpop.xlane.xlu0 %685
    %v687 = vsel %vm607, %v643, -inf
    %688 = vmax.xlane.f32.xlu0 %v687
    %v689 = vpop.xlane.xlu0 %688
    %v690 = vsel %vm607, %v662, -inf
    %691 = vmax.xlane.f32.xlu0 %v690
    %v692 = vpop.xlane.xlu0 %691
    %v693 = vsel %vm607, %v681, -inf
    %694 = vmax.xlane.f32.xlu0 %v693
    %v695 = vpop.xlane.xlu0 %694
    %v696 = vsub.f32 %v624, %v686
    %v697 = vsub.f32 %v643, %v689
    %v698 = vsub.f32 %v662, %v692
    %v699 = vsub.f32 %v681, %v695
    %v700 = vmul.f32 %v696, 1.442695
    %v701 = vpow.pop %v700
    %v702 = vmul.f32 %v697, 1.442695
    %v703 = vpow.pop %v702
    %v704 = vmul.f32 %v698, 1.442695
    %v705 = vpow.pop %v704
    %v706 = vmul.f32 %v699, 1.442695
    %v707 = vpow.pop %v706
    %v708 = vsel %vm607, %v701, 0.0
    %709 = vadd.xlane.f32.xlu0 %v708
    %v710 = vpop.xlane.xlu0 %709
    %v711 = vsel %vm607, %v703, 0.0
    %712 = vadd.xlane.f32.xlu0 %v711
    %v713 = vpop.xlane.xlu0 %712
    %v714 = vsel %vm607, %v705, 0.0
    %715 = vadd.xlane.f32.xlu0 %v714
    %v716 = vpop.xlane.xlu0 %715
    %v717 = vsel %vm607, %v707, 0.0
    %718 = vadd.xlane.f32.xlu0 %v717
    %v719 = vpop.xlane.xlu0 %718
    %v720 = vrcp.pop %v710
    %v721 = vrcp.pop %v713
    %v722 = vrcp.pop %v716
    %v723 = vrcp.pop %v719
    %v724 = vmul.f32 %v701, %v720
    %v725 = vmul.f32 %v703, %v721
    %v726 = vmul.f32 %v705, %v722
    %v727 = vmul.f32 %v707, %v723
    %728 = vst.msk [vmem:[#allocation12] sm:$0xff] %vm607, %v724
    %729 = vst.msk [vmem:[#allocation12 + $0x8] sm:$0xff] %vm607, %v725
    %730 = vst.msk [vmem:[#allocation12 + $0x10] sm:$0xff] %vm607, %v726
    %731 = vst.msk [vmem:[#allocation12 + $0x18] sm:$0xff] %vm607, %v727
    %v732 = vpack.c.bf16 %v724, %v724
    %v733 = vpack.c.bf16 %v725, %v725
    %v734 = vpack.c.bf16 %v726, %v726
    %v735 = vpack.c.bf16 %v727, %v727
    %v737 = vsel %vm607, %v732, 0
    %vm739 = vcmask 1043456
    %v741 = vsel %vm739, %v596, 0
    %743 = vmatpush.bf16.msra.mxu0 0
    %744 = vmatpush.bf16.msra.mxu0 0
    %745 = vmatpush.bf16.msra.mxu0 0
    %746 = vmatpush.bf16.msra.mxu0 0
    %747 = vmatpush.bf16.msra.mxu0 0
    %748 = vmatpush.bf16.msra.mxu0 0
    %749 = vmatpush.bf16.msra.mxu0 0
    %750 = vmatpush.bf16.msra.mxu0 %v741
    %751 = vmatmul.bf16.gmra.mxu0 %v737
    %v752 = vpop.f32.mrf.mxu0
    %v753 = vadd.f32 0.0, %v752
    %v754 = vpop.f32.mrf.mxu0
    %755 = vdwg.mxu0
    %v757 = vsel %vm607, %v733, 0
    %v760 = vsel %vm739, %v599, 0
    %762 = vmatpush.bf16.msra.mxu0 0
    %763 = vmatpush.bf16.msra.mxu0 0
    %764 = vmatpush.bf16.msra.mxu0 0
    %765 = vmatpush.bf16.msra.mxu0 0
    %766 = vmatpush.bf16.msra.mxu0 0
    %767 = vmatpush.bf16.msra.mxu0 0
    %768 = vmatpush.bf16.msra.mxu0 0
    %769 = vmatpush.bf16.msra.mxu0 %v760
    %770 = vmatmul.bf16.gmra.mxu0 %v757
    %v771 = vpop.f32.mrf.mxu0
    %v772 = vadd.f32 0.0, %v771
    %v773 = vpop.f32.mrf.mxu0
    %774 = vdwg.mxu0
    %v776 = vsel %vm607, %v734, 0
    %v779 = vsel %vm739, %v602, 0
    %781 = vmatpush.bf16.msra.mxu0 0
    %782 = vmatpush.bf16.msra.mxu0 0
    %783 = vmatpush.bf16.msra.mxu0 0
    %784 = vmatpush.bf16.msra.mxu0 0
    %785 = vmatpush.bf16.msra.mxu0 0
    %786 = vmatpush.bf16.msra.mxu0 0
    %787 = vmatpush.bf16.msra.mxu0 0
    %788 = vmatpush.bf16.msra.mxu0 %v779
    %789 = vmatmul.bf16.gmra.mxu0 %v776
    %v790 = vpop.f32.mrf.mxu0
    %v791 = vadd.f32 0.0, %v790
    %v792 = vpop.f32.mrf.mxu0
    %793 = vdwg.mxu0
    %v795 = vsel %vm607, %v735, 0
    %v798 = vsel %vm739, %v605, 0
    %800 = vmatpush.bf16.msra.mxu0 0
    %801 = vmatpush.bf16.msra.mxu0 0
    %802 = vmatpush.bf16.msra.mxu0 0
    %803 = vmatpush.bf16.msra.mxu0 0
    %804 = vmatpush.bf16.msra.mxu0 0
    %805 = vmatpush.bf16.msra.mxu0 0
    %806 = vmatpush.bf16.msra.mxu0 0
    %807 = vmatpush.bf16.msra.mxu0 %v798
    %808 = vmatmul.bf16.gmra.mxu0 %v795
    %v809 = vpop.f32.mrf.mxu0
    %v810 = vadd.f32 0.0, %v809
    %v811 = vpop.f32.mrf.mxu0
    %812 = vdwg.mxu0
    %v813 = vpack.c.bf16 %v753, %v753
    %v814 = vpack.c.bf16 %v772, %v772
    %v815 = vpack.c.bf16 %v791, %v791
    %v816 = vpack.c.bf16 %v810, %v810
    %v819 = vpack.i.b16 %v814, %v813
    %v820 = vshrl.u32 %v813, 16
    %v821 = vshrl.u32 %v814, 16
    %v822 = vpack.i.b16 %v821, %v820
    %v825 = vpack.i.b16 %v816, %v815
    %v826 = vshrl.u32 %v815, 16
    %v827 = vshrl.u32 %v816, 16
    %v828 = vpack.i.b16 %v827, %v826
    %v831 = vunpack.c.l.s4 1983009808
    %v832 = vunpack.c.0.s8 %v831
    %v833 = vperm.slane %v819, %v832
    %v836 = vunpack.c.l.s4 1983009808
    %v837 = vunpack.c.0.s8 %v836
    %v838 = vperm.slane %v825, %v837
    %v839 = vrot.slane %v838, 4
    %v840 = vsel %vm272, %v839, %v833
    %v841 = vrot.slane %v833, 4
    %v842 = vsel %vm272, %v838, %v841
    %v844 = vunpack.c.l.s4 1934713408
    %v845 = vunpack.c.0.s8 %v844
    %v846 = vperm.slane %v840, %v845
    %v848 = vunpack.c.l.s4 1934713408
    %v849 = vunpack.c.0.s8 %v848
    %v850 = vperm.slane %v842, %v849
    %v851 = vrot.slane %v846, 4
    %v852 = vsel %vm272, 0, %v851
    %v853 = vrot.slane %v850, 4
    %v854 = vsel %vm272, 0, %v853
    %v857 = vunpack.c.l.s4 1983009808
    %v858 = vunpack.c.0.s8 %v857
    %v859 = vperm.slane %v822, %v858
    %v862 = vunpack.c.l.s4 1983009808
    %v863 = vunpack.c.0.s8 %v862
    %v864 = vperm.slane %v828, %v863
    %v865 = vrot.slane %v864, 4
    %v866 = vsel %vm272, %v865, %v859
    %v867 = vrot.slane %v859, 4
    %v868 = vsel %vm272, %v864, %v867
    %v870 = vunpack.c.l.s4 1934713408
    %v871 = vunpack.c.0.s8 %v870
    %v872 = vperm.slane %v866, %v871
    %v874 = vunpack.c.l.s4 1934713408
    %v875 = vunpack.c.0.s8 %v874
    %v876 = vperm.slane %v868, %v875
    %v877 = vrot.slane %v872, 4
    %v878 = vsel %vm272, 0, %v877
    %v879 = vrot.slane %v876, 4
    %v880 = vsel %vm272, 0, %v879
    %v881 = vsel %vm272, %v853, %v846
    %v883 = vunpack.c.l.s4 1983009808
    %v884 = vunpack.c.0.s8 %v883
    %v885 = vperm.slane %v881, %v884
    %v886 = vrot.slane %v854, 4
    %v887 = vsel %vm272, %v886, %v852
    %v889 = vunpack.c.l.s4 1983009808
    %v890 = vunpack.c.0.s8 %v889
    %v891 = vperm.slane %v887, %v890
    %v892 = vrot.slane %v891, 4
    %v893 = vsel %vm272, %v892, %v885
    %v895 = vunpack.c.l.s4 1934713408
    %v896 = vunpack.c.0.s8 %v895
    %v897 = vperm.slane %v893, %v896
    %v898 = vrot.slane %v897, 4
    %v899 = vsel %vm272, 0, %v898
    %v900 = vsel %vm272, %v879, %v872
    %v902 = vunpack.c.l.s4 1983009808
    %v903 = vunpack.c.0.s8 %v902
    %v904 = vperm.slane %v900, %v903
    %v905 = vrot.slane %v880, 4
    %v906 = vsel %vm272, %v905, %v878
    %v908 = vunpack.c.l.s4 1983009808
    %v909 = vunpack.c.0.s8 %v908
    %v910 = vperm.slane %v906, %v909
    %v911 = vrot.slane %v910, 4
    %v912 = vsel %vm272, %v911, %v904
    %v914 = vunpack.c.l.s4 1934713408
    %v915 = vunpack.c.0.s8 %v914
    %v916 = vperm.slane %v912, %v915
    %v917 = vrot.slane %v916, 4
    %v918 = vsel %vm272, 0, %v917
    %v921 = vpack.i.b16 %v916, %v897
    %v922 = vshrl.u32 %v897, 16
    %v923 = vshrl.u32 %v916, 16
    %v924 = vpack.i.b16 %v923, %v922
    %v927 = vpack.i.b16 %v918, %v899
    %v928 = vshrl.u32 %v899, 16
    %v929 = vshrl.u32 %v918, 16
    %v930 = vpack.i.b16 %v929, %v928
    %v931 = vunpack.c.l.b16 %v924
    %v932 = vpack.c.b16 %v931, %v931
    %933 = vrot.lane.b32.xlu0 %v932, 8
    %v934 = vpop.permute.xlu0 %933
    %v935 = vunpack.c.l.b16 %v927
    %v936 = vpack.c.b16 %v935, %v935
    %937 = vrot.lane.b32.xlu0 %v936, 16
    %v938 = vpop.permute.xlu0 %937
    %v939 = vunpack.c.l.b16 %v930
    %v940 = vpack.c.b16 %v939, %v939
    %941 = vrot.lane.b32.xlu0 %v940, 24
    %v942 = vpop.permute.xlu0 %941
    %v945 = vsel %vm607, %v921, %v934
    %vm946 = vcmask 130048
    %v948 = vsel %vm946, %v945, %v938
    %vm949 = vcmask 195584
    %v951 = vsel %vm949, %v948, %v942
    %vm953 = vcmask 257024
    %954 = vst.msk [vmem:[#allocation2] sm:$0xf] %vm953, %v951
    %956 = vrot.lane.b32.xlu0 %v169, 120
    %v957 = vpop.permute.xlu0 %956
    %958 = vrot.lane.b32.xlu0 %v169, 112
    %v959 = vpop.permute.xlu0 %958
    %960 = vrot.lane.b32.xlu0 %v169, 104
    %v961 = vpop.permute.xlu0 %960
    %v964 = vpack.i.b16 %v957, %v169
    %v965 = vshrl.u32 %v169, 16
    %v966 = vshrl.u32 %v957, 16
    %v967 = vpack.i.b16 %v966, %v965
    %v970 = vpack.i.b16 %v961, %v959
    %v971 = vshrl.u32 %v959, 16
    %v972 = vshrl.u32 %v961, 16
    %v973 = vpack.i.b16 %v972, %v971
    %v976 = vunpack.c.l.s4 1983009808
    %v977 = vunpack.c.0.s8 %v976
    %v978 = vperm.slane %v964, %v977
    %v981 = vunpack.c.l.s4 1983009808
    %v982 = vunpack.c.0.s8 %v981
    %v983 = vperm.slane %v970, %v982
    %v984 = vrot.slane %v983, 4
    %v985 = vsel %vm272, %v984, %v978
    %v986 = vrot.slane %v978, 4
    %v987 = vsel %vm272, %v983, %v986
    %v989 = vunpack.c.l.s4 1934713408
    %v990 = vunpack.c.0.s8 %v989
    %v991 = vperm.slane %v985, %v990
    %v993 = vunpack.c.l.s4 1934713408
    %v994 = vunpack.c.0.s8 %v993
    %v995 = vperm.slane %v987, %v994
    %v996 = vrot.slane %v991, 4
    %v997 = vsel %vm272, 0, %v996
    %v998 = vrot.slane %v995, 4
    %v999 = vsel %vm272, 0, %v998
    %v1002 = vunpack.c.l.s4 1983009808
    %v1003 = vunpack.c.0.s8 %v1002
    %v1004 = vperm.slane %v967, %v1003
    %v1007 = vunpack.c.l.s4 1983009808
    %v1008 = vunpack.c.0.s8 %v1007
    %v1009 = vperm.slane %v973, %v1008
    %v1010 = vrot.slane %v1009, 4
    %v1011 = vsel %vm272, %v1010, %v1004
    %v1012 = vrot.slane %v1004, 4
    %v1013 = vsel %vm272, %v1009, %v1012
    %v1015 = vunpack.c.l.s4 1934713408
    %v1016 = vunpack.c.0.s8 %v1015
    %v1017 = vperm.slane %v1011, %v1016
    %v1019 = vunpack.c.l.s4 1934713408
    %v1020 = vunpack.c.0.s8 %v1019
    %v1021 = vperm.slane %v1013, %v1020
    %v1022 = vrot.slane %v1017, 4
    %v1023 = vsel %vm272, 0, %v1022
    %v1024 = vrot.slane %v1021, 4
    %v1025 = vsel %vm272, 0, %v1024
    %v1026 = vsel %vm272, %v998, %v991
    %v1028 = vunpack.c.l.s4 1983009808
    %v1029 = vunpack.c.0.s8 %v1028
    %v1030 = vperm.slane %v1026, %v1029
    %v1031 = vrot.slane %v999, 4
    %v1032 = vsel %vm272, %v1031, %v997
    %v1034 = vunpack.c.l.s4 1983009808
    %v1035 = vunpack.c.0.s8 %v1034
    %v1036 = vperm.slane %v1032, %v1035
    %v1037 = vrot.slane %v1036, 4
    %v1038 = vsel %vm272, %v1037, %v1030
    %v1040 = vunpack.c.l.s4 1934713408
    %v1041 = vunpack.c.0.s8 %v1040
    %v1042 = vperm.slane %v1038, %v1041
    %v1043 = vrot.slane %v1042, 4
    %v1044 = vsel %vm272, 0, %v1043
    %v1045 = vsel %vm272, %v1024, %v1017
    %v1047 = vunpack.c.l.s4 1983009808
    %v1048 = vunpack.c.0.s8 %v1047
    %v1049 = vperm.slane %v1045, %v1048
    %v1050 = vrot.slane %v1025, 4
    %v1051 = vsel %vm272, %v1050, %v1023
    %v1053 = vunpack.c.l.s4 1983009808
    %v1054 = vunpack.c.0.s8 %v1053
    %v1055 = vperm.slane %v1051, %v1054
    %v1056 = vrot.slane %v1055, 4
    %v1057 = vsel %vm272, %v1056, %v1049
    %v1059 = vunpack.c.l.s4 1934713408
    %v1060 = vunpack.c.0.s8 %v1059
    %v1061 = vperm.slane %v1057, %v1060
    %v1062 = vrot.slane %v1061, 4
    %v1063 = vsel %vm272, 0, %v1062
    %v1066 = vpack.i.b16 %v1061, %v1042
    %v1067 = vshrl.u32 %v1042, 16
    %v1068 = vshrl.u32 %v1061, 16
    %v1069 = vpack.i.b16 %v1068, %v1067
    %v1072 = vpack.i.b16 %v1063, %v1044
    %v1073 = vshrl.u32 %v1044, 16
    %v1074 = vshrl.u32 %v1063, 16
    %v1075 = vpack.i.b16 %v1074, %v1073
    %1077 = vrot.lane.b32.xlu0 %v205, 120
    %v1078 = vpop.permute.xlu0 %1077
    %1079 = vrot.lane.b32.xlu0 %v205, 112
    %v1080 = vpop.permute.xlu0 %1079
    %1081 = vrot.lane.b32.xlu0 %v205, 104
    %v1082 = vpop.permute.xlu0 %1081
    %v1085 = vpack.i.b16 %v1078, %v205
    %v1086 = vshrl.u32 %v205, 16
    %v1087 = vshrl.u32 %v1078, 16
    %v1088 = vpack.i.b16 %v1087, %v1086
    %v1091 = vpack.i.b16 %v1082, %v1080
    %v1092 = vshrl.u32 %v1080, 16
    %v1093 = vshrl.u32 %v1082, 16
    %v1094 = vpack.i.b16 %v1093, %v1092
    %v1097 = vunpack.c.l.s4 1983009808
    %v1098 = vunpack.c.0.s8 %v1097
    %v1099 = vperm.slane %v1085, %v1098
    %v1102 = vunpack.c.l.s4 1983009808
    %v1103 = vunpack.c.0.s8 %v1102
    %v1104 = vperm.slane %v1091, %v1103
    %v1105 = vrot.slane %v1104, 4
    %v1106 = vsel %vm272, %v1105, %v1099
    %v1107 = vrot.slane %v1099, 4
    %v1108 = vsel %vm272, %v1104, %v1107
    %v1110 = vunpack.c.l.s4 1934713408
    %v1111 = vunpack.c.0.s8 %v1110
    %v1112 = vperm.slane %v1106, %v1111
    %v1114 = vunpack.c.l.s4 1934713408
    %v1115 = vunpack.c.0.s8 %v1114
    %v1116 = vperm.slane %v1108, %v1115
    %v1117 = vrot.slane %v1112, 4
    %v1118 = vsel %vm272, 0, %v1117
    %v1119 = vrot.slane %v1116, 4
    %v1120 = vsel %vm272, 0, %v1119
    %v1123 = vunpack.c.l.s4 1983009808
    %v1124 = vunpack.c.0.s8 %v1123
    %v1125 = vperm.slane %v1088, %v1124
    %v1128 = vunpack.c.l.s4 1983009808
    %v1129 = vunpack.c.0.s8 %v1128
    %v1130 = vperm.slane %v1094, %v1129
    %v1131 = vrot.slane %v1130, 4
    %v1132 = vsel %vm272, %v1131, %v1125
    %v1133 = vrot.slane %v1125, 4
    %v1134 = vsel %vm272, %v1130, %v1133
    %v1136 = vunpack.c.l.s4 1934713408
    %v1137 = vunpack.c.0.s8 %v1136
    %v1138 = vperm.slane %v1132, %v1137
    %v1140 = vunpack.c.l.s4 1934713408
    %v1141 = vunpack.c.0.s8 %v1140
    %v1142 = vperm.slane %v1134, %v1141
    %v1143 = vrot.slane %v1138, 4
    %v1144 = vsel %vm272, 0, %v1143
    %v1145 = vrot.slane %v1142, 4
    %v1146 = vsel %vm272, 0, %v1145
    %v1147 = vsel %vm272, %v1119, %v1112
    %v1149 = vunpack.c.l.s4 1983009808
    %v1150 = vunpack.c.0.s8 %v1149
    %v1151 = vperm.slane %v1147, %v1150
    %v1152 = vrot.slane %v1120, 4
    %v1153 = vsel %vm272, %v1152, %v1118
    %v1155 = vunpack.c.l.s4 1983009808
    %v1156 = vunpack.c.0.s8 %v1155
    %v1157 = vperm.slane %v1153, %v1156
    %v1158 = vrot.slane %v1157, 4
    %v1159 = vsel %vm272, %v1158, %v1151
    %v1161 = vunpack.c.l.s4 1934713408
    %v1162 = vunpack.c.0.s8 %v1161
    %v1163 = vperm.slane %v1159, %v1162
    %v1164 = vrot.slane %v1163, 4
    %v1165 = vsel %vm272, 0, %v1164
    %v1166 = vsel %vm272, %v1145, %v1138
    %v1168 = vunpack.c.l.s4 1983009808
    %v1169 = vunpack.c.0.s8 %v1168
    %v1170 = vperm.slane %v1166, %v1169
    %v1171 = vrot.slane %v1146, 4
    %v1172 = vsel %vm272, %v1171, %v1144
    %v1174 = vunpack.c.l.s4 1983009808
    %v1175 = vunpack.c.0.s8 %v1174
    %v1176 = vperm.slane %v1172, %v1175
    %v1177 = vrot.slane %v1176, 4
    %v1178 = vsel %vm272, %v1177, %v1170
    %v1180 = vunpack.c.l.s4 1934713408
    %v1181 = vunpack.c.0.s8 %v1180
    %v1182 = vperm.slane %v1178, %v1181
    %v1183 = vrot.slane %v1182, 4
    %v1184 = vsel %vm272, 0, %v1183
    %v1187 = vpack.i.b16 %v1182, %v1163
    %v1188 = vshrl.u32 %v1163, 16
    %v1189 = vshrl.u32 %v1182, 16
    %v1190 = vpack.i.b16 %v1189, %v1188
    %v1193 = vpack.i.b16 %v1184, %v1165
    %v1194 = vshrl.u32 %v1165, 16
    %v1195 = vshrl.u32 %v1184, 16
    %v1196 = vpack.i.b16 %v1195, %v1194
    %1198 = vrot.lane.b32.xlu0 %v241, 120
    %v1199 = vpop.permute.xlu0 %1198
    %1200 = vrot.lane.b32.xlu0 %v241, 112
    %v1201 = vpop.permute.xlu0 %1200
    %1202 = vrot.lane.b32.xlu0 %v241, 104
    %v1203 = vpop.permute.xlu0 %1202
    %v1206 = vpack.i.b16 %v1199, %v241
    %v1207 = vshrl.u32 %v241, 16
    %v1208 = vshrl.u32 %v1199, 16
    %v1209 = vpack.i.b16 %v1208, %v1207
    %v1212 = vpack.i.b16 %v1203, %v1201
    %v1213 = vshrl.u32 %v1201, 16
    %v1214 = vshrl.u32 %v1203, 16
    %v1215 = vpack.i.b16 %v1214, %v1213
    %v1218 = vunpack.c.l.s4 1983009808
    %v1219 = vunpack.c.0.s8 %v1218
    %v1220 = vperm.slane %v1206, %v1219
    %v1223 = vunpack.c.l.s4 1983009808
    %v1224 = vunpack.c.0.s8 %v1223
    %v1225 = vperm.slane %v1212, %v1224
    %v1226 = vrot.slane %v1225, 4
    %v1227 = vsel %vm272, %v1226, %v1220
    %v1228 = vrot.slane %v1220, 4
    %v1229 = vsel %vm272, %v1225, %v1228
    %v1231 = vunpack.c.l.s4 1934713408
    %v1232 = vunpack.c.0.s8 %v1231
    %v1233 = vperm.slane %v1227, %v1232
    %v1235 = vunpack.c.l.s4 1934713408
    %v1236 = vunpack.c.0.s8 %v1235
    %v1237 = vperm.slane %v1229, %v1236
    %v1238 = vrot.slane %v1233, 4
    %v1239 = vsel %vm272, 0, %v1238
    %v1240 = vrot.slane %v1237, 4
    %v1241 = vsel %vm272, 0, %v1240
    %v1244 = vunpack.c.l.s4 1983009808
    %v1245 = vunpack.c.0.s8 %v1244
    %v1246 = vperm.slane %v1209, %v1245
    %v1249 = vunpack.c.l.s4 1983009808
    %v1250 = vunpack.c.0.s8 %v1249
    %v1251 = vperm.slane %v1215, %v1250
    %v1252 = vrot.slane %v1251, 4
    %v1253 = vsel %vm272, %v1252, %v1246
    %v1254 = vrot.slane %v1246, 4
    %v1255 = vsel %vm272, %v1251, %v1254
    %v1257 = vunpack.c.l.s4 1934713408
    %v1258 = vunpack.c.0.s8 %v1257
    %v1259 = vperm.slane %v1253, %v1258
    %v1261 = vunpack.c.l.s4 1934713408
    %v1262 = vunpack.c.0.s8 %v1261
    %v1263 = vperm.slane %v1255, %v1262
    %v1264 = vrot.slane %v1259, 4
    %v1265 = vsel %vm272, 0, %v1264
    %v1266 = vrot.slane %v1263, 4
    %v1267 = vsel %vm272, 0, %v1266
    %v1268 = vsel %vm272, %v1240, %v1233
    %v1270 = vunpack.c.l.s4 1983009808
    %v1271 = vunpack.c.0.s8 %v1270
    %v1272 = vperm.slane %v1268, %v1271
    %v1273 = vrot.slane %v1241, 4
    %v1274 = vsel %vm272, %v1273, %v1239
    %v1276 = vunpack.c.l.s4 1983009808
    %v1277 = vunpack.c.0.s8 %v1276
    %v1278 = vperm.slane %v1274, %v1277
    %v1279 = vrot.slane %v1278, 4
    %v1280 = vsel %vm272, %v1279, %v1272
    %v1282 = vunpack.c.l.s4 1934713408
    %v1283 = vunpack.c.0.s8 %v1282
    %v1284 = vperm.slane %v1280, %v1283
    %v1285 = vrot.slane %v1284, 4
    %v1286 = vsel %vm272, 0, %v1285
    %v1287 = vsel %vm272, %v1266, %v1259
    %v1289 = vunpack.c.l.s4 1983009808
    %v1290 = vunpack.c.0.s8 %v1289
    %v1291 = vperm.slane %v1287, %v1290
    %v1292 = vrot.slane %v1267, 4
    %v1293 = vsel %vm272, %v1292, %v1265
    %v1295 = vunpack.c.l.s4 1983009808
    %v1296 = vunpack.c.0.s8 %v1295
    %v1297 = vperm.slane %v1293, %v1296
    %v1298 = vrot.slane %v1297, 4
    %v1299 = vsel %vm272, %v1298, %v1291
    %v1301 = vunpack.c.l.s4 1934713408
    %v1302 = vunpack.c.0.s8 %v1301
    %v1303 = vperm.slane %v1299, %v1302
    %v1304 = vrot.slane %v1303, 4
    %v1305 = vsel %vm272, 0, %v1304
    %v1308 = vpack.i.b16 %v1303, %v1284
    %v1309 = vshrl.u32 %v1284, 16
    %v1310 = vshrl.u32 %v1303, 16
    %v1311 = vpack.i.b16 %v1310, %v1309
    %v1314 = vpack.i.b16 %v1305, %v1286
    %v1315 = vshrl.u32 %v1286, 16
    %v1316 = vshrl.u32 %v1305, 16
    %v1317 = vpack.i.b16 %v1316, %v1315
    %s1318 = scalar_lea.vmem %s1, 8
    %v1319 = vld [vmem:[%s1318] sm:$0xff]
    %v1321 = vsel %vm607, %v1066, 0
    %v1324 = vsel %vm607, %v1187, 0
    %1326 = vmatpush.bf16.xpose.msra.mxu0 0
    %1327 = vmatpush.bf16.xpose.msra.mxu0 0
    %1328 = vmatpush.bf16.xpose.msra.mxu0 0
    %1329 = vmatpush.bf16.xpose.msra.mxu0 0
    %1330 = vmatpush.bf16.xpose.msra.mxu0 0
    %1331 = vmatpush.bf16.xpose.msra.mxu0 0
    %1332 = vmatpush.bf16.xpose.msra.mxu0 0
    %1333 = vmatpush.bf16.xpose.msra.mxu0 %v1324
    %1334 = vmatmul.bf16.gmra.mxu0 %v1321
    %v1335 = vpop.f32.mrf.mxu0
    %v1336 = vadd.f32 %v1319, %v1335
    %v1337 = vpop.f32.mrf.mxu0
    %1338 = vdwg.mxu0
    %v1340 = vsel %vm607, %v1069, 0
    %v1343 = vsel %vm607, %v1190, 0
    %1345 = vmatpush.bf16.xpose.msra.mxu0 0
    %1346 = vmatpush.bf16.xpose.msra.mxu0 0
    %1347 = vmatpush.bf16.xpose.msra.mxu0 0
    %1348 = vmatpush.bf16.xpose.msra.mxu0 0
    %1349 = vmatpush.bf16.xpose.msra.mxu0 0
    %1350 = vmatpush.bf16.xpose.msra.mxu0 0
    %1351 = vmatpush.bf16.xpose.msra.mxu0 0
    %1352 = vmatpush.bf16.xpose.msra.mxu0 %v1343
    %1353 = vmatmul.bf16.gmra.mxu0 %v1340
    %v1354 = vpop.f32.mrf.mxu0
    %v1355 = vadd.f32 %v1319, %v1354
    %v1356 = vpop.f32.mrf.mxu0
    %1357 = vdwg.mxu0
    %v1359 = vsel %vm607, %v1072, 0
    %v1362 = vsel %vm607, %v1193, 0
    %1364 = vmatpush.bf16.xpose.msra.mxu0 0
    %1365 = vmatpush.bf16.xpose.msra.mxu0 0
    %1366 = vmatpush.bf16.xpose.msra.mxu0 0
    %1367 = vmatpush.bf16.xpose.msra.mxu0 0
    %1368 = vmatpush.bf16.xpose.msra.mxu0 0
    %1369 = vmatpush.bf16.xpose.msra.mxu0 0
    %1370 = vmatpush.bf16.xpose.msra.mxu0 0
    %1371 = vmatpush.bf16.xpose.msra.mxu0 %v1362
    %1372 = vmatmul.bf16.gmra.mxu0 %v1359
    %v1373 = vpop.f32.mrf.mxu0
    %v1374 = vadd.f32 %v1319, %v1373
    %v1375 = vpop.f32.mrf.mxu0
    %1376 = vdwg.mxu0
    %v1378 = vsel %vm607, %v1075, 0
    %v1381 = vsel %vm607, %v1196, 0
    %1383 = vmatpush.bf16.xpose.msra.mxu0 0
    %1384 = vmatpush.bf16.xpose.msra.mxu0 0
    %1385 = vmatpush.bf16.xpose.msra.mxu0 0
    %1386 = vmatpush.bf16.xpose.msra.mxu0 0
    %1387 = vmatpush.bf16.xpose.msra.mxu0 0
    %1388 = vmatpush.bf16.xpose.msra.mxu0 0
    %1389 = vmatpush.bf16.xpose.msra.mxu0 0
    %1390 = vmatpush.bf16.xpose.msra.mxu0 %v1381
    %1391 = vmatmul.bf16.gmra.mxu0 %v1378
    %v1392 = vpop.f32.mrf.mxu0
    %v1393 = vadd.f32 %v1319, %v1392
    %v1394 = vpop.f32.mrf.mxu0
    %1395 = vdwg.mxu0
    %v1396 = vsel %vm607, %v1336, -inf
    %1397 = vmax.xlane.f32.xlu0 %v1396
    %v1398 = vpop.xlane.xlu0 %1397
    %v1399 = vsel %vm607, %v1355, -inf
    %1400 = vmax.xlane.f32.xlu0 %v1399
    %v1401 = vpop.xlane.xlu0 %1400
    %v1402 = vsel %vm607, %v1374, -inf
    %1403 = vmax.xlane.f32.xlu0 %v1402
    %v1404 = vpop.xlane.xlu0 %1403
    %v1405 = vsel %vm607, %v1393, -inf
    %1406 = vmax.xlane.f32.xlu0 %v1405
    %v1407 = vpop.xlane.xlu0 %1406
    %v1408 = vsub.f32 %v1336, %v1398
    %v1409 = vsub.f32 %v1355, %v1401
    %v1410 = vsub.f32 %v1374, %v1404
    %v1411 = vsub.f32 %v1393, %v1407
    %v1412 = vmul.f32 %v1408, 1.442695
    %v1413 = vpow.pop %v1412
    %v1414 = vmul.f32 %v1409, 1.442695
    %v1415 = vpow.pop %v1414
    %v1416 = vmul.f32 %v1410, 1.442695
    %v1417 = vpow.pop %v1416
    %v1418 = vmul.f32 %v1411, 1.442695
    %v1419 = vpow.pop %v1418
    %v1420 = vsel %vm607, %v1413, 0.0
    %1421 = vadd.xlane.f32.xlu0 %v1420
    %v1422 = vpop.xlane.xlu0 %1421
    %v1423 = vsel %vm607, %v1415, 0.0
    %1424 = vadd.xlane.f32.xlu0 %v1423
    %v1425 = vpop.xlane.xlu0 %1424
    %v1426 = vsel %vm607, %v1417, 0.0
    %1427 = vadd.xlane.f32.xlu0 %v1426
    %v1428 = vpop.xlane.xlu0 %1427
    %v1429 = vsel %vm607, %v1419, 0.0
    %1430 = vadd.xlane.f32.xlu0 %v1429
    %v1431 = vpop.xlane.xlu0 %1430
    %v1432 = vrcp.pop %v1422
    %v1433 = vrcp.pop %v1425
    %v1434 = vrcp.pop %v1428
    %v1435 = vrcp.pop %v1431
    %v1436 = vmul.f32 %v1413, %v1432
    %v1437 = vmul.f32 %v1415, %v1433
    %v1438 = vmul.f32 %v1417, %v1434
    %v1439 = vmul.f32 %v1419, %v1435
    %s1440 = scalar_lea.vmem [#allocation12], 32
    %1441 = vst.msk [vmem:[%s1440] sm:$0xff] %vm607, %v1436
    %1442 = vst.msk [vmem:[%s1440 + $0x8] sm:$0xff] %vm607, %v1437
    %1443 = vst.msk [vmem:[%s1440 + $0x10] sm:$0xff] %vm607, %v1438
    %1444 = vst.msk [vmem:[%s1440 + $0x18] sm:$0xff] %vm607, %v1439
    %v1445 = vpack.c.bf16 %v1436, %v1436
    %v1446 = vpack.c.bf16 %v1437, %v1437
    %v1447 = vpack.c.bf16 %v1438, %v1438
    %v1448 = vpack.c.bf16 %v1439, %v1439
    %v1450 = vsel %vm607, %v1445, 0
    %v1453 = vsel %vm739, %v1308, 0
    %1455 = vmatpush.bf16.msra.mxu0 0
    %1456 = vmatpush.bf16.msra.mxu0 0
    %1457 = vmatpush.bf16.msra.mxu0 0
    %1458 = vmatpush.bf16.msra.mxu0 0
    %1459 = vmatpush.bf16.msra.mxu0 0
    %1460 = vmatpush.bf16.msra.mxu0 0
    %1461 = vmatpush.bf16.msra.mxu0 0
    %1462 = vmatpush.bf16.msra.mxu0 %v1453
    %1463 = vmatmul.bf16.gmra.mxu0 %v1450
    %v1464 = vpop.f32.mrf.mxu0
    %v1465 = vadd.f32 0.0, %v1464
    %v1466 = vpop.f32.mrf.mxu0
    %1467 = vdwg.mxu0
    %v1469 = vsel %vm607, %v1446, 0
    %v1472 = vsel %vm739, %v1311, 0
    %1474 = vmatpush.bf16.msra.mxu0 0
    %1475 = vmatpush.bf16.msra.mxu0 0
    %1476 = vmatpush.bf16.msra.mxu0 0
    %1477 = vmatpush.bf16.msra.mxu0 0
    %1478 = vmatpush.bf16.msra.mxu0 0
    %1479 = vmatpush.bf16.msra.mxu0 0
    %1480 = vmatpush.bf16.msra.mxu0 0
    %1481 = vmatpush.bf16.msra.mxu0 %v1472
    %1482 = vmatmul.bf16.gmra.mxu0 %v1469
    %v1483 = vpop.f32.mrf.mxu0
    %v1484 = vadd.f32 0.0, %v1483
    %v1485 = vpop.f32.mrf.mxu0
    %1486 = vdwg.mxu0
    %v1488 = vsel %vm607, %v1447, 0
    %v1491 = vsel %vm739, %v1314, 0
    %1493 = vmatpush.bf16.msra.mxu0 0
    %1494 = vmatpush.bf16.msra.mxu0 0
    %1495 = vmatpush.bf16.msra.mxu0 0
    %1496 = vmatpush.bf16.msra.mxu0 0
    %1497 = vmatpush.bf16.msra.mxu0 0
    %1498 = vmatpush.bf16.msra.mxu0 0
    %1499 = vmatpush.bf16.msra.mxu0 0
    %1500 = vmatpush.bf16.msra.mxu0 %v1491
    %1501 = vmatmul.bf16.gmra.mxu0 %v1488
    %v1502 = vpop.f32.mrf.mxu0
    %v1503 = vadd.f32 0.0, %v1502
    %v1504 = vpop.f32.mrf.mxu0
    %1505 = vdwg.mxu0
    %v1507 = vsel %vm607, %v1448, 0
    %v1510 = vsel %vm739, %v1317, 0
    %1512 = vmatpush.bf16.msra.mxu0 0
    %1513 = vmatpush.bf16.msra.mxu0 0
    %1514 = vmatpush.bf16.msra.mxu0 0
    %1515 = vmatpush.bf16.msra.mxu0 0
    %1516 = vmatpush.bf16.msra.mxu0 0
    %1517 = vmatpush.bf16.msra.mxu0 0
    %1518 = vmatpush.bf16.msra.mxu0 0
    %1519 = vmatpush.bf16.msra.mxu0 %v1510
    %1520 = vmatmul.bf16.gmra.mxu0 %v1507
    %v1521 = vpop.f32.mrf.mxu0
    %v1522 = vadd.f32 0.0, %v1521
    %v1523 = vpop.f32.mrf.mxu0
    %1524 = vdwg.mxu0
    %v1525 = vpack.c.bf16 %v1465, %v1465
    %v1526 = vpack.c.bf16 %v1484, %v1484
    %v1527 = vpack.c.bf16 %v1503, %v1503
    %v1528 = vpack.c.bf16 %v1522, %v1522
    %v1531 = vpack.i.b16 %v1526, %v1525
    %v1532 = vshrl.u32 %v1525, 16
    %v1533 = vshrl.u32 %v1526, 16
    %v1534 = vpack.i.b16 %v1533, %v1532
    %v1537 = vpack.i.b16 %v1528, %v1527
    %v1538 = vshrl.u32 %v1527, 16
    %v1539 = vshrl.u32 %v1528, 16
    %v1540 = vpack.i.b16 %v1539, %v1538
    %v1543 = vunpack.c.l.s4 1983009808
    %v1544 = vunpack.c.0.s8 %v1543
    %v1545 = vperm.slane %v1531, %v1544
    %v1548 = vunpack.c.l.s4 1983009808
    %v1549 = vunpack.c.0.s8 %v1548
    %v1550 = vperm.slane %v1537, %v1549
    %v1551 = vrot.slane %v1550, 4
    %v1552 = vsel %vm272, %v1551, %v1545
    %v1553 = vrot.slane %v1545, 4
    %v1554 = vsel %vm272, %v1550, %v1553
    %v1556 = vunpack.c.l.s4 1934713408
    %v1557 = vunpack.c.0.s8 %v1556
    %v1558 = vperm.slane %v1552, %v1557
    %v1560 = vunpack.c.l.s4 1934713408
    %v1561 = vunpack.c.0.s8 %v1560
    %v1562 = vperm.slane %v1554, %v1561
    %v1563 = vrot.slane %v1558, 4
    %v1564 = vsel %vm272, 0, %v1563
    %v1565 = vrot.slane %v1562, 4
    %v1566 = vsel %vm272, 0, %v1565
    %v1569 = vunpack.c.l.s4 1983009808
    %v1570 = vunpack.c.0.s8 %v1569
    %v1571 = vperm.slane %v1534, %v1570
    %v1574 = vunpack.c.l.s4 1983009808
    %v1575 = vunpack.c.0.s8 %v1574
    %v1576 = vperm.slane %v1540, %v1575
    %v1577 = vrot.slane %v1576, 4
    %v1578 = vsel %vm272, %v1577, %v1571
    %v1579 = vrot.slane %v1571, 4
    %v1580 = vsel %vm272, %v1576, %v1579
    %v1582 = vunpack.c.l.s4 1934713408
    %v1583 = vunpack.c.0.s8 %v1582
    %v1584 = vperm.slane %v1578, %v1583
    %v1586 = vunpack.c.l.s4 1934713408
    %v1587 = vunpack.c.0.s8 %v1586
    %v1588 = vperm.slane %v1580, %v1587
    %v1589 = vrot.slane %v1584, 4
    %v1590 = vsel %vm272, 0, %v1589
    %v1591 = vrot.slane %v1588, 4
    %v1592 = vsel %vm272, 0, %v1591
    %v1593 = vsel %vm272, %v1565, %v1558
    %v1595 = vunpack.c.l.s4 1983009808
    %v1596 = vunpack.c.0.s8 %v1595
    %v1597 = vperm.slane %v1593, %v1596
    %v1598 = vrot.slane %v1566, 4
    %v1599 = vsel %vm272, %v1598, %v1564
    %v1601 = vunpack.c.l.s4 1983009808
    %v1602 = vunpack.c.0.s8 %v1601
    %v1603 = vperm.slane %v1599, %v1602
    %v1604 = vrot.slane %v1603, 4
    %v1605 = vsel %vm272, %v1604, %v1597
    %v1607 = vunpack.c.l.s4 1934713408
    %v1608 = vunpack.c.0.s8 %v1607
    %v1609 = vperm.slane %v1605, %v1608
    %v1610 = vrot.slane %v1609, 4
    %v1611 = vsel %vm272, 0, %v1610
    %v1612 = vsel %vm272, %v1591, %v1584
    %v1614 = vunpack.c.l.s4 1983009808
    %v1615 = vunpack.c.0.s8 %v1614
    %v1616 = vperm.slane %v1612, %v1615
    %v1617 = vrot.slane %v1592, 4
    %v1618 = vsel %vm272, %v1617, %v1590
    %v1620 = vunpack.c.l.s4 1983009808
    %v1621 = vunpack.c.0.s8 %v1620
    %v1622 = vperm.slane %v1618, %v1621
    %v1623 = vrot.slane %v1622, 4
    %v1624 = vsel %vm272, %v1623, %v1616
    %v1626 = vunpack.c.l.s4 1934713408
    %v1627 = vunpack.c.0.s8 %v1626
    %v1628 = vperm.slane %v1624, %v1627
    %v1629 = vrot.slane %v1628, 4
    %v1630 = vsel %vm272, 0, %v1629
    %v1633 = vpack.i.b16 %v1628, %v1609
    %v1634 = vshrl.u32 %v1609, 16
    %v1635 = vshrl.u32 %v1628, 16
    %v1636 = vpack.i.b16 %v1635, %v1634
    %v1639 = vpack.i.b16 %v1630, %v1611
    %v1640 = vshrl.u32 %v1611, 16
    %v1641 = vshrl.u32 %v1630, 16
    %v1642 = vpack.i.b16 %v1641, %v1640
    %v1643 = vunpack.c.l.b16 %v1636
    %v1644 = vpack.c.b16 %v1643, %v1643
    %1645 = vrot.lane.b32.xlu0 %v1644, 8
    %v1646 = vpop.permute.xlu0 %1645
    %v1647 = vunpack.c.l.b16 %v1639
    %v1648 = vpack.c.b16 %v1647, %v1647
    %1649 = vrot.lane.b32.xlu0 %v1648, 16
    %v1650 = vpop.permute.xlu0 %1649
    %v1651 = vunpack.c.l.b16 %v1642
    %v1652 = vpack.c.b16 %v1651, %v1651
    %1653 = vrot.lane.b32.xlu0 %v1652, 24
    %v1654 = vpop.permute.xlu0 %1653
    %v1657 = vsel %vm607, %v1633, %v1646
    %v1659 = vsel %vm946, %v1657, %v1650
    %v1661 = vsel %vm949, %v1659, %v1654
    %1663 = vst.msk [vmem:[#allocation2 + $0x4] sm:$0xf] %vm953, %v1661
    %v1664 = vld [vmem:[#allocation2] sm:$0xf]
    %v1665 = vld [vmem:[#allocation2 + $0x4] sm:$0xf]
    %v1666 = vld [vmem:[#allocation8] sm:$0xf]
    %v1667 = vld [vmem:[#allocation8 + $0x4] sm:$0xf]
    %v1668 = vld [vmem:[#allocation8 + $0x8] sm:$0xf]
    %v1669 = vld [vmem:[#allocation8 + $0xc] sm:$0xf]
    %v1670 = vld [vmem:[%s9] sm:$0x1]
    %v1672 = vperm.slane %v1670, 0
    %v1676 = vunpack.c.l.b16 %v1664
    %v1677 = vunpack.c.l.b16 %v1665
    %v1678 = vpack.c.b16 %v1677, %v1676
    %v1683 = vunpack.c.l.b16 %v1666
    %v1684 = vunpack.c.l.b16 %v1667
    %v1685 = vunpack.c.l.b16 %v1668
    %v1686 = vunpack.c.l.b16 %v1669
    %v1687 = vpack.c.b16 %v1684, %v1683
    %v1688 = vpack.c.b16 %v1686, %v1685
    %v1692 = vsel %vm150, %v1678, 0
    %1694 = vmatpush.bf16.msra.mxu0 0
    %1695 = vmatpush.bf16.msra.mxu0 0
    %1696 = vmatpush.bf16.msra.mxu0 0
    %1697 = vmatpush.bf16.msra.mxu0 0
    %1698 = vmatpush.bf16.msra.mxu0 0
    %1699 = vmatpush.bf16.msra.mxu0 0
    %1700 = vmatpush.bf16.msra.mxu0 %v1688
    %1701 = vmatpush.bf16.msra.mxu0 %v1687
    %1702 = vmatmul.bf16.gmra.mxu0 %v1692
    %v1703 = vpop.f32.mrf.mxu0
    %v1704 = vadd.f32 %v1672, %v1703
    %v1705 = vpop.f32.mrf.mxu0
    %v1706 = vadd.f32 %v1672, %v1705
    %1707 = vdwg.mxu0
    %v1708 = vadd.f32 %v127, %v1704
    %v1709 = vadd.f32 %v128, %v1706
    %v1710 = vld [vmem:[%s10] sm:$0x1]
    %v1711 = vld [vmem:[%s11] sm:$0x1]
    %v1712 = vsel %vm150, %v1708, 0.0
    %1713 = vadd.xlane.f32.xlu0 %v1712
    %v1714 = vpop.xlane.xlu0 %1713
    %v1715 = vsel %vm150, %v1709, 0.0
    %1716 = vadd.xlane.f32.xlu0 %v1715
    %v1717 = vpop.xlane.xlu0 %1716
    %v1718 = vrcp.pop 32.0
    %v1719 = vmul.f32 32.0, %v1718
    %v1720 = vsub.f32 1.0, %v1719
    %v1721 = vmul.f32 %v1718, %v1720
    %v1722 = vadd.f32 %v1718, %v1721
    %vm1723 = vweird.f32 %v1718
    %v1724 = vsel %vm1723, %v1718, %v1722
    %v1725 = vmul.f32 %v1714, %v1724
    %v1726 = vmul.f32 %v1717, %v1724
    %v1727 = vsub.f32 %v1708, %v1725
    %v1728 = vsub.f32 %v1709, %v1726
    %v1729 = vmul.f32 %v1727, %v1727
    %v1730 = vmul.f32 %v1728, %v1728
    %v1731 = vsel %vm150, %v1729, 0.0
    %1732 = vadd.xlane.f32.xlu0 %v1731
    %v1733 = vpop.xlane.xlu0 %1732
    %v1734 = vsel %vm150, %v1730, 0.0
    %1735 = vadd.xlane.f32.xlu0 %v1734
    %v1736 = vpop.xlane.xlu0 %1735
    %v1737 = vmul.f32 %v1733, %v1724
    %v1738 = vmul.f32 %v1736, %v1724
    %v1739 = vadd.f32 %v1737, 1e-05
    %v1740 = vadd.f32 %v1738, 1e-05
    %v1741 = vrsqrt.pop %v1739
    %v1742 = vmul.f32 %v1741, %v1739
    %v1743 = vmul.f32 %v1742, %v1741
    %v1744 = vmul.f32 0.5, %v1743
    %v1745 = vsub.f32 1.5, %v1744
    %v1746 = vmul.f32 %v1741, %v1745
    %vm1747 = vweird.f32 %v1739
    %vm1748 = vweird.f32 %v1741
    %vm1749 = vmor %vm1747, %vm1748
    %v1750 = vsel %vm1749, %v1741, %v1746
    %v1751 = vrsqrt.pop %v1740
    %v1752 = vmul.f32 %v1751, %v1740
    %v1753 = vmul.f32 %v1752, %v1751
    %v1754 = vmul.f32 0.5, %v1753
    %v1755 = vsub.f32 1.5, %v1754
    %v1756 = vmul.f32 %v1751, %v1755
    %vm1757 = vweird.f32 %v1740
    %vm1758 = vweird.f32 %v1751
    %vm1759 = vmor %vm1757, %vm1758
    %v1760 = vsel %vm1759, %v1751, %v1756
    %v1761 = vmul.f32 %v1727, %v1750
    %v1762 = vmul.f32 %v1728, %v1760
    %v1764 = vperm.slane %v1710, 0
    %v1766 = vmul.f32 %v1761, %v1764
    %v1767 = vmul.f32 %v1762, %v1764
    %v1769 = vperm.slane %v1711, 0
    %v1771 = vadd.f32 %v1766, %v1769
    %v1772 = vadd.f32 %v1767, %v1769
    %v1773 = vpack.c.bf16 %v1772, %v1771
    %v1774 = vld [vmem:[#allocation9] sm:$0xf]
    %v1775 = vld [vmem:[#allocation9 + $0x4] sm:$0xf]
    %v1776 = vld [vmem:[#allocation9 + $0x8] sm:$0xf]
    %v1777 = vld [vmem:[#allocation9 + $0xc] sm:$0xf]
    %v1778 = vld [vmem:[%s13] sm:$0x1]
    %v1780 = vperm.slane %v1778, 0
    %v1786 = vunpack.c.l.b16 %v1774
    %v1787 = vunpack.c.l.b16 %v1775
    %v1788 = vunpack.c.l.b16 %v1776
    %v1789 = vunpack.c.l.b16 %v1777
    %v1790 = vpack.c.b16 %v1787, %v1786
    %v1791 = vpack.c.b16 %v1789, %v1788
    %v1795 = vsel %vm150, %v1773, 0
    %1797 = vmatpush.bf16.msra.mxu0 0
    %1798 = vmatpush.bf16.msra.mxu0 0
    %1799 = vmatpush.bf16.msra.mxu0 0
    %1800 = vmatpush.bf16.msra.mxu0 0
    %1801 = vmatpush.bf16.msra.mxu0 0
    %1802 = vmatpush.bf16.msra.mxu0 0
    %1803 = vmatpush.bf16.msra.mxu0 %v1791
    %1804 = vmatpush.bf16.msra.mxu0 %v1790
    %1805 = vmatmul.bf16.gmra.mxu0 %v1795
    %v1806 = vpop.f32.mrf.mxu0
    %v1807 = vadd.f32 %v1780, %v1806
    %v1808 = vpop.f32.mrf.mxu0
    %v1809 = vadd.f32 %v1780, %v1808
    %1810 = vdwg.mxu0
    %v1811 = vmax.f32 %v1807, 0.0
    %v1812 = vmax.f32 %v1809, 0.0
    %v1813 = vpack.c.bf16 %v1812, %v1811
    %v1814 = vld [vmem:[%s14] sm:$0xf]
    %v1815 = vld [vmem:[%s14 + $0x4] sm:$0xf]
    %v1816 = vld [vmem:[%s14 + $0x8] sm:$0xf]
    %v1817 = vld [vmem:[%s14 + $0xc] sm:$0xf]
    %v1818 = vld [vmem:[%s14 + $0x10] sm:$0xf]
    %v1819 = vld [vmem:[%s14 + $0x14] sm:$0xf]
    %v1820 = vld [vmem:[%s14 + $0x18] sm:$0xf]
    %v1821 = vld [vmem:[%s14 + $0x1c] sm:$0xf]
    %v1822 = vld [vmem:[%s15] sm:$0x1]
    %v1824 = vperm.slane %v1822, 0
    %v1834 = vunpack.c.l.b16 %v1814
    %v1835 = vunpack.c.l.b16 %v1815
    %v1836 = vunpack.c.l.b16 %v1816
    %v1837 = vunpack.c.l.b16 %v1817
    %v1838 = vunpack.c.l.b16 %v1818
    %v1839 = vunpack.c.l.b16 %v1819
    %v1840 = vunpack.c.l.b16 %v1820
    %v1841 = vunpack.c.l.b16 %v1821
    %v1842 = vpack.c.b16 %v1835, %v1834
    %v1843 = vpack.c.b16 %v1837, %v1836
    %v1844 = vpack.c.b16 %v1839, %v1838
    %v1845 = vpack.c.b16 %v1841, %v1840
    %vm1850 = vcmask 523264
    %v1852 = vsel %vm1850, %v1813, 0
    %1854 = vmatpush.bf16.msra.mxu0 0
    %1855 = vmatpush.bf16.msra.mxu0 0
    %1856 = vmatpush.bf16.msra.mxu0 0
    %1857 = vmatpush.bf16.msra.mxu0 0
    %1858 = vmatpush.bf16.msra.mxu0 %v1845
    %1859 = vmatpush.bf16.msra.mxu0 %v1844
    %1860 = vmatpush.bf16.msra.mxu0 %v1843
    %1861 = vmatpush.bf16.msra.mxu0 %v1842
    %1862 = vmatmul.bf16.gmra.mxu0 %v1852
    %v1863 = vpop.f32.mrf.mxu0
    %v1864 = vadd.f32 %v1824, %v1863
    %v1865 = vpop.f32.mrf.mxu0
    %v1866 = vadd.f32 %v1824, %v1865
    %1867 = vdwg.mxu0
    %v1868 = vadd.f32 %v1771, %v1864
    %v1869 = vadd.f32 %v1772, %v1866
    %v1870 = vld [vmem:[%s16] sm:$0x1]
    %v1871 = vld [vmem:[%s17] sm:$0x1]
    %v1872 = vsel %vm150, %v1868, 0.0
    %1873 = vadd.xlane.f32.xlu0 %v1872
    %v1874 = vpop.xlane.xlu0 %1873
    %v1875 = vsel %vm150, %v1869, 0.0
    %1876 = vadd.xlane.f32.xlu0 %v1875
    %v1877 = vpop.xlane.xlu0 %1876
    %v1878 = vmul.f32 %v1874, %v1724
    %v1879 = vmul.f32 %v1877, %v1724
    %v1880 = vsub.f32 %v1868, %v1878
    %v1881 = vsub.f32 %v1869, %v1879
    %v1882 = vmul.f32 %v1880, %v1880
    %v1883 = vmul.f32 %v1881, %v1881
    %v1884 = vsel %vm150, %v1882, 0.0
    %1885 = vadd.xlane.f32.xlu0 %v1884
    %v1886 = vpop.xlane.xlu0 %1885
    %v1887 = vsel %vm150, %v1883, 0.0
    %1888 = vadd.xlane.f32.xlu0 %v1887
    %v1889 = vpop.xlane.xlu0 %1888
    %v1890 = vmul.f32 %v1886, %v1724
    %v1891 = vmul.f32 %v1889, %v1724
    %v1892 = vadd.f32 %v1890, 1e-05
    %v1893 = vadd.f32 %v1891, 1e-05
    %v1894 = vrsqrt.pop %v1892
    %v1895 = vmul.f32 %v1894, %v1892
    %v1896 = vmul.f32 %v1895, %v1894
    %v1897 = vmul.f32 0.5, %v1896
    %v1898 = vsub.f32 1.5, %v1897
    %v1899 = vmul.f32 %v1894, %v1898
    %vm1900 = vweird.f32 %v1892
    %vm1901 = vweird.f32 %v1894
    %vm1902 = vmor %vm1900, %vm1901
    %v1903 = vsel %vm1902, %v1894, %v1899
    %v1904 = vrsqrt.pop %v1893
    %v1905 = vmul.f32 %v1904, %v1893
    %v1906 = vmul.f32 %v1905, %v1904
    %v1907 = vmul.f32 0.5, %v1906
    %v1908 = vsub.f32 1.5, %v1907
    %v1909 = vmul.f32 %v1904, %v1908
    %vm1910 = vweird.f32 %v1893
    %vm1911 = vweird.f32 %v1904
    %vm1912 = vmor %vm1910, %vm1911
    %v1913 = vsel %vm1912, %v1904, %v1909
    %v1914 = vmul.f32 %v1880, %v1903
    %v1915 = vmul.f32 %v1881, %v1913
    %v1917 = vperm.slane %v1870, 0
    %v1919 = vmul.f32 %v1914, %v1917
    %v1920 = vmul.f32 %v1915, %v1917
    %v1922 = vperm.slane %v1871, 0
    %v1924 = vadd.f32 %v1919, %v1922
    %v1925 = vadd.f32 %v1920, %v1922
    %1926 = vst.msk [vmem:[#allocation11] sm:$0xff] %vm150, %v1924
    %1927 = vst.msk [vmem:[#allocation11 + $0x8] sm:$0xff] %vm150, %v1925
    // Predicated region
    $region90: #{tpu_custom_call.1} parent=1 // pred_check
      _
    $region91: #{tpu_custom_call.1} parent=1 // pred_check_branch
      %1929 = sbr.rel (0) target = $region93
    $region92: #{tpu_custom_call.1} parent=1 // pred_region
      %1931 = vsyncadd [#allocation5], 0
      %s1932 = sshll.u32 [#allocation11], 4
      %s1933 = int_to_ptr.vmem [resolvable:$true] %s1932
      %s1934 = sshll.u32 %s18, 4
      %s1935 = int_to_ptr.hbm [resolvable:$true] %s1934
      %1940 = dma.vmem_to_hbm [thread:$0]  %s1933, 256, %s1935, [#allocation5], 128, 128, 8
    $region93: #{tpu_custom_call.1} parent=1 // pred_fallthru
      _
    // Predicated region
    $region94: #{tpu_custom_call.1} parent=1 // pred_check
      _
    $region95: #{tpu_custom_call.1} parent=1 // pred_check_branch
      %1942 = sbr.rel (0) target = $region97
    $region96: #{tpu_custom_call.1} parent=1 // pred_region
      %1944 = vsyncadd [#allocation13], 0
      %s1945 = sshll.u32 [#allocation12], 4
      %s1946 = int_to_ptr.vmem [resolvable:$true] %s1945
      %s1947 = sshll.u32 %s19, 4
      %s1948 = int_to_ptr.hbm [resolvable:$true] %s1947
      %1953 = dma.vmem_to_hbm [thread:$0]  %s1946, 1024, %s1948, [#allocation13], 128, 128, 8
    $region97: #{tpu_custom_call.1} parent=1 // pred_fallthru
      _
    // Predicated region
    $region98: #{tpu_custom_call.1} parent=1 // pred_check
      _
    $region99: #{tpu_custom_call.1} parent=1 // pred_check_branch
      %1955 = sbr.rel (0) target = $region101
    $region100: #{tpu_custom_call.1} parent=1 // pred_region
      %1957 = dma.done [#allocation5], 256
    $region101: #{tpu_custom_call.1} parent=1 // pred_fallthru
      _
    // Predicated region
    $region102: #{tpu_custom_call.1} parent=1 // pred_check
      _
    $region103: #{tpu_custom_call.1} parent=1 // pred_check_branch
      %1959 = sbr.rel (0) target = $region105
    $region104: #{tpu_custom_call.1} parent=1 // pred_region
      %1961 = dma.done [#allocation13], 1024
    $region105: #{tpu_custom_call.1} parent=1 // pred_fallthru
      _
    %1962 = vsyncpa [#allocation4], 1
    %1963 = vsyncpa [#allocation7], 1
    %1964 = vsyncpa [#allocation10], 1
    %1965 = vsyncpa [#allocation5], 1
    %1966 = vsyncpa [#allocation13], 1

</llo_original>
